<compile_context>
chip_gen: v7x
topology: tpu7x:2x2x1
jax: 0.10.0
libtpu: 0.0.40
codegen_flags: <defaults>
</compile_context>

<pallas_src>
import math

import numpy as np
import jax
import jax.numpy as jnp
from jax import lax
from jax.experimental import pallas as pl
from jax.experimental.pallas import tpu as pltpu

LANE = 128


def _pad_lanes(n):
    return ((n + LANE - 1) // LANE) * LANE


# ---------------- host-side folding of conv -> dense matrix ----------------

def make_gather(H, W, K, stride, pad):
    """G[t, q, r] = 1 iff input pixel q feeds output pixel r for kernel tap t
    (zero padding handled by omitting out-of-bounds entries)."""
    Ho = (H + 2 * pad - K) // stride + 1
    Wo = (W + 2 * pad - K) // stride + 1
    G = np.zeros((K * K, H * W, Ho * Wo), np.float32)
    for kh in range(K):
        for kw in range(K):
            t = kh * K + kw
            for oh in range(Ho):
                ih = oh * stride + kh - pad
                if ih < 0 or ih >= H:
                    continue
                for ow in range(Wo):
                    iw = ow * stride + kw - pad
                    if iw < 0 or iw >= W:
                        continue
                    G[t, ih * W + iw, oh * Wo + ow] = 1.0
    return G, Ho, Wo


def conv_to_matrix(w, G, n_in, n_out_sp, P_in, P_out):
    """Fold conv weights + im2col gather into one dense [cin*P_in, cout*P_out]
    matrix; channel blocks are padded to multiples of 128 lanes (pad rows and
    pad columns are zero, so garbage in pad lanes never propagates)."""
    w = np.asarray(w, np.float32)
    cout, cin, K, _ = w.shape
    wt = np.transpose(w, (2, 3, 0, 1)).reshape(K * K, cout, cin)      # [T,O,C]
    M = np.einsum("toc,tqs->cqos", wt, G)                             # [C,Q,O,S]
    big = np.zeros((cin, P_in, cout, P_out), np.float32)
    big[:, :n_in, :, :n_out_sp] = M
    return big.reshape(cin * P_in, cout * P_out)


def bias_row(b, n_sp, P):
    b = np.asarray(b, np.float32)
    cout = b.shape[0]
    row = np.zeros((cout, P), np.float32)
    row[:, :n_sp] = b[:, None]
    return row.reshape(1, cout * P)


def mean_matrix(cout, n_sp, P):
    """R such that (y @ R) is the per-(row, channel-block) mean over the n_sp
    valid spatial lanes, broadcast over all lanes of that channel block."""
    R = np.zeros((cout, P, cout, P), np.float32)
    for o in range(cout):
        R[o, :n_sp, o, :] = 1.0 / n_sp
    return R.reshape(cout * P, cout * P)


# ---------------- fused forward builder ----------------

def build_regressor_pallas(params, in_shape, out_shape, channels, strides,
                           kernel_size, batch, batch_tile):
    C0, H0, W0 = in_shape
    K = kernel_size
    pad = K // 2                         # same_padding(3) = 1
    nL = len(channels)
    n_out = int(math.prod(out_shape))
    n_out_pad = _pad_lanes(n_out)
    Bt = batch_tile
    assert batch % Bt == 0, "batch must be divisible by batch_tile"

    P0 = _pad_lanes(H0 * W0)

    # ---- per-layer operands: fold gather + weights into dense matrices ----
    layer_ops, layer_cfg = [], []
    H, W, cin, P_in = H0, W0, C0, P0
    for l, (c, s) in enumerate(zip(channels, strides)):
        lp = params["layers"][l]
        Gs, Ho, Wo = make_gather(H, W, K, s, pad)       # strided: subunit0 + residual
        Gu, _, _ = make_gather(Ho, Wo, K, 1, pad)       # stride-1: subunit1
        n_sp = Ho * Wo
        P_out = _pad_lanes(n_sp)

        m0 = conv_to_matrix(lp["w0"], Gs, H * W, n_sp, P_in, P_out)
        mr = conv_to_matrix(lp["wr"], Gs, H * W, n_sp, P_in, P_out)
        m1 = conv_to_matrix(lp["w1"], Gu, n_sp, n_sp, P_out, P_out)
        m_sr = np.concatenate([m0, mr], axis=1)         # one matmul for both convs
        b_sr = np.concatenate([bias_row(lp["b0"], n_sp, P_out),
                               bias_row(lp["br"], n_sp, P_out)], axis=1)
        b_u = bias_row(lp["b1"], n_sp, P_out)
        rm = mean_matrix(c, n_sp, P_out)

        layer_ops += [jnp.asarray(m_sr), jnp.asarray(b_sr), jnp.asarray(rm),
                      jnp.asarray(m1), jnp.asarray(b_u)]
        layer_cfg.append(dict(lanes=c * P_out, last=(l == nL - 1)))
        H, W, cin, P_in = Ho, Wo, c, P_out

    c_last, n_sp_last, P_last = cin, H * W, P_in

    # final Flatten (NCHW order) + Linear, with the output lane-padded to 128
    wf = np.zeros((c_last, P_last, n_out_pad), np.float32)
    wf[:, :n_sp_last, :n_out] = np.transpose(
        np.asarray(params["final_w"], np.float32).reshape(n_out, c_last, n_sp_last),
        (1, 2, 0))
    wf_j = jnp.asarray(wf.reshape(c_last * P_last, n_out_pad))
    bf = np.zeros((1, n_out_pad), np.float32)
    bf[0, :n_out] = np.asarray(params["final_b"], np.float32)
    bf_j = jnp.asarray(bf)

    alphas = jnp.stack([a for lp in params["layers"]
                        for a in (lp["alpha0"], lp["alpha1"])]
                       ).reshape(1, 2 * nL).astype(jnp.float32)
    operands = (alphas, *layer_ops, wf_j, bf_j)

    # ---- the single fused kernel (Bt batch elements per grid step) ----
    def _dot(a, b):
        return jnp.dot(a, b, preferred_element_type=jnp.float32)

    def _in_prelu(v, rm, a):
        # InstanceNorm2d (affine=False, eps=1e-5, biased var) + PReLU(scalar a),
        # computed per (row=batch, channel-block) on the [Bt, C*128] slab.
        mean = _dot(v, rm)                       # broadcast per-block mean
        cen = v - mean
        var = _dot(cen * cen, rm)                # broadcast per-block biased var
        xn = cen * lax.rsqrt(var + 1e-5)
        return jnp.where(xn >= 0, xn, a * xn)

    def kernel(alpha_ref, x_ref, *refs):
        wf_ref, bf_ref, o_ref = refs[-3], refs[-2], refs[-1]
        x = x_ref[...]                                    # [Bt, C0*P0], f32
        for l, cfg in enumerate(layer_cfg):
            m_sr, b_sr, rm_ref, m_u, b_u = refs[5 * l: 5 * l + 5]
            a0 = alpha_ref[0, 2 * l]
            a1 = alpha_ref[0, 2 * l + 1]
            Lo = cfg["lanes"]
            rm = rm_ref[...]

            # subunit-0 conv and residual conv fused into one matmul
            y_sr = _dot(x, m_sr[...]) + b_sr[...]         # [Bt, 2*Lo]
            su0 = _in_prelu(y_sr[:, :Lo], rm, a0)         # conv -> IN -> PReLU ("NDA")
            res = y_sr[:, Lo:]                            # residual: conv + bias only

            # subunit-1: stride-1 conv (+ IN/PReLU unless last layer's last subunit)
            y1 = _dot(su0, m_u[...]) + b_u[...]
            if not cfg["last"]:
                y1 = _in_prelu(y1, rm, a1)
            x = y1 + res                                  # residual add, stays in VMEM

        # Flatten (NCHW order baked into wf) + Linear, lane-padded output
        o_ref[...] = _dot(x, wf_ref[...]) + bf_ref[...]

    # ---- BlockSpecs: batch tiles on the (parallel) grid axis; everything
    #      else is a full-array block with a constant index map (fetched once).
    def const_spec(arr):
        zeros = (0,) * arr.ndim
        return pl.BlockSpec(arr.shape, lambda g, _z=zeros: _z)

    in_specs = [
        pl.BlockSpec((1, 2 * nL), lambda g: (0, 0),
                     memory_space=pltpu.MemorySpace.SMEM),      # PReLU alphas
        pl.BlockSpec((Bt, C0 * P0), lambda g: (g, 0)),          # input slab
    ]
    for op in layer_ops:
        in_specs.append(const_spec(op))
    in_specs += [const_spec(wf_j), const_spec(bf_j)]

    out_specs = pl.BlockSpec((Bt, n_out_pad), lambda g: (g, 0))

    fused = pl.pallas_call(
        kernel,
        out_shape=jax.ShapeDtypeStruct((batch, n_out_pad), jnp.float32),
        grid=(batch // Bt,),
        in_specs=in_specs,
        out_specs=out_specs,
        compiler_params=pltpu.CompilerParams(
            dimension_semantics=("parallel",),
            vmem_limit_bytes=32 * 1024 * 1024),
    )

    def forward(x_nchw, ops):
        B = x_nchw.shape[0]
        x2 = x_nchw.reshape(B, C0, H0 * W0).astype(jnp.float32)
        if P0 != H0 * W0:                       # boundary-only lane padding
            x2 = jnp.pad(x2, ((0, 0), (0, 0), (0, P0 - H0 * W0)))
        x2 = x2.reshape(B, C0 * P0)
        out = fused(ops[0], x2, *ops[1:])
        return out[:, :n_out].reshape((B,) + tuple(out_shape))

    return forward, operands


# ---------------- Parameter init (deterministic, synthetic, PyTorch shapes) ----------------

def init_conv(key, cin, cout, k):
    k1, k2 = jax.random.split(key)
    bound = 1.0 / math.sqrt(cin * k * k)
    w = jax.random.uniform(k1, (cout, cin, k, k), jnp.float32, -bound, bound)
    b = jax.random.uniform(k2, (cout,), jnp.float32, -bound, bound)
    return w, b


def build_regressor_params(key, in_channels, channels, kernel_size, final_in, final_out):
    params = {"layers": []}
    ech = in_channels
    for c in channels:
        key, k0, k1, kr = jax.random.split(key, 4)
        w0, b0 = init_conv(k0, ech, c, kernel_size)          # subunit 0 conv (stride s)
        w1, b1 = init_conv(k1, c, c, kernel_size)            # subunit 1 conv (stride 1)
        wr, br = init_conv(kr, ech, c, kernel_size)          # residual conv (k=3, stride s)
        params["layers"].append(dict(
            w0=w0, b0=b0, alpha0=jnp.float32(0.25),          # PReLU init 0.25
            w1=w1, b1=b1, alpha1=jnp.float32(0.25),
            wr=wr, br=br,
        ))
        ech = c
    key, kw, kb = jax.random.split(key, 3)
    bound = 1.0 / math.sqrt(final_in)
    params["final_w"] = jax.random.uniform(kw, (final_out, final_in), jnp.float32, -bound, bound)
    params["final_b"] = jax.random.uniform(kb, (final_out,), jnp.float32, -bound, bound)
    return params


# ---------------- Main ----------------

if __name__ == "__main__":
    # Regressor((1, 16, 16), (2,), channels=(2, 4), strides=(2, 2))
    in_shape = (1, 16, 16)
    out_shape = (2,)
    channels = (2, 4)
    strides = (2, 2)
    kernel_size = 3
    B = 16            # 8 batch elements folded per grid step -> 2 grid steps (both v7x TCs busy)
    Bt = 8

    # final spatial size after the strided convs (same_padding(3) = 1)
    h, w = in_shape[1], in_shape[2]
    for s in strides:
        h = (h + 2 - kernel_size) // s + 1
        w = (w + 2 - kernel_size) // s + 1
    final_in = channels[-1] * h * w
    final_out = int(math.prod(out_shape))

    key = jax.random.PRNGKey(0)
    kp, kx = jax.random.split(key)
    params = build_regressor_params(kp, in_shape[0], channels, kernel_size,
                                    final_in, final_out)
    x = jax.random.normal(kx, (B,) + in_shape, jnp.float32)   # NCHW input

    forward, ops = build_regressor_pallas(params, in_shape, out_shape, channels,
                                          strides, kernel_size, B, Bt)
    fwd = jax.jit(forward)
    y = fwd(x, ops)
    jax.block_until_ready(y)
    assert y.shape == (B,) + out_shape, y.shape
    assert bool(jnp.all(jnp.isfinite(y)))
    print("KERNEL_OK")
</pallas_src>

<mosaic_0001>
module attributes {stable_mosaic.version = 11 : i64} {
  func.func @kernel(%arg0: i32, %arg1: memref<1x4xf32, #tpu.memory_space<smem>>, %arg2: memref<8x256xf32, #tpu.memory_space<vmem>>, %arg3: memref<256x512xf32, #tpu.memory_space<vmem>>, %arg4: memref<1x512xf32, #tpu.memory_space<vmem>>, %arg5: memref<256x256xf32, #tpu.memory_space<vmem>>, %arg6: memref<256x256xf32, #tpu.memory_space<vmem>>, %arg7: memref<1x256xf32, #tpu.memory_space<vmem>>, %arg8: memref<256x1024xf32, #tpu.memory_space<vmem>>, %arg9: memref<1x1024xf32, #tpu.memory_space<vmem>>, %arg10: memref<512x512xf32, #tpu.memory_space<vmem>>, %arg11: memref<512x512xf32, #tpu.memory_space<vmem>>, %arg12: memref<1x512xf32, #tpu.memory_space<vmem>>, %arg13: memref<512x128xf32, #tpu.memory_space<vmem>>, %arg14: memref<1x128xf32, #tpu.memory_space<vmem>>, %arg15: memref<8x128xf32, #tpu.memory_space<vmem>>) attributes {dimension_semantics = [#tpu.dimension_semantics<parallel>], iteration_bounds = array<i64: 2>, scalar_prefetch = 0 : i64, scratch_operands = 0 : i64, tpu.core_type = #tpu.core_type<tc>, window_params = [{transform_indices = @transform_0, window_bounds = array<i64: 1, 4>}, {transform_indices = @transform_1, window_bounds = array<i64: 8, 256>}, {pipeline_mode = #tpu.pipeline_mode<synchronous>, transform_indices = @transform_2, window_bounds = array<i64: 256, 512>}, {pipeline_mode = #tpu.pipeline_mode<synchronous>, transform_indices = @transform_3, window_bounds = array<i64: 1, 512>}, {pipeline_mode = #tpu.pipeline_mode<synchronous>, transform_indices = @transform_4, window_bounds = array<i64: 256, 256>}, {pipeline_mode = #tpu.pipeline_mode<synchronous>, transform_indices = @transform_5, window_bounds = array<i64: 256, 256>}, {pipeline_mode = #tpu.pipeline_mode<synchronous>, transform_indices = @transform_6, window_bounds = array<i64: 1, 256>}, {pipeline_mode = #tpu.pipeline_mode<synchronous>, transform_indices = @transform_7, window_bounds = array<i64: 256, 1024>}, {pipeline_mode = #tpu.pipeline_mode<synchronous>, transform_indices = @transform_8, window_bounds = array<i64: 1, 1024>}, {pipeline_mode = #tpu.pipeline_mode<synchronous>, transform_indices = @transform_9, window_bounds = array<i64: 512, 512>}, {pipeline_mode = #tpu.pipeline_mode<synchronous>, transform_indices = @transform_10, window_bounds = array<i64: 512, 512>}, {pipeline_mode = #tpu.pipeline_mode<synchronous>, transform_indices = @transform_11, window_bounds = array<i64: 1, 512>}, {pipeline_mode = #tpu.pipeline_mode<synchronous>, transform_indices = @transform_12, window_bounds = array<i64: 512, 128>}, {pipeline_mode = #tpu.pipeline_mode<synchronous>, transform_indices = @transform_13, window_bounds = array<i64: 1, 128>}, {transform_indices = @transform_14, window_bounds = array<i64: 8, 128>}]} {
    %c0 = arith.constant 0 : index
    %c0_0 = arith.constant 0 : index
    %0 = vector.load %arg2[%c0, %c0_0] : memref<8x256xf32, #tpu.memory_space<vmem>>, vector<8x256xf32>
    %c0_1 = arith.constant 0 : index
    %c0_2 = arith.constant 0 : index
    %1 = memref.load %arg1[%c0_1, %c0_2] : memref<1x4xf32, #tpu.memory_space<smem>>
    %c0_3 = arith.constant 0 : index
    %c1 = arith.constant 1 : index
    %2 = memref.load %arg1[%c0_3, %c1] : memref<1x4xf32, #tpu.memory_space<smem>>
    %c0_4 = arith.constant 0 : index
    %c0_5 = arith.constant 0 : index
    %3 = vector.load %arg5[%c0_4, %c0_5] : memref<256x256xf32, #tpu.memory_space<vmem>>, vector<256x256xf32>
    %c0_6 = arith.constant 0 : index
    %c0_7 = arith.constant 0 : index
    %4 = vector.load %arg3[%c0_6, %c0_7] : memref<256x512xf32, #tpu.memory_space<vmem>>, vector<256x512xf32>
    %cst = arith.constant dense<0.000000e+00> : vector<8x512xf32>
    %5 = tpu.matmul %0, %4, %cst {dimension_numbers = #tpu.dot_dimension_numbers<[1], [0], [0], [1], [0, 0, 1, 1], [], []>} : vector<8x256xf32>, vector<256x512xf32>, vector<8x512xf32> -> vector<8x512xf32>
    %c0_8 = arith.constant 0 : index
    %c0_9 = arith.constant 0 : index
    %6 = vector.load %arg4[%c0_8, %c0_9] : memref<1x512xf32, #tpu.memory_space<vmem>>, vector<1x512xf32>
    %7 = vector.broadcast %6 : vector<1x512xf32> to vector<8x512xf32>
    %8 = arith.addf %5, %7 : vector<8x512xf32>
    %9 = vector.extract_strided_slice %8 {offsets = [0, 0], sizes = [8, 256], strides = [1, 1]} : vector<8x512xf32> to vector<8x256xf32>
    %cst_10 = arith.constant dense<0.000000e+00> : vector<8x256xf32>
    %10 = tpu.matmul %9, %3, %cst_10 {dimension_numbers = #tpu.dot_dimension_numbers<[1], [0], [0], [1], [0, 0, 1, 1], [], []>} : vector<8x256xf32>, vector<256x256xf32>, vector<8x256xf32> -> vector<8x256xf32>
    %11 = arith.subf %9, %10 : vector<8x256xf32>
    %12 = arith.mulf %11, %11 : vector<8x256xf32>
    %cst_11 = arith.constant dense<0.000000e+00> : vector<8x256xf32>
    %13 = tpu.matmul %12, %3, %cst_11 {dimension_numbers = #tpu.dot_dimension_numbers<[1], [0], [0], [1], [0, 0, 1, 1], [], []>} : vector<8x256xf32>, vector<256x256xf32>, vector<8x256xf32> -> vector<8x256xf32>
    %cst_12 = arith.constant 9.99999974E-6 : f32
    %14 = vector.broadcast %cst_12 : f32 to vector<8x256xf32>
    %15 = arith.addf %13, %14 : vector<8x256xf32>
    %16 = math.rsqrt %15 : vector<8x256xf32>
    %17 = arith.mulf %11, %16 : vector<8x256xf32>
    %cst_13 = arith.constant 0.000000e+00 : f32
    %18 = vector.broadcast %cst_13 : f32 to vector<8x256xf32>
    %19 = arith.cmpf oge, %17, %18 : vector<8x256xf32>
    %20 = vector.broadcast %1 : f32 to vector<8x256xf32>
    %21 = arith.mulf %20, %17 : vector<8x256xf32>
    %22 = arith.select %19, %17, %21 : vector<8x256xi1>, vector<8x256xf32>
    %23 = vector.extract_strided_slice %8 {offsets = [0, 256], sizes = [8, 256], strides = [1, 1]} : vector<8x512xf32> to vector<8x256xf32>
    %c0_14 = arith.constant 0 : index
    %c0_15 = arith.constant 0 : index
    %24 = vector.load %arg6[%c0_14, %c0_15] : memref<256x256xf32, #tpu.memory_space<vmem>>, vector<256x256xf32>
    %cst_16 = arith.constant dense<0.000000e+00> : vector<8x256xf32>
    %25 = tpu.matmul %22, %24, %cst_16 {dimension_numbers = #tpu.dot_dimension_numbers<[1], [0], [0], [1], [0, 0, 1, 1], [], []>} : vector<8x256xf32>, vector<256x256xf32>, vector<8x256xf32> -> vector<8x256xf32>
    %c0_17 = arith.constant 0 : index
    %c0_18 = arith.constant 0 : index
    %26 = vector.load %arg7[%c0_17, %c0_18] : memref<1x256xf32, #tpu.memory_space<vmem>>, vector<1x256xf32>
    %27 = vector.broadcast %26 : vector<1x256xf32> to vector<8x256xf32>
    %28 = arith.addf %25, %27 : vector<8x256xf32>
    %cst_19 = arith.constant dense<0.000000e+00> : vector<8x256xf32>
    %29 = tpu.matmul %28, %3, %cst_19 {dimension_numbers = #tpu.dot_dimension_numbers<[1], [0], [0], [1], [0, 0, 1, 1], [], []>} : vector<8x256xf32>, vector<256x256xf32>, vector<8x256xf32> -> vector<8x256xf32>
    %30 = arith.subf %28, %29 : vector<8x256xf32>
    %31 = arith.mulf %30, %30 : vector<8x256xf32>
    %cst_20 = arith.constant dense<0.000000e+00> : vector<8x256xf32>
    %32 = tpu.matmul %31, %3, %cst_20 {dimension_numbers = #tpu.dot_dimension_numbers<[1], [0], [0], [1], [0, 0, 1, 1], [], []>} : vector<8x256xf32>, vector<256x256xf32>, vector<8x256xf32> -> vector<8x256xf32>
    %cst_21 = arith.constant 9.99999974E-6 : f32
    %33 = vector.broadcast %cst_21 : f32 to vector<8x256xf32>
    %34 = arith.addf %32, %33 : vector<8x256xf32>
    %35 = math.rsqrt %34 : vector<8x256xf32>
    %36 = arith.mulf %30, %35 : vector<8x256xf32>
    %cst_22 = arith.constant 0.000000e+00 : f32
    %37 = vector.broadcast %cst_22 : f32 to vector<8x256xf32>
    %38 = arith.cmpf oge, %36, %37 : vector<8x256xf32>
    %39 = vector.broadcast %2 : f32 to vector<8x256xf32>
    %40 = arith.mulf %39, %36 : vector<8x256xf32>
    %41 = arith.select %38, %36, %40 : vector<8x256xi1>, vector<8x256xf32>
    %42 = arith.addf %41, %23 : vector<8x256xf32>
    %c0_23 = arith.constant 0 : index
    %c2 = arith.constant 2 : index
    %43 = memref.load %arg1[%c0_23, %c2] : memref<1x4xf32, #tpu.memory_space<smem>>
    %c0_24 = arith.constant 0 : index
    %c0_25 = arith.constant 0 : index
    %44 = vector.load %arg10[%c0_24, %c0_25] : memref<512x512xf32, #tpu.memory_space<vmem>>, vector<512x512xf32>
    %c0_26 = arith.constant 0 : index
    %c0_27 = arith.constant 0 : index
    %45 = vector.load %arg8[%c0_26, %c0_27] : memref<256x1024xf32, #tpu.memory_space<vmem>>, vector<256x1024xf32>
    %cst_28 = arith.constant dense<0.000000e+00> : vector<8x1024xf32>
    %46 = tpu.matmul %42, %45, %cst_28 {dimension_numbers = #tpu.dot_dimension_numbers<[1], [0], [0], [1], [0, 0, 1, 1], [], []>} : vector<8x256xf32>, vector<256x1024xf32>, vector<8x1024xf32> -> vector<8x1024xf32>
    %c0_29 = arith.constant 0 : index
    %c0_30 = arith.constant 0 : index
    %47 = vector.load %arg9[%c0_29, %c0_30] : memref<1x1024xf32, #tpu.memory_space<vmem>>, vector<1x1024xf32>
    %48 = vector.broadcast %47 : vector<1x1024xf32> to vector<8x1024xf32>
    %49 = arith.addf %46, %48 : vector<8x1024xf32>
    %50 = vector.extract_strided_slice %49 {offsets = [0, 0], sizes = [8, 512], strides = [1, 1]} : vector<8x1024xf32> to vector<8x512xf32>
    %cst_31 = arith.constant dense<0.000000e+00> : vector<8x512xf32>
    %51 = tpu.matmul %50, %44, %cst_31 {dimension_numbers = #tpu.dot_dimension_numbers<[1], [0], [0], [1], [0, 0, 1, 1], [], []>} : vector<8x512xf32>, vector<512x512xf32>, vector<8x512xf32> -> vector<8x512xf32>
    %52 = arith.subf %50, %51 : vector<8x512xf32>
    %53 = arith.mulf %52, %52 : vector<8x512xf32>
    %cst_32 = arith.constant dense<0.000000e+00> : vector<8x512xf32>
    %54 = tpu.matmul %53, %44, %cst_32 {dimension_numbers = #tpu.dot_dimension_numbers<[1], [0], [0], [1], [0, 0, 1, 1], [], []>} : vector<8x512xf32>, vector<512x512xf32>, vector<8x512xf32> -> vector<8x512xf32>
    %cst_33 = arith.constant 9.99999974E-6 : f32
    %55 = vector.broadcast %cst_33 : f32 to vector<8x512xf32>
    %56 = arith.addf %54, %55 : vector<8x512xf32>
    %57 = math.rsqrt %56 : vector<8x512xf32>
    %58 = arith.mulf %52, %57 : vector<8x512xf32>
    %cst_34 = arith.constant 0.000000e+00 : f32
    %59 = vector.broadcast %cst_34 : f32 to vector<8x512xf32>
    %60 = arith.cmpf oge, %58, %59 : vector<8x512xf32>
    %61 = vector.broadcast %43 : f32 to vector<8x512xf32>
    %62 = arith.mulf %61, %58 : vector<8x512xf32>
    %63 = arith.select %60, %58, %62 : vector<8x512xi1>, vector<8x512xf32>
    %64 = vector.extract_strided_slice %49 {offsets = [0, 512], sizes = [8, 512], strides = [1, 1]} : vector<8x1024xf32> to vector<8x512xf32>
    %c0_35 = arith.constant 0 : index
    %c0_36 = arith.constant 0 : index
    %65 = vector.load %arg11[%c0_35, %c0_36] : memref<512x512xf32, #tpu.memory_space<vmem>>, vector<512x512xf32>
    %cst_37 = arith.constant dense<0.000000e+00> : vector<8x512xf32>
    %66 = tpu.matmul %63, %65, %cst_37 {dimension_numbers = #tpu.dot_dimension_numbers<[1], [0], [0], [1], [0, 0, 1, 1], [], []>} : vector<8x512xf32>, vector<512x512xf32>, vector<8x512xf32> -> vector<8x512xf32>
    %c0_38 = arith.constant 0 : index
    %c0_39 = arith.constant 0 : index
    %67 = vector.load %arg12[%c0_38, %c0_39] : memref<1x512xf32, #tpu.memory_space<vmem>>, vector<1x512xf32>
    %68 = vector.broadcast %67 : vector<1x512xf32> to vector<8x512xf32>
    %69 = arith.addf %66, %68 : vector<8x512xf32>
    %70 = arith.addf %69, %64 : vector<8x512xf32>
    %c0_40 = arith.constant 0 : index
    %c0_41 = arith.constant 0 : index
    %71 = vector.load %arg13[%c0_40, %c0_41] : memref<512x128xf32, #tpu.memory_space<vmem>>, vector<512x128xf32>
    %cst_42 = arith.constant dense<0.000000e+00> : vector<8x128xf32>
    %72 = tpu.matmul %70, %71, %cst_42 {dimension_numbers = #tpu.dot_dimension_numbers<[1], [0], [0], [1], [0, 0, 1, 1], [], []>} : vector<8x512xf32>, vector<512x128xf32>, vector<8x128xf32> -> vector<8x128xf32>
    %c0_43 = arith.constant 0 : index
    %c0_44 = arith.constant 0 : index
    %73 = vector.load %arg14[%c0_43, %c0_44] : memref<1x128xf32, #tpu.memory_space<vmem>>, vector<1x128xf32>
    %74 = vector.broadcast %73 : vector<1x128xf32> to vector<8x128xf32>
    %75 = arith.addf %72, %74 : vector<8x128xf32>
    %c0_45 = arith.constant 0 : index
    %c0_46 = arith.constant 0 : index
    %76 = vector.load %arg15[%c0_45, %c0_46] : memref<8x128xf32, #tpu.memory_space<vmem>>, vector<8x128xf32>
    tpu.vector_store %arg15[%c0_45, %c0_46], %75 {strides = array<i32>} : memref<8x128xf32, #tpu.memory_space<vmem>>, vector<8x128xf32>,
    return
  }
  func.func @transform_0(%arg0: i32) -> (i32, i32) {
    %c0_i32 = arith.constant 0 : i32
    %c0_i32_0 = arith.constant 0 : i32
    %c0_i32_1 = arith.constant 0 : i32
    return %c0_i32, %c0_i32_0 : i32, i32
  }
  func.func @transform_1(%arg0: i32) -> (i32, i32) {
    %c0_i32 = arith.constant 0 : i32
    %c0_i32_0 = arith.constant 0 : i32
    return %arg0, %c0_i32 : i32, i32
  }
  func.func @transform_2(%arg0: i32) -> (i32, i32) {
    %c0_i32 = arith.constant 0 : i32
    %c0_i32_0 = arith.constant 0 : i32
    %c0_i32_1 = arith.constant 0 : i32
    return %c0_i32, %c0_i32_0 : i32, i32
  }
  func.func @transform_3(%arg0: i32) -> (i32, i32) {
    %c0_i32 = arith.constant 0 : i32
    %c0_i32_0 = arith.constant 0 : i32
    %c0_i32_1 = arith.constant 0 : i32
    return %c0_i32, %c0_i32_0 : i32, i32
  }
  func.func @transform_4(%arg0: i32) -> (i32, i32) {
    %c0_i32 = arith.constant 0 : i32
    %c0_i32_0 = arith.constant 0 : i32
    %c0_i32_1 = arith.constant 0 : i32
    return %c0_i32, %c0_i32_0 : i32, i32
  }
  func.func @transform_5(%arg0: i32) -> (i32, i32) {
    %c0_i32 = arith.constant 0 : i32
    %c0_i32_0 = arith.constant 0 : i32
    %c0_i32_1 = arith.constant 0 : i32
    return %c0_i32, %c0_i32_0 : i32, i32
  }
  func.func @transform_6(%arg0: i32) -> (i32, i32) {
    %c0_i32 = arith.constant 0 : i32
    %c0_i32_0 = arith.constant 0 : i32
    %c0_i32_1 = arith.constant 0 : i32
    return %c0_i32, %c0_i32_0 : i32, i32
  }
  func.func @transform_7(%arg0: i32) -> (i32, i32) {
    %c0_i32 = arith.constant 0 : i32
    %c0_i32_0 = arith.constant 0 : i32
    %c0_i32_1 = arith.constant 0 : i32
    return %c0_i32, %c0_i32_0 : i32, i32
  }
  func.func @transform_8(%arg0: i32) -> (i32, i32) {
    %c0_i32 = arith.constant 0 : i32
    %c0_i32_0 = arith.constant 0 : i32
    %c0_i32_1 = arith.constant 0 : i32
    return %c0_i32, %c0_i32_0 : i32, i32
  }
  func.func @transform_9(%arg0: i32) -> (i32, i32) {
    %c0_i32 = arith.constant 0 : i32
    %c0_i32_0 = arith.constant 0 : i32
    %c0_i32_1 = arith.constant 0 : i32
    return %c0_i32, %c0_i32_0 : i32, i32
  }
  func.func @transform_10(%arg0: i32) -> (i32, i32) {
    %c0_i32 = arith.constant 0 : i32
    %c0_i32_0 = arith.constant 0 : i32
    %c0_i32_1 = arith.constant 0 : i32
    return %c0_i32, %c0_i32_0 : i32, i32
  }
  func.func @transform_11(%arg0: i32) -> (i32, i32) {
    %c0_i32 = arith.constant 0 : i32
    %c0_i32_0 = arith.constant 0 : i32
    %c0_i32_1 = arith.constant 0 : i32
    return %c0_i32, %c0_i32_0 : i32, i32
  }
  func.func @transform_12(%arg0: i32) -> (i32, i32) {
    %c0_i32 = arith.constant 0 : i32
    %c0_i32_0 = arith.constant 0 : i32
    %c0_i32_1 = arith.constant 0 : i32
    return %c0_i32, %c0_i32_0 : i32, i32
  }
  func.func @transform_13(%arg0: i32) -> (i32, i32) {
    %c0_i32 = arith.constant 0 : i32
    %c0_i32_0 = arith.constant 0 : i32
    %c0_i32_1 = arith.constant 0 : i32
    return %c0_i32, %c0_i32_0 : i32, i32
  }
  func.func @transform_14(%arg0: i32) -> (i32, i32) {
    %c0_i32 = arith.constant 0 : i32
    %c0_i32_0 = arith.constant 0 : i32
    return %arg0, %c0_i32 : i32, i32
  }
}

</mosaic_0001>

<llo_original>
// kernel: forward.1
$region0: #{forward.1}
  #allocation0 [shape = 'u32[]', space=smem, size = 0x4, offset = 0x4, fixed_abs, tag = 'smem constant byte address 0x4 - core index']
  #allocation1 [shape = 'u32[144,128]{1,0:T(1,128)}', space=vmem, size = 0x12000, scoped, tag = 'internal scratch']
  %s0 = inlined_call_operand.vmem [shape: f32[1,4], index: 0, kind: input, shape index: {}]
  %s1 = inlined_call_operand.vmem [shape: f32[16,256], index: 1, kind: input, shape index: {}]
  %s2 = inlined_call_operand.hbm [shape: f32[256,512], index: 2, kind: input, shape index: {}]
  %s3 = inlined_call_operand.vmem [shape: f32[1,512], index: 3, kind: input, shape index: {}]
  %s4 = inlined_call_operand.hbm [shape: f32[256,256], index: 4, kind: input, shape index: {}]
  %s5 = inlined_call_operand.hbm [shape: f32[256,256], index: 5, kind: input, shape index: {}]
  %s6 = inlined_call_operand.vmem [shape: f32[1,256], index: 6, kind: input, shape index: {}]
  %s7 = inlined_call_operand.hbm [shape: f32[256,1024], index: 7, kind: input, shape index: {}]
  %s8 = inlined_call_operand.vmem [shape: f32[1,1024], index: 8, kind: input, shape index: {}]
  %s9 = inlined_call_operand.hbm [shape: f32[512,512], index: 9, kind: input, shape index: {}]
  %s10 = inlined_call_operand.hbm [shape: f32[512,512], index: 10, kind: input, shape index: {}]
  %s11 = inlined_call_operand.vmem [shape: f32[1,512], index: 11, kind: input, shape index: {}]
  %s12 = inlined_call_operand.hbm [shape: f32[512,128], index: 12, kind: input, shape index: {}]
  %s13 = inlined_call_operand.vmem [shape: f32[1,128], index: 13, kind: input, shape index: {}]
  %s14 = inlined_call_operand.vmem [shape: f32[16,128], index: 14, kind: output, shape index: {}]
  %s15 = sld [smem:[#allocation0]]
  $region121: #{forward.1} parent=0
    _
  %s17 = ssub.s32 1, %s15
  %s18 = scalar_select 0, %s17, %s15
  $region1: #{forward.1} parent=0
    #allocation2 [shape = 'u8[512]{0}', space=smem, size = 0x200, scoped, tag = 'input window, operand 0, single buffered']
    #allocation3 [shape = 's32[2]{0}', space=sflag, size = 0x8, scoped, tag = 'scoped memory for forward.1']
    #allocation4 [shape = 's32[2]{0}', space=sflag, size = 0x8, scoped, tag = 'scoped memory for forward.1']
    #allocation5 [shape = 'u8[524288]{0}', space=vmem, size = 0x80000, scoped, tag = 'input window, operand 2, single buffered']
    #allocation6 [shape = 'u8[262144]{0}', space=vmem, size = 0x40000, scoped, tag = 'input window, operand 4, single buffered']
    #allocation7 [shape = 's32[1]{0}', space=sflag, size = 0x4, scoped, tag = 'scoped memory for forward.1']
    #allocation8 [shape = 'u8[262144]{0}', space=vmem, size = 0x40000, scoped, tag = 'input window, operand 5, single buffered']
    #allocation9 [shape = 'u8[1048576]{0}', space=vmem, size = 0x100000, scoped, tag = 'input window, operand 7, single buffered']
    #allocation10 [shape = 's32[1]{0}', space=sflag, size = 0x4, scoped, tag = 'scoped memory for forward.1']
    #allocation11 [shape = 'u8[1048576]{0}', space=vmem, size = 0x100000, scoped, tag = 'input window, operand 9, single buffered']
    #allocation12 [shape = 'u8[1048576]{0}', space=vmem, size = 0x100000, scoped, tag = 'input window, operand 10, single buffered']
    #allocation13 [shape = 's32[1]{0}', space=sflag, size = 0x4, scoped, tag = 'scoped memory for forward.1']
    #allocation14 [shape = 'u8[262144]{0}', space=vmem, size = 0x40000, scoped, tag = 'input window, operand 12, single buffered']
    %19 = vsyncpa [#allocation4], 0
    %20 = vsyncpa [#allocation3], 0
    %21 = vsyncpa [#allocation7], 0
    %22 = vsyncpa [#allocation10], 0
    %23 = vsyncpa [#allocation13], 0
    loop: start=0, step=1, limit=4
    $region2: #{forward.1} parent=1 // loop_pre_header
      _
    $region3: #{forward.1} parent=1 // loop_header
      %s25 = sphi 0, %s29
      %p26 = scmp.ge.s32.totalorder %s25, 4
      %s33 = sphi 0, %s33
      %s35 = sphi 0, %s33
      %s36 = sphi 0, %s35
      %s50 = sphi 0, %s36
      %s56 = sphi 0, %s58
      %s59 = sphi 0, %s56
      %s60 = sphi 0, %s59
      %s76 = sphi 0, %s60
      %s80 = sphi 0, %s80
      %s82 = sphi 0, %s80
      %s83 = sphi 0, %s82
      %s97 = sphi 0, %s83
      %s101 = sphi 0, %s101
      %s103 = sphi 0, %s101
      %s104 = sphi 0, %s103
      %s118 = sphi 0, %s104
      %s122 = sphi 0, %s122
      %s124 = sphi 0, %s122
      %s125 = sphi 0, %s124
      %s139 = sphi 0, %s125
      %s143 = sphi 0, %s143
      %s145 = sphi 0, %s143
      %s146 = sphi 0, %s145
      %s160 = sphi 0, %s146
      %s164 = sphi 0, %s164
      %s166 = sphi 0, %s164
      %s167 = sphi 0, %s166
      %s181 = sphi 0, %s167
      %s185 = sphi 0, %s185
      %s187 = sphi 0, %s185
      %s188 = sphi 0, %s187
      %s202 = sphi 0, %s188
      %s206 = sphi 0, %s206
      %s208 = sphi 0, %s206
      %s209 = sphi 0, %s208
      %s223 = sphi 0, %s209
      %s227 = sphi 0, %s227
      %s229 = sphi 0, %s227
      %s230 = sphi 0, %s229
      %s244 = sphi 0, %s230
      %s248 = sphi 0, %s248
      %s250 = sphi 0, %s248
      %s251 = sphi 0, %s250
      %s265 = sphi 0, %s251
      %s269 = sphi 0, %s269
      %s271 = sphi 0, %s269
      %s272 = sphi 0, %s271
      %s286 = sphi 0, %s272
      %s290 = sphi 0, %s290
      %s292 = sphi 0, %s290
      %s293 = sphi 0, %s292
      %s307 = sphi 0, %s293
      %s311 = sphi 0, %s311
      %s313 = sphi 0, %s311
      %s314 = sphi 0, %s313
      %s328 = sphi 0, %s314
      %s334 = sphi 0, %s336
      %s337 = sphi 0, %s334
      %s338 = sphi 0, %s337
      %s354 = sphi 0, %s338
    $region4: #{forward.1} parent=1 // loop_header_branch
      %28 = sbr.rel (%p26) target = $region8
    $region5: #{forward.1} parent=1 // loop_body
      %s30 = ssub.s32 %s25, 1
      %s31 = ssub.s32 %s25, 2
      %s32 = sadd.s32 %s25, 1
      %s34 = sadd.s32 %s33, 1
      %p37 = scmp.eq.s32.totalorder %s25, 1
      %p38 = scmp.ne.s32.totalorder %s33, %s35
      %p39 = scmp.eq.s32.totalorder %s25, 0
      %p40 = por %p38, %p39
      %p41 = scmp.ne.s32.totalorder %s33, %s35
      %p42 = scmp.eq.s32.totalorder %s30, 1
      %p43 = por %p41, %p42
      %p44 = scmp.ne.s32.totalorder %s35, %s36
      %p45 = scmp.eq.s32.totalorder %s30, 0
      %p46 = por %p44, %p45
      %p47 = scmp.ne.s32.totalorder %s35, %s36
      %p48 = scmp.eq.s32.totalorder %s31, 1
      %p49 = por %p47, %p48
      %p51 = scmp.ne.s32.totalorder %s36, %s50
      %p52 = scmp.eq.s32.totalorder %s31, 0
      %p53 = por %p51, %p52
      %s54 = ssub.s32 %s25, %s32
      %p55 = scmp.eq.s32.totalorder %s54, 0
      %s57 = sadd.s32 %s56, 1
      %s58 = scalar_select %p55, %s56, %s57
      %p61 = pneg %p55
      %p62 = scmp.eq.s32.totalorder %s25, 1
      %p63 = por %p61, %p62
      %p64 = scmp.ne.s32.totalorder %s56, %s59
      %p65 = scmp.eq.s32.totalorder %s25, 0
      %p66 = por %p64, %p65
      %p67 = scmp.ne.s32.totalorder %s56, %s59
      %p68 = scmp.eq.s32.totalorder %s30, 1
      %p69 = por %p67, %p68
      %p70 = scmp.ne.s32.totalorder %s59, %s60
      %p71 = scmp.eq.s32.totalorder %s30, 0
      %p72 = por %p70, %p71
      %p73 = scmp.ne.s32.totalorder %s59, %s60
      %p74 = scmp.eq.s32.totalorder %s31, 1
      %p75 = por %p73, %p74
      %p77 = scmp.ne.s32.totalorder %s60, %s76
      %p78 = scmp.eq.s32.totalorder %s31, 0
      %p79 = por %p77, %p78
      %s81 = sadd.s32 %s80, 1
      %p84 = scmp.eq.s32.totalorder %s25, 1
      %p85 = scmp.ne.s32.totalorder %s80, %s82
      %p86 = scmp.eq.s32.totalorder %s25, 0
      %p87 = por %p85, %p86
      %p88 = scmp.ne.s32.totalorder %s80, %s82
      %p89 = scmp.eq.s32.totalorder %s30, 1
      %p90 = por %p88, %p89
      %p91 = scmp.ne.s32.totalorder %s82, %s83
      %p92 = scmp.eq.s32.totalorder %s30, 0
      %p93 = por %p91, %p92
      %p94 = scmp.ne.s32.totalorder %s82, %s83
      %p95 = scmp.eq.s32.totalorder %s31, 1
      %p96 = por %p94, %p95
      %p98 = scmp.ne.s32.totalorder %s83, %s97
      %p99 = scmp.eq.s32.totalorder %s31, 0
      %p100 = por %p98, %p99
      %s102 = sadd.s32 %s101, 1
      %p105 = scmp.eq.s32.totalorder %s25, 1
      %p106 = scmp.ne.s32.totalorder %s101, %s103
      %p107 = scmp.eq.s32.totalorder %s25, 0
      %p108 = por %p106, %p107
      %p109 = scmp.ne.s32.totalorder %s101, %s103
      %p110 = scmp.eq.s32.totalorder %s30, 1
      %p111 = por %p109, %p110
      %p112 = scmp.ne.s32.totalorder %s103, %s104
      %p113 = scmp.eq.s32.totalorder %s30, 0
      %p114 = por %p112, %p113
      %p115 = scmp.ne.s32.totalorder %s103, %s104
      %p116 = scmp.eq.s32.totalorder %s31, 1
      %p117 = por %p115, %p116
      %p119 = scmp.ne.s32.totalorder %s104, %s118
      %p120 = scmp.eq.s32.totalorder %s31, 0
      %p121 = por %p119, %p120
      %s123 = sadd.s32 %s122, 1
      %p126 = scmp.eq.s32.totalorder %s25, 1
      %p127 = scmp.ne.s32.totalorder %s122, %s124
      %p128 = scmp.eq.s32.totalorder %s25, 0
      %p129 = por %p127, %p128
      %p130 = scmp.ne.s32.totalorder %s122, %s124
      %p131 = scmp.eq.s32.totalorder %s30, 1
      %p132 = por %p130, %p131
      %p133 = scmp.ne.s32.totalorder %s124, %s125
      %p134 = scmp.eq.s32.totalorder %s30, 0
      %p135 = por %p133, %p134
      %p136 = scmp.ne.s32.totalorder %s124, %s125
      %p137 = scmp.eq.s32.totalorder %s31, 1
      %p138 = por %p136, %p137
      %p140 = scmp.ne.s32.totalorder %s125, %s139
      %p141 = scmp.eq.s32.totalorder %s31, 0
      %p142 = por %p140, %p141
      %s144 = sadd.s32 %s143, 1
      %p147 = scmp.eq.s32.totalorder %s25, 1
      %p148 = scmp.ne.s32.totalorder %s143, %s145
      %p149 = scmp.eq.s32.totalorder %s25, 0
      %p150 = por %p148, %p149
      %p151 = scmp.ne.s32.totalorder %s143, %s145
      %p152 = scmp.eq.s32.totalorder %s30, 1
      %p153 = por %p151, %p152
      %p154 = scmp.ne.s32.totalorder %s145, %s146
      %p155 = scmp.eq.s32.totalorder %s30, 0
      %p156 = por %p154, %p155
      %p157 = scmp.ne.s32.totalorder %s145, %s146
      %p158 = scmp.eq.s32.totalorder %s31, 1
      %p159 = por %p157, %p158
      %p161 = scmp.ne.s32.totalorder %s146, %s160
      %p162 = scmp.eq.s32.totalorder %s31, 0
      %p163 = por %p161, %p162
      %s165 = sadd.s32 %s164, 1
      %p168 = scmp.eq.s32.totalorder %s25, 1
      %p169 = scmp.ne.s32.totalorder %s164, %s166
      %p170 = scmp.eq.s32.totalorder %s25, 0
      %p171 = por %p169, %p170
      %p172 = scmp.ne.s32.totalorder %s164, %s166
      %p173 = scmp.eq.s32.totalorder %s30, 1
      %p174 = por %p172, %p173
      %p175 = scmp.ne.s32.totalorder %s166, %s167
      %p176 = scmp.eq.s32.totalorder %s30, 0
      %p177 = por %p175, %p176
      %p178 = scmp.ne.s32.totalorder %s166, %s167
      %p179 = scmp.eq.s32.totalorder %s31, 1
      %p180 = por %p178, %p179
      %p182 = scmp.ne.s32.totalorder %s167, %s181
      %p183 = scmp.eq.s32.totalorder %s31, 0
      %p184 = por %p182, %p183
      %s186 = sadd.s32 %s185, 1
      %p189 = scmp.eq.s32.totalorder %s25, 1
      %p190 = scmp.ne.s32.totalorder %s185, %s187
      %p191 = scmp.eq.s32.totalorder %s25, 0
      %p192 = por %p190, %p191
      %p193 = scmp.ne.s32.totalorder %s185, %s187
      %p194 = scmp.eq.s32.totalorder %s30, 1
      %p195 = por %p193, %p194
      %p196 = scmp.ne.s32.totalorder %s187, %s188
      %p197 = scmp.eq.s32.totalorder %s30, 0
      %p198 = por %p196, %p197
      %p199 = scmp.ne.s32.totalorder %s187, %s188
      %p200 = scmp.eq.s32.totalorder %s31, 1
      %p201 = por %p199, %p200
      %p203 = scmp.ne.s32.totalorder %s188, %s202
      %p204 = scmp.eq.s32.totalorder %s31, 0
      %p205 = por %p203, %p204
      %s207 = sadd.s32 %s206, 1
      %p210 = scmp.eq.s32.totalorder %s25, 1
      %p211 = scmp.ne.s32.totalorder %s206, %s208
      %p212 = scmp.eq.s32.totalorder %s25, 0
      %p213 = por %p211, %p212
      %p214 = scmp.ne.s32.totalorder %s206, %s208
      %p215 = scmp.eq.s32.totalorder %s30, 1
      %p216 = por %p214, %p215
      %p217 = scmp.ne.s32.totalorder %s208, %s209
      %p218 = scmp.eq.s32.totalorder %s30, 0
      %p219 = por %p217, %p218
      %p220 = scmp.ne.s32.totalorder %s208, %s209
      %p221 = scmp.eq.s32.totalorder %s31, 1
      %p222 = por %p220, %p221
      %p224 = scmp.ne.s32.totalorder %s209, %s223
      %p225 = scmp.eq.s32.totalorder %s31, 0
      %p226 = por %p224, %p225
      %s228 = sadd.s32 %s227, 1
      %p231 = scmp.eq.s32.totalorder %s25, 1
      %p232 = scmp.ne.s32.totalorder %s227, %s229
      %p233 = scmp.eq.s32.totalorder %s25, 0
      %p234 = por %p232, %p233
      %p235 = scmp.ne.s32.totalorder %s227, %s229
      %p236 = scmp.eq.s32.totalorder %s30, 1
      %p237 = por %p235, %p236
      %p238 = scmp.ne.s32.totalorder %s229, %s230
      %p239 = scmp.eq.s32.totalorder %s30, 0
      %p240 = por %p238, %p239
      %p241 = scmp.ne.s32.totalorder %s229, %s230
      %p242 = scmp.eq.s32.totalorder %s31, 1
      %p243 = por %p241, %p242
      %p245 = scmp.ne.s32.totalorder %s230, %s244
      %p246 = scmp.eq.s32.totalorder %s31, 0
      %p247 = por %p245, %p246
      %s249 = sadd.s32 %s248, 1
      %p252 = scmp.eq.s32.totalorder %s25, 1
      %p253 = scmp.ne.s32.totalorder %s248, %s250
      %p254 = scmp.eq.s32.totalorder %s25, 0
      %p255 = por %p253, %p254
      %p256 = scmp.ne.s32.totalorder %s248, %s250
      %p257 = scmp.eq.s32.totalorder %s30, 1
      %p258 = por %p256, %p257
      %p259 = scmp.ne.s32.totalorder %s250, %s251
      %p260 = scmp.eq.s32.totalorder %s30, 0
      %p261 = por %p259, %p260
      %p262 = scmp.ne.s32.totalorder %s250, %s251
      %p263 = scmp.eq.s32.totalorder %s31, 1
      %p264 = por %p262, %p263
      %p266 = scmp.ne.s32.totalorder %s251, %s265
      %p267 = scmp.eq.s32.totalorder %s31, 0
      %p268 = por %p266, %p267
      %s270 = sadd.s32 %s269, 1
      %p273 = scmp.eq.s32.totalorder %s25, 1
      %p274 = scmp.ne.s32.totalorder %s269, %s271
      %p275 = scmp.eq.s32.totalorder %s25, 0
      %p276 = por %p274, %p275
      %p277 = scmp.ne.s32.totalorder %s269, %s271
      %p278 = scmp.eq.s32.totalorder %s30, 1
      %p279 = por %p277, %p278
      %p280 = scmp.ne.s32.totalorder %s271, %s272
      %p281 = scmp.eq.s32.totalorder %s30, 0
      %p282 = por %p280, %p281
      %p283 = scmp.ne.s32.totalorder %s271, %s272
      %p284 = scmp.eq.s32.totalorder %s31, 1
      %p285 = por %p283, %p284
      %p287 = scmp.ne.s32.totalorder %s272, %s286
      %p288 = scmp.eq.s32.totalorder %s31, 0
      %p289 = por %p287, %p288
      %s291 = sadd.s32 %s290, 1
      %p294 = scmp.eq.s32.totalorder %s25, 1
      %p295 = scmp.ne.s32.totalorder %s290, %s292
      %p296 = scmp.eq.s32.totalorder %s25, 0
      %p297 = por %p295, %p296
      %p298 = scmp.ne.s32.totalorder %s290, %s292
      %p299 = scmp.eq.s32.totalorder %s30, 1
      %p300 = por %p298, %p299
      %p301 = scmp.ne.s32.totalorder %s292, %s293
      %p302 = scmp.eq.s32.totalorder %s30, 0
      %p303 = por %p301, %p302
      %p304 = scmp.ne.s32.totalorder %s292, %s293
      %p305 = scmp.eq.s32.totalorder %s31, 1
      %p306 = por %p304, %p305
      %p308 = scmp.ne.s32.totalorder %s293, %s307
      %p309 = scmp.eq.s32.totalorder %s31, 0
      %p310 = por %p308, %p309
      %s312 = sadd.s32 %s311, 1
      %p315 = scmp.eq.s32.totalorder %s25, 1
      %p316 = scmp.ne.s32.totalorder %s311, %s313
      %p317 = scmp.eq.s32.totalorder %s25, 0
      %p318 = por %p316, %p317
      %p319 = scmp.ne.s32.totalorder %s311, %s313
      %p320 = scmp.eq.s32.totalorder %s30, 1
      %p321 = por %p319, %p320
      %p322 = scmp.ne.s32.totalorder %s313, %s314
      %p323 = scmp.eq.s32.totalorder %s30, 0
      %p324 = por %p322, %p323
      %p325 = scmp.ne.s32.totalorder %s313, %s314
      %p326 = scmp.eq.s32.totalorder %s31, 1
      %p327 = por %p325, %p326
      %p329 = scmp.ne.s32.totalorder %s314, %s328
      %p330 = scmp.eq.s32.totalorder %s31, 0
      %p331 = por %p329, %p330
      %s332 = ssub.s32 %s25, %s32
      %p333 = scmp.eq.s32.totalorder %s332, 0
      %s335 = sadd.s32 %s334, 1
      %s336 = scalar_select %p333, %s334, %s335
      %p339 = pneg %p333
      %p340 = scmp.eq.s32.totalorder %s25, 1
      %p341 = por %p339, %p340
      %p342 = scmp.ne.s32.totalorder %s334, %s337
      %p343 = scmp.eq.s32.totalorder %s25, 0
      %p344 = por %p342, %p343
      %p345 = scmp.ne.s32.totalorder %s334, %s337
      %p346 = scmp.eq.s32.totalorder %s30, 1
      %p347 = por %p345, %p346
      %p348 = scmp.ne.s32.totalorder %s337, %s338
      %p349 = scmp.eq.s32.totalorder %s30, 0
      %p350 = por %p348, %p349
      %p351 = scmp.ne.s32.totalorder %s337, %s338
      %p352 = scmp.eq.s32.totalorder %s31, 1
      %p353 = por %p351, %p352
      %p355 = scmp.ne.s32.totalorder %s338, %s354
      %p356 = scmp.eq.s32.totalorder %s31, 0
      %p357 = por %p355, %p356
      %p358 = scmp.le.s32.totalorder 1, %s25
      %p359 = scmp.lt.s32.totalorder %s25, 3
      %p360 = pnand %p358, %p359
      %p361 = pneg %p360
      // Predicated region
      $region9: #{forward.1} parent=5 // pred_check
        _
      $region10: #{forward.1} parent=5 // pred_check_branch
        %363 = sbr.rel (%p360) target = $region12
      $region11: #{forward.1} parent=5 // pred_region
        %s364 = ssub.s32 %s25, 1
        // Predicated region
        $region13: #{forward.1} parent=11 // pred_check
          %p365 = pneg %p46
        $region14: #{forward.1} parent=11 // pred_check_branch
          %367 = sbr.rel (%p365) target = $region16
        $region15: #{forward.1} parent=11 // pred_region
          %s369 = ssub.s32 16, 16
          %370 = vsyncadd [#allocation4], %s369
          %s372 = sshll.u32 %s0, 4
          %s373 = int_to_ptr.vmem [resolvable:$true] %s372
          %375 = dma.vmem_to_smem %s373, 16, [#allocation2], [#allocation4]
        $region16: #{forward.1} parent=11 // pred_fallthru
          _
        // Predicated region
        $region17: #{forward.1} parent=11 // pred_check
          %p376 = pneg %p93
        $region18: #{forward.1} parent=11 // pred_check_branch
          %378 = sbr.rel (%p376) target = $region20
        $region19: #{forward.1} parent=11 // pred_region
          %s380 = ssub.s32 16384, 16384
          %381 = vsyncadd [#allocation3], %s380
          %s382 = sshll.u32 [#allocation5], 4
          %s383 = int_to_ptr.vmem [resolvable:$true] %s382
          %388 = dma.hbm_to_vmem [thread:$0]  %s2, 16384, %s383, [#allocation3], 512, 512, 32
        $region20: #{forward.1} parent=11 // pred_fallthru
          _
        // Predicated region
        $region21: #{forward.1} parent=11 // pred_check
          %p389 = pneg %p114
        $region22: #{forward.1} parent=11 // pred_check_branch
          %391 = sbr.rel (%p389) target = $region24
        $region23: #{forward.1} parent=11 // pred_region
          _
        $region24: #{forward.1} parent=11 // pred_fallthru
          _
        // Predicated region
        $region25: #{forward.1} parent=11 // pred_check
          %p392 = pneg %p135
        $region26: #{forward.1} parent=11 // pred_check_branch
          %394 = sbr.rel (%p392) target = $region28
        $region27: #{forward.1} parent=11 // pred_region
          %s396 = ssub.s32 8192, 8192
          %397 = vsyncadd [#allocation7], %s396
          %s398 = sshll.u32 [#allocation6], 4
          %s399 = int_to_ptr.vmem [resolvable:$true] %s398
          %404 = dma.hbm_to_vmem [thread:$0]  %s4, 8192, %s399, [#allocation7], 256, 256, 16
        $region28: #{forward.1} parent=11 // pred_fallthru
          _
        // Predicated region
        $region29: #{forward.1} parent=11 // pred_check
          %p405 = pneg %p156
        $region30: #{forward.1} parent=11 // pred_check_branch
          %407 = sbr.rel (%p405) target = $region32
        $region31: #{forward.1} parent=11 // pred_region
          %s409 = ssub.s32 8192, 8192
          %410 = vsyncadd [#allocation7], %s409
          %s411 = sshll.u32 [#allocation8], 4
          %s412 = int_to_ptr.vmem [resolvable:$true] %s411
          %417 = dma.hbm_to_vmem [thread:$0]  %s5, 8192, %s412, [#allocation7], 256, 256, 16
        $region32: #{forward.1} parent=11 // pred_fallthru
          _
        // Predicated region
        $region33: #{forward.1} parent=11 // pred_check
          %p418 = pneg %p177
        $region34: #{forward.1} parent=11 // pred_check_branch
          %420 = sbr.rel (%p418) target = $region36
        $region35: #{forward.1} parent=11 // pred_region
          _
        $region36: #{forward.1} parent=11 // pred_fallthru
          _
        // Predicated region
        $region37: #{forward.1} parent=11 // pred_check
          %p421 = pneg %p198
        $region38: #{forward.1} parent=11 // pred_check_branch
          %423 = sbr.rel (%p421) target = $region40
        $region39: #{forward.1} parent=11 // pred_region
          %s425 = ssub.s32 32768, 32768
          %426 = vsyncadd [#allocation10], %s425
          %s427 = sshll.u32 [#allocation9], 4
          %s428 = int_to_ptr.vmem [resolvable:$true] %s427
          %433 = dma.hbm_to_vmem [thread:$0]  %s7, 32768, %s428, [#allocation10], 1024, 1024, 64
        $region40: #{forward.1} parent=11 // pred_fallthru
          _
        // Predicated region
        $region41: #{forward.1} parent=11 // pred_check
          %p434 = pneg %p219
        $region42: #{forward.1} parent=11 // pred_check_branch
          %436 = sbr.rel (%p434) target = $region44
        $region43: #{forward.1} parent=11 // pred_region
          _
        $region44: #{forward.1} parent=11 // pred_fallthru
          _
        // Predicated region
        $region45: #{forward.1} parent=11 // pred_check
          %p437 = pneg %p240
        $region46: #{forward.1} parent=11 // pred_check_branch
          %439 = sbr.rel (%p437) target = $region48
        $region47: #{forward.1} parent=11 // pred_region
          %s441 = ssub.s32 32768, 32768
          %442 = vsyncadd [#allocation10], %s441
          %s443 = sshll.u32 [#allocation11], 4
          %s444 = int_to_ptr.vmem [resolvable:$true] %s443
          %449 = dma.hbm_to_vmem [thread:$0]  %s9, 32768, %s444, [#allocation10], 512, 512, 32
        $region48: #{forward.1} parent=11 // pred_fallthru
          _
        // Predicated region
        $region49: #{forward.1} parent=11 // pred_check
          %p450 = pneg %p261
        $region50: #{forward.1} parent=11 // pred_check_branch
          %452 = sbr.rel (%p450) target = $region52
        $region51: #{forward.1} parent=11 // pred_region
          %s454 = ssub.s32 32768, 32768
          %455 = vsyncadd [#allocation13], %s454
          %s456 = sshll.u32 [#allocation12], 4
          %s457 = int_to_ptr.vmem [resolvable:$true] %s456
          %462 = dma.hbm_to_vmem [thread:$0]  %s10, 32768, %s457, [#allocation13], 512, 512, 32
        $region52: #{forward.1} parent=11 // pred_fallthru
          _
        // Predicated region
        $region53: #{forward.1} parent=11 // pred_check
          %p463 = pneg %p282
        $region54: #{forward.1} parent=11 // pred_check_branch
          %465 = sbr.rel (%p463) target = $region56
        $region55: #{forward.1} parent=11 // pred_region
          _
        $region56: #{forward.1} parent=11 // pred_fallthru
          _
        // Predicated region
        $region57: #{forward.1} parent=11 // pred_check
          %p466 = pneg %p303
        $region58: #{forward.1} parent=11 // pred_check_branch
          %468 = sbr.rel (%p466) target = $region60
        $region59: #{forward.1} parent=11 // pred_region
          %s470 = ssub.s32 8192, 8192
          %471 = vsyncadd [#allocation13], %s470
          %s472 = sshll.u32 [#allocation14], 4
          %s473 = int_to_ptr.vmem [resolvable:$true] %s472
          %478 = dma.hbm_to_vmem [thread:$0]  %s12, 8192, %s473, [#allocation13], 128, 128, 8
        $region60: #{forward.1} parent=11 // pred_fallthru
          _
        // Predicated region
        $region61: #{forward.1} parent=11 // pred_check
          %p479 = pneg %p324
        $region62: #{forward.1} parent=11 // pred_check_branch
          %481 = sbr.rel (%p479) target = $region64
        $region63: #{forward.1} parent=11 // pred_region
          _
        $region64: #{forward.1} parent=11 // pred_fallthru
          _
      $region12: #{forward.1} parent=5 // pred_fallthru
        _
      %p482 = scmp.lt.s32.totalorder %s25, 2
      // Predicated region
      $region65: #{forward.1} parent=5 // pred_check
        %p483 = pneg %p482
      $region66: #{forward.1} parent=5 // pred_check_branch
        %485 = sbr.rel (%p483) target = $region68
      $region67: #{forward.1} parent=5 // pred_region
        // Predicated region
        $region69: #{forward.1} parent=67 // pred_check
          %p486 = pneg %p66
        $region70: #{forward.1} parent=67 // pred_check_branch
          %488 = sbr.rel (%p486) target = $region72
        $region71: #{forward.1} parent=67 // pred_region
          %p489 = scmp.lt.s32.totalorder %s25, 1
          %s490 = scalar_select %p489, %s25, 1
          %s491 = smul.addr %s490, 2
          %s492 = smul.addr %s491, 8
          %s493 = scalar_lea.vmem %s1, %s492
        $region72: #{forward.1} parent=67 // pred_fallthru
          _
      $region68: #{forward.1} parent=5 // pred_fallthru
        _
      %p494 = scmp.le.s32.totalorder 1, %s25
      %p495 = scmp.lt.s32.totalorder %s25, 3
      %p496 = pnand %p494, %p495
      %p497 = pneg %p496
      // Predicated region
      $region73: #{forward.1} parent=5 // pred_check
        _
      $region74: #{forward.1} parent=5 // pred_check_branch
        %499 = sbr.rel (%p496) target = $region76
      $region75: #{forward.1} parent=5 // pred_region
        %s500 = ssub.s32 %s25, 1
        // Predicated region
        $region77: #{forward.1} parent=75 // pred_check
          %p501 = pneg %p46
        $region78: #{forward.1} parent=75 // pred_check_branch
          %503 = sbr.rel (%p501) target = $region80
        $region79: #{forward.1} parent=75 // pred_region
          %504 = dma.done [#allocation4], 16
        $region80: #{forward.1} parent=75 // pred_fallthru
          _
        // Predicated region
        $region81: #{forward.1} parent=75 // pred_check
          %p505 = pneg %p93
        $region82: #{forward.1} parent=75 // pred_check_branch
          %507 = sbr.rel (%p505) target = $region84
        $region83: #{forward.1} parent=75 // pred_region
          %508 = dma.done [#allocation3], 16384
        $region84: #{forward.1} parent=75 // pred_fallthru
          _
        // Predicated region
        $region85: #{forward.1} parent=75 // pred_check
          %p509 = pneg %p135
        $region86: #{forward.1} parent=75 // pred_check_branch
          %511 = sbr.rel (%p509) target = $region88
        $region87: #{forward.1} parent=75 // pred_region
          %512 = dma.done [#allocation7], 8192
        $region88: #{forward.1} parent=75 // pred_fallthru
          _
        // Predicated region
        $region89: #{forward.1} parent=75 // pred_check
          %p513 = pneg %p156
        $region90: #{forward.1} parent=75 // pred_check_branch
          %515 = sbr.rel (%p513) target = $region92
        $region91: #{forward.1} parent=75 // pred_region
          %516 = dma.done [#allocation7], 8192
        $region92: #{forward.1} parent=75 // pred_fallthru
          _
        // Predicated region
        $region93: #{forward.1} parent=75 // pred_check
          %p517 = pneg %p198
        $region94: #{forward.1} parent=75 // pred_check_branch
          %519 = sbr.rel (%p517) target = $region96
        $region95: #{forward.1} parent=75 // pred_region
          %520 = dma.done [#allocation10], 32768
        $region96: #{forward.1} parent=75 // pred_fallthru
          _
        // Predicated region
        $region97: #{forward.1} parent=75 // pred_check
          %p521 = pneg %p240
        $region98: #{forward.1} parent=75 // pred_check_branch
          %523 = sbr.rel (%p521) target = $region100
        $region99: #{forward.1} parent=75 // pred_region
          %524 = dma.done [#allocation10], 32768
        $region100: #{forward.1} parent=75 // pred_fallthru
          _
        // Predicated region
        $region101: #{forward.1} parent=75 // pred_check
          %p525 = pneg %p261
        $region102: #{forward.1} parent=75 // pred_check_branch
          %527 = sbr.rel (%p525) target = $region104
        $region103: #{forward.1} parent=75 // pred_region
          %528 = dma.done [#allocation13], 32768
        $region104: #{forward.1} parent=75 // pred_fallthru
          _
        // Predicated region
        $region105: #{forward.1} parent=75 // pred_check
          %p529 = pneg %p303
        $region106: #{forward.1} parent=75 // pred_check_branch
          %531 = sbr.rel (%p529) target = $region108
        $region107: #{forward.1} parent=75 // pred_region
          %532 = dma.done [#allocation13], 8192
        $region108: #{forward.1} parent=75 // pred_fallthru
          _
        %533 = sfence
        %p534 = pneg %p46
        %p535 = pneg %p43
        %p536 = scmp.lt.s32.totalorder %s30, 1
        %s537 = scalar_select %p536, %s30, 1
        %s538 = smul.addr %s537, 2
        %s539 = smul.addr %s538, 8
        %s540 = scalar_lea.vmem %s1, %s539
        %p541 = pneg %p72
        %p542 = pneg %p69
        %p543 = pneg %p93
        %p544 = pneg %p90
        %p545 = pneg %p114
        %p546 = pneg %p111
        %p547 = pneg %p135
        %p548 = pneg %p132
        %p549 = pneg %p156
        %p550 = pneg %p153
        %p551 = pneg %p177
        %p552 = pneg %p174
        %p553 = pneg %p198
        %p554 = pneg %p195
        %p555 = pneg %p219
        %p556 = pneg %p216
        %p557 = pneg %p240
        %p558 = pneg %p237
        %p559 = pneg %p261
        %p560 = pneg %p258
        %p561 = pneg %p282
        %p562 = pneg %p279
        %p563 = pneg %p303
        %p564 = pneg %p300
        %p565 = pneg %p324
        %p566 = pneg %p321
        %p567 = pneg %p350
        %p568 = pneg %p347
        %p569 = scmp.lt.s32.totalorder %s30, 1
        %s570 = scalar_select %p569, %s30, 1
        %s571 = smul.addr %s570, 8
        %s572 = scalar_lea.vmem %s14, %s571
        %p573 = scmp.lt.s32.totalorder %s30, 1
        %s574 = scalar_select %p573, %s30, 1
        %s575 = smul.addr %s574, 2
        %s576 = smul.addr %s575, 8
        %s577 = scalar_lea.vmem %s1, %s576
        %p578 = scmp.lt.s32.totalorder %s30, 1
        %s579 = scalar_select %p578, %s30, 1
        %s580 = smul.addr %s579, 8
        %s581 = scalar_lea.vmem %s14, %s580
        %v582 = vld [vmem:[%s577] sm:$0xff]
        %v583 = vld [vmem:[%s577 + $0x8] sm:$0xff]
        %s584 = sld [smem:[#allocation2]]
        %s585 = sld [smem:[#allocation2 + $0x1]]
        %v586 = vld [vmem:[#allocation6] sm:$0xff]
        %v587 = vld [vmem:[#allocation6 + $0x8] sm:$0xff]
        %v588 = vld [vmem:[#allocation6 + $0x10] sm:$0xff]
        %v589 = vld [vmem:[#allocation6 + $0x18] sm:$0xff]
        %v590 = vld [vmem:[#allocation6 + $0x20] sm:$0xff]
        %v591 = vld [vmem:[#allocation6 + $0x28] sm:$0xff]
        %v592 = vld [vmem:[#allocation6 + $0x30] sm:$0xff]
        %v593 = vld [vmem:[#allocation6 + $0x38] sm:$0xff]
        %v594 = vld [vmem:[#allocation6 + $0x40] sm:$0xff]
        %v595 = vld [vmem:[#allocation6 + $0x48] sm:$0xff]
        %v596 = vld [vmem:[#allocation6 + $0x50] sm:$0xff]
        %v597 = vld [vmem:[#allocation6 + $0x58] sm:$0xff]
        %v598 = vld [vmem:[#allocation6 + $0x60] sm:$0xff]
        %v599 = vld [vmem:[#allocation6 + $0x68] sm:$0xff]
        %v600 = vld [vmem:[#allocation6 + $0x70] sm:$0xff]
        %v601 = vld [vmem:[#allocation6 + $0x78] sm:$0xff]
        %v602 = vld [vmem:[#allocation6 + $0x80] sm:$0xff]
        %v603 = vld [vmem:[#allocation6 + $0x88] sm:$0xff]
        %v604 = vld [vmem:[#allocation6 + $0x90] sm:$0xff]
        %v605 = vld [vmem:[#allocation6 + $0x98] sm:$0xff]
        %v606 = vld [vmem:[#allocation6 + $0xa0] sm:$0xff]
        %v607 = vld [vmem:[#allocation6 + $0xa8] sm:$0xff]
        %v608 = vld [vmem:[#allocation6 + $0xb0] sm:$0xff]
        %v609 = vld [vmem:[#allocation6 + $0xb8] sm:$0xff]
        %v610 = vld [vmem:[#allocation6 + $0xc0] sm:$0xff]
        %v611 = vld [vmem:[#allocation6 + $0xc8] sm:$0xff]
        %v612 = vld [vmem:[#allocation6 + $0xd0] sm:$0xff]
        %v613 = vld [vmem:[#allocation6 + $0xd8] sm:$0xff]
        %v614 = vld [vmem:[#allocation6 + $0xe0] sm:$0xff]
        %v615 = vld [vmem:[#allocation6 + $0xe8] sm:$0xff]
        %v616 = vld [vmem:[#allocation6 + $0xf0] sm:$0xff]
        %v617 = vld [vmem:[#allocation6 + $0xf8] sm:$0xff]
        %v618 = vld [vmem:[#allocation6 + $0x100] sm:$0xff]
        %v619 = vld [vmem:[#allocation6 + $0x108] sm:$0xff]
        %v620 = vld [vmem:[#allocation6 + $0x110] sm:$0xff]
        %v621 = vld [vmem:[#allocation6 + $0x118] sm:$0xff]
        %v622 = vld [vmem:[#allocation6 + $0x120] sm:$0xff]
        %v623 = vld [vmem:[#allocation6 + $0x128] sm:$0xff]
        %v624 = vld [vmem:[#allocation6 + $0x130] sm:$0xff]
        %v625 = vld [vmem:[#allocation6 + $0x138] sm:$0xff]
        %v626 = vld [vmem:[#allocation6 + $0x140] sm:$0xff]
        %v627 = vld [vmem:[#allocation6 + $0x148] sm:$0xff]
        %v628 = vld [vmem:[#allocation6 + $0x150] sm:$0xff]
        %v629 = vld [vmem:[#allocation6 + $0x158] sm:$0xff]
        %v630 = vld [vmem:[#allocation6 + $0x160] sm:$0xff]
        %v631 = vld [vmem:[#allocation6 + $0x168] sm:$0xff]
        %v632 = vld [vmem:[#allocation6 + $0x170] sm:$0xff]
        %v633 = vld [vmem:[#allocation6 + $0x178] sm:$0xff]
        %v634 = vld [vmem:[#allocation6 + $0x180] sm:$0xff]
        %v635 = vld [vmem:[#allocation6 + $0x188] sm:$0xff]
        %v636 = vld [vmem:[#allocation6 + $0x190] sm:$0xff]
        %v637 = vld [vmem:[#allocation6 + $0x198] sm:$0xff]
        %v638 = vld [vmem:[#allocation6 + $0x1a0] sm:$0xff]
        %v639 = vld [vmem:[#allocation6 + $0x1a8] sm:$0xff]
        %v640 = vld [vmem:[#allocation6 + $0x1b0] sm:$0xff]
        %v641 = vld [vmem:[#allocation6 + $0x1b8] sm:$0xff]
        %v642 = vld [vmem:[#allocation6 + $0x1c0] sm:$0xff]
        %v643 = vld [vmem:[#allocation6 + $0x1c8] sm:$0xff]
        %v644 = vld [vmem:[#allocation6 + $0x1d0] sm:$0xff]
        %v645 = vld [vmem:[#allocation6 + $0x1d8] sm:$0xff]
        %v646 = vld [vmem:[#allocation6 + $0x1e0] sm:$0xff]
        %v647 = vld [vmem:[#allocation6 + $0x1e8] sm:$0xff]
        %v648 = vld [vmem:[#allocation6 + $0x1f0] sm:$0xff]
        %v649 = vld [vmem:[#allocation6 + $0x1f8] sm:$0xff]
        %v650 = vld [vmem:[#allocation5] sm:$0xff]
        %v651 = vld [vmem:[#allocation5 + $0x8] sm:$0xff]
        %v652 = vld [vmem:[#allocation5 + $0x10] sm:$0xff]
        %v653 = vld [vmem:[#allocation5 + $0x18] sm:$0xff]
        %v654 = vld [vmem:[#allocation5 + $0x20] sm:$0xff]
        %v655 = vld [vmem:[#allocation5 + $0x28] sm:$0xff]
        %v656 = vld [vmem:[#allocation5 + $0x30] sm:$0xff]
        %v657 = vld [vmem:[#allocation5 + $0x38] sm:$0xff]
        %v658 = vld [vmem:[#allocation5 + $0x40] sm:$0xff]
        %v659 = vld [vmem:[#allocation5 + $0x48] sm:$0xff]
        %v660 = vld [vmem:[#allocation5 + $0x50] sm:$0xff]
        %v661 = vld [vmem:[#allocation5 + $0x58] sm:$0xff]
        %v662 = vld [vmem:[#allocation5 + $0x60] sm:$0xff]
        %v663 = vld [vmem:[#allocation5 + $0x68] sm:$0xff]
        %v664 = vld [vmem:[#allocation5 + $0x70] sm:$0xff]
        %v665 = vld [vmem:[#allocation5 + $0x78] sm:$0xff]
        %v666 = vld [vmem:[#allocation5 + $0x80] sm:$0xff]
        %v667 = vld [vmem:[#allocation5 + $0x88] sm:$0xff]
        %v668 = vld [vmem:[#allocation5 + $0x90] sm:$0xff]
        %v669 = vld [vmem:[#allocation5 + $0x98] sm:$0xff]
        %v670 = vld [vmem:[#allocation5 + $0xa0] sm:$0xff]
        %v671 = vld [vmem:[#allocation5 + $0xa8] sm:$0xff]
        %v672 = vld [vmem:[#allocation5 + $0xb0] sm:$0xff]
        %v673 = vld [vmem:[#allocation5 + $0xb8] sm:$0xff]
        %v674 = vld [vmem:[#allocation5 + $0xc0] sm:$0xff]
        %v675 = vld [vmem:[#allocation5 + $0xc8] sm:$0xff]
        %v676 = vld [vmem:[#allocation5 + $0xd0] sm:$0xff]
        %v677 = vld [vmem:[#allocation5 + $0xd8] sm:$0xff]
        %v678 = vld [vmem:[#allocation5 + $0xe0] sm:$0xff]
        %v679 = vld [vmem:[#allocation5 + $0xe8] sm:$0xff]
        %v680 = vld [vmem:[#allocation5 + $0xf0] sm:$0xff]
        %v681 = vld [vmem:[#allocation5 + $0xf8] sm:$0xff]
        %v682 = vld [vmem:[#allocation5 + $0x100] sm:$0xff]
        %v683 = vld [vmem:[#allocation5 + $0x108] sm:$0xff]
        %v684 = vld [vmem:[#allocation5 + $0x110] sm:$0xff]
        %v685 = vld [vmem:[#allocation5 + $0x118] sm:$0xff]
        %v686 = vld [vmem:[#allocation5 + $0x120] sm:$0xff]
        %v687 = vld [vmem:[#allocation5 + $0x128] sm:$0xff]
        %v688 = vld [vmem:[#allocation5 + $0x130] sm:$0xff]
        %v689 = vld [vmem:[#allocation5 + $0x138] sm:$0xff]
        %v690 = vld [vmem:[#allocation5 + $0x140] sm:$0xff]
        %v691 = vld [vmem:[#allocation5 + $0x148] sm:$0xff]
        %v692 = vld [vmem:[#allocation5 + $0x150] sm:$0xff]
        %v693 = vld [vmem:[#allocation5 + $0x158] sm:$0xff]
        %v694 = vld [vmem:[#allocation5 + $0x160] sm:$0xff]
        %v695 = vld [vmem:[#allocation5 + $0x168] sm:$0xff]
        %v696 = vld [vmem:[#allocation5 + $0x170] sm:$0xff]
        %v697 = vld [vmem:[#allocation5 + $0x178] sm:$0xff]
        %v698 = vld [vmem:[#allocation5 + $0x180] sm:$0xff]
        %v699 = vld [vmem:[#allocation5 + $0x188] sm:$0xff]
        %v700 = vld [vmem:[#allocation5 + $0x190] sm:$0xff]
        %v701 = vld [vmem:[#allocation5 + $0x198] sm:$0xff]
        %v702 = vld [vmem:[#allocation5 + $0x1a0] sm:$0xff]
        %v703 = vld [vmem:[#allocation5 + $0x1a8] sm:$0xff]
        %v704 = vld [vmem:[#allocation5 + $0x1b0] sm:$0xff]
        %v705 = vld [vmem:[#allocation5 + $0x1b8] sm:$0xff]
        %v706 = vld [vmem:[#allocation5 + $0x1c0] sm:$0xff]
        %v707 = vld [vmem:[#allocation5 + $0x1c8] sm:$0xff]
        %v708 = vld [vmem:[#allocation5 + $0x1d0] sm:$0xff]
        %v709 = vld [vmem:[#allocation5 + $0x1d8] sm:$0xff]
        %v710 = vld [vmem:[#allocation5 + $0x1e0] sm:$0xff]
        %v711 = vld [vmem:[#allocation5 + $0x1e8] sm:$0xff]
        %v712 = vld [vmem:[#allocation5 + $0x1f0] sm:$0xff]
        %v713 = vld [vmem:[#allocation5 + $0x1f8] sm:$0xff]
        %v714 = vld [vmem:[#allocation5 + $0x200] sm:$0xff]
        %v715 = vld [vmem:[#allocation5 + $0x208] sm:$0xff]
        %v716 = vld [vmem:[#allocation5 + $0x210] sm:$0xff]
        %v717 = vld [vmem:[#allocation5 + $0x218] sm:$0xff]
        %v718 = vld [vmem:[#allocation5 + $0x220] sm:$0xff]
        %v719 = vld [vmem:[#allocation5 + $0x228] sm:$0xff]
        %v720 = vld [vmem:[#allocation5 + $0x230] sm:$0xff]
        %v721 = vld [vmem:[#allocation5 + $0x238] sm:$0xff]
        %v722 = vld [vmem:[#allocation5 + $0x240] sm:$0xff]
        %v723 = vld [vmem:[#allocation5 + $0x248] sm:$0xff]
        %v724 = vld [vmem:[#allocation5 + $0x250] sm:$0xff]
        %v725 = vld [vmem:[#allocation5 + $0x258] sm:$0xff]
        %v726 = vld [vmem:[#allocation5 + $0x260] sm:$0xff]
        %v727 = vld [vmem:[#allocation5 + $0x268] sm:$0xff]
        %v728 = vld [vmem:[#allocation5 + $0x270] sm:$0xff]
        %v729 = vld [vmem:[#allocation5 + $0x278] sm:$0xff]
        %v730 = vld [vmem:[#allocation5 + $0x280] sm:$0xff]
        %v731 = vld [vmem:[#allocation5 + $0x288] sm:$0xff]
        %v732 = vld [vmem:[#allocation5 + $0x290] sm:$0xff]
        %v733 = vld [vmem:[#allocation5 + $0x298] sm:$0xff]
        %v734 = vld [vmem:[#allocation5 + $0x2a0] sm:$0xff]
        %v735 = vld [vmem:[#allocation5 + $0x2a8] sm:$0xff]
        %v736 = vld [vmem:[#allocation5 + $0x2b0] sm:$0xff]
        %v737 = vld [vmem:[#allocation5 + $0x2b8] sm:$0xff]
        %v738 = vld [vmem:[#allocation5 + $0x2c0] sm:$0xff]
        %v739 = vld [vmem:[#allocation5 + $0x2c8] sm:$0xff]
        %v740 = vld [vmem:[#allocation5 + $0x2d0] sm:$0xff]
        %v741 = vld [vmem:[#allocation5 + $0x2d8] sm:$0xff]
        %v742 = vld [vmem:[#allocation5 + $0x2e0] sm:$0xff]
        %v743 = vld [vmem:[#allocation5 + $0x2e8] sm:$0xff]
        %v744 = vld [vmem:[#allocation5 + $0x2f0] sm:$0xff]
        %v745 = vld [vmem:[#allocation5 + $0x2f8] sm:$0xff]
        %v746 = vld [vmem:[#allocation5 + $0x300] sm:$0xff]
        %v747 = vld [vmem:[#allocation5 + $0x308] sm:$0xff]
        %v748 = vld [vmem:[#allocation5 + $0x310] sm:$0xff]
        %v749 = vld [vmem:[#allocation5 + $0x318] sm:$0xff]
        %v750 = vld [vmem:[#allocation5 + $0x320] sm:$0xff]
        %v751 = vld [vmem:[#allocation5 + $0x328] sm:$0xff]
        %v752 = vld [vmem:[#allocation5 + $0x330] sm:$0xff]
        %v753 = vld [vmem:[#allocation5 + $0x338] sm:$0xff]
        %v754 = vld [vmem:[#allocation5 + $0x340] sm:$0xff]
        %v755 = vld [vmem:[#allocation5 + $0x348] sm:$0xff]
        %v756 = vld [vmem:[#allocation5 + $0x350] sm:$0xff]
        %v757 = vld [vmem:[#allocation5 + $0x358] sm:$0xff]
        %v758 = vld [vmem:[#allocation5 + $0x360] sm:$0xff]
        %v759 = vld [vmem:[#allocation5 + $0x368] sm:$0xff]
        %v760 = vld [vmem:[#allocation5 + $0x370] sm:$0xff]
        %v761 = vld [vmem:[#allocation5 + $0x378] sm:$0xff]
        %v762 = vld [vmem:[#allocation5 + $0x380] sm:$0xff]
        %v763 = vld [vmem:[#allocation5 + $0x388] sm:$0xff]
        %v764 = vld [vmem:[#allocation5 + $0x390] sm:$0xff]
        %v765 = vld [vmem:[#allocation5 + $0x398] sm:$0xff]
        %v766 = vld [vmem:[#allocation5 + $0x3a0] sm:$0xff]
        %v767 = vld [vmem:[#allocation5 + $0x3a8] sm:$0xff]
        %v768 = vld [vmem:[#allocation5 + $0x3b0] sm:$0xff]
        %v769 = vld [vmem:[#allocation5 + $0x3b8] sm:$0xff]
        %v770 = vld [vmem:[#allocation5 + $0x3c0] sm:$0xff]
        %v771 = vld [vmem:[#allocation5 + $0x3c8] sm:$0xff]
        %v772 = vld [vmem:[#allocation5 + $0x3d0] sm:$0xff]
        %v773 = vld [vmem:[#allocation5 + $0x3d8] sm:$0xff]
        %v774 = vld [vmem:[#allocation5 + $0x3e0] sm:$0xff]
        %v775 = vld [vmem:[#allocation5 + $0x3e8] sm:$0xff]
        %v776 = vld [vmem:[#allocation5 + $0x3f0] sm:$0xff]
        %v777 = vld [vmem:[#allocation5 + $0x3f8] sm:$0xff]
        %v778 = vld [vmem:[%s3] sm:$0xf]
        %v780 = vlaneseq
        %v781 = vshrl.u32 %v780, 7
        %v782 = vsub.s32 0, %v781
        %v783 = vrot.slane %v778, %v782
        %v784 = vlaneseq
        %v785 = vshrl.u32 %v784, 7
        %v786 = vsub.s32 1, %v785
        %v787 = vrot.slane %v778, %v786
        %v788 = vlaneseq
        %v789 = vshrl.u32 %v788, 7
        %v790 = vsub.s32 2, %v789
        %v791 = vrot.slane %v778, %v790
        %v792 = vlaneseq
        %v793 = vshrl.u32 %v792, 7
        %v794 = vsub.s32 3, %v793
        %v795 = vrot.slane %v778, %v794
        %800 = vmatprep.subr.mxu0 %v651
        %801 = vmatpush1.msra.mxu0 %v650
        %802 = vmatprep.subr.mxu0 %v655
        %803 = vmatpush1.msra.mxu0 %v654
        %804 = vmatprep.subr.mxu0 %v659
        %805 = vmatpush1.msra.mxu0 %v658
        %806 = vmatprep.subr.mxu0 %v663
        %807 = vmatpush1.msra.mxu0 %v662
        %808 = vmatprep.subr.mxu0 %v667
        %809 = vmatpush1.msra.mxu0 %v666
        %810 = vmatprep.subr.mxu0 %v671
        %811 = vmatpush1.msra.mxu0 %v670
        %812 = vmatprep.subr.mxu0 %v675
        %813 = vmatpush1.msra.mxu0 %v674
        %814 = vmatprep.subr.mxu0 %v679
        %815 = vmatpush1.msra.mxu0 %v678
        %816 = vmatprep.subr.mxu0 %v683
        %817 = vmatpush1.msra.mxu0 %v682
        %818 = vmatprep.subr.mxu0 %v687
        %819 = vmatpush1.msra.mxu0 %v686
        %820 = vmatprep.subr.mxu0 %v691
        %821 = vmatpush1.msra.mxu0 %v690
        %822 = vmatprep.subr.mxu0 %v695
        %823 = vmatpush1.msra.mxu0 %v694
        %824 = vmatprep.subr.mxu0 %v699
        %825 = vmatpush1.msra.mxu0 %v698
        %826 = vmatprep.subr.mxu0 %v703
        %827 = vmatpush1.msra.mxu0 %v702
        %828 = vmatprep.subr.mxu0 %v707
        %829 = vmatpush1.msra.mxu0 %v706
        %830 = vmatprep.subr.mxu0 %v711
        %831 = vmatpush1.msra.mxu0 %v710
        %832 = vmatprep.subr.mxu0 %v715
        %833 = vmatpush1.msra.mxu0 %v714
        %834 = vmatprep.subr.mxu0 %v719
        %835 = vmatpush1.msra.mxu0 %v718
        %836 = vmatprep.subr.mxu0 %v723
        %837 = vmatpush1.msra.mxu0 %v722
        %838 = vmatprep.subr.mxu0 %v727
        %839 = vmatpush1.msra.mxu0 %v726
        %840 = vmatprep.subr.mxu0 %v731
        %841 = vmatpush1.msra.mxu0 %v730
        %842 = vmatprep.subr.mxu0 %v735
        %843 = vmatpush1.msra.mxu0 %v734
        %844 = vmatprep.subr.mxu0 %v739
        %845 = vmatpush1.msra.mxu0 %v738
        %846 = vmatprep.subr.mxu0 %v743
        %847 = vmatpush1.msra.mxu0 %v742
        %848 = vmatprep.subr.mxu0 %v747
        %849 = vmatpush1.msra.mxu0 %v746
        %850 = vmatprep.subr.mxu0 %v751
        %851 = vmatpush1.msra.mxu0 %v750
        %852 = vmatprep.subr.mxu0 %v755
        %853 = vmatpush1.msra.mxu0 %v754
        %854 = vmatprep.subr.mxu0 %v759
        %855 = vmatpush1.msra.mxu0 %v758
        %856 = vmatprep.subr.mxu0 %v763
        %857 = vmatpush1.msra.mxu0 %v762
        %858 = vmatprep.subr.mxu0 %v767
        %859 = vmatpush1.msra.mxu0 %v766
        %860 = vmatprep.subr.mxu0 %v771
        %861 = vmatpush1.msra.mxu0 %v770
        %862 = vmatprep.subr.mxu0 %v775
        %863 = vmatpush1.msra.mxu0 %v774
        %864 = vmatprep.mubr.f32.mxu0 %v583
        %865 = vmatmul.mubr.f32.gmra.mrb[0].mxu0 %v582
        %v866 = vpop.f32.mrb[0].mxu0
        %v867 = vadd.f32 %v783, %v866
        %v868 = vpop.f32.mrb[0].mxu0
        %v869 = vadd.f32 %v787, %v868
        %870 = vdwg.mxu0
        %871 = vmatprep.subr.mxu0 %v653
        %872 = vmatpush1.msra.mxu0 %v652
        %873 = vmatprep.subr.mxu0 %v657
        %874 = vmatpush1.msra.mxu0 %v656
        %875 = vmatprep.subr.mxu0 %v661
        %876 = vmatpush1.msra.mxu0 %v660
        %877 = vmatprep.subr.mxu0 %v665
        %878 = vmatpush1.msra.mxu0 %v664
        %879 = vmatprep.subr.mxu0 %v669
        %880 = vmatpush1.msra.mxu0 %v668
        %881 = vmatprep.subr.mxu0 %v673
        %882 = vmatpush1.msra.mxu0 %v672
        %883 = vmatprep.subr.mxu0 %v677
        %884 = vmatpush1.msra.mxu0 %v676
        %885 = vmatprep.subr.mxu0 %v681
        %886 = vmatpush1.msra.mxu0 %v680
        %887 = vmatprep.subr.mxu0 %v685
        %888 = vmatpush1.msra.mxu0 %v684
        %889 = vmatprep.subr.mxu0 %v689
        %890 = vmatpush1.msra.mxu0 %v688
        %891 = vmatprep.subr.mxu0 %v693
        %892 = vmatpush1.msra.mxu0 %v692
        %893 = vmatprep.subr.mxu0 %v697
        %894 = vmatpush1.msra.mxu0 %v696
        %895 = vmatprep.subr.mxu0 %v701
        %896 = vmatpush1.msra.mxu0 %v700
        %897 = vmatprep.subr.mxu0 %v705
        %898 = vmatpush1.msra.mxu0 %v704
        %899 = vmatprep.subr.mxu0 %v709
        %900 = vmatpush1.msra.mxu0 %v708
        %901 = vmatprep.subr.mxu0 %v713
        %902 = vmatpush1.msra.mxu0 %v712
        %903 = vmatprep.subr.mxu0 %v717
        %904 = vmatpush1.msra.mxu0 %v716
        %905 = vmatprep.subr.mxu0 %v721
        %906 = vmatpush1.msra.mxu0 %v720
        %907 = vmatprep.subr.mxu0 %v725
        %908 = vmatpush1.msra.mxu0 %v724
        %909 = vmatprep.subr.mxu0 %v729
        %910 = vmatpush1.msra.mxu0 %v728
        %911 = vmatprep.subr.mxu0 %v733
        %912 = vmatpush1.msra.mxu0 %v732
        %913 = vmatprep.subr.mxu0 %v737
        %914 = vmatpush1.msra.mxu0 %v736
        %915 = vmatprep.subr.mxu0 %v741
        %916 = vmatpush1.msra.mxu0 %v740
        %917 = vmatprep.subr.mxu0 %v745
        %918 = vmatpush1.msra.mxu0 %v744
        %919 = vmatprep.subr.mxu0 %v749
        %920 = vmatpush1.msra.mxu0 %v748
        %921 = vmatprep.subr.mxu0 %v753
        %922 = vmatpush1.msra.mxu0 %v752
        %923 = vmatprep.subr.mxu0 %v757
        %924 = vmatpush1.msra.mxu0 %v756
        %925 = vmatprep.subr.mxu0 %v761
        %926 = vmatpush1.msra.mxu0 %v760
        %927 = vmatprep.subr.mxu0 %v765
        %928 = vmatpush1.msra.mxu0 %v764
        %929 = vmatprep.subr.mxu0 %v769
        %930 = vmatpush1.msra.mxu0 %v768
        %931 = vmatprep.subr.mxu0 %v773
        %932 = vmatpush1.msra.mxu0 %v772
        %933 = vmatprep.subr.mxu0 %v777
        %934 = vmatpush1.msra.mxu0 %v776
        %935 = vmatprep.mubr.f32.mxu0 %v583
        %936 = vmatmul.mubr.f32.gmra.mrb[0].mxu0 %v582
        %v937 = vpop.f32.mrb[0].mxu0
        %v938 = vadd.f32 %v791, %v937
        %v939 = vpop.f32.mrb[0].mxu0
        %v940 = vadd.f32 %v795, %v939
        %941 = vdwg.mxu0
        %942 = vmatprep.subr.mxu0 %v587
        %943 = vmatpush1.msra.mxu0 %v586
        %944 = vmatprep.subr.mxu0 %v589
        %945 = vmatpush1.msra.mxu0 %v588
        %946 = vmatprep.subr.mxu0 %v591
        %947 = vmatpush1.msra.mxu0 %v590
        %948 = vmatprep.subr.mxu0 %v593
        %949 = vmatpush1.msra.mxu0 %v592
        %950 = vmatprep.subr.mxu0 %v595
        %951 = vmatpush1.msra.mxu0 %v594
        %952 = vmatprep.subr.mxu0 %v597
        %953 = vmatpush1.msra.mxu0 %v596
        %954 = vmatprep.subr.mxu0 %v599
        %955 = vmatpush1.msra.mxu0 %v598
        %956 = vmatprep.subr.mxu0 %v601
        %957 = vmatpush1.msra.mxu0 %v600
        %958 = vmatprep.subr.mxu0 %v603
        %959 = vmatpush1.msra.mxu0 %v602
        %960 = vmatprep.subr.mxu0 %v605
        %961 = vmatpush1.msra.mxu0 %v604
        %962 = vmatprep.subr.mxu0 %v607
        %963 = vmatpush1.msra.mxu0 %v606
        %964 = vmatprep.subr.mxu0 %v609
        %965 = vmatpush1.msra.mxu0 %v608
        %966 = vmatprep.subr.mxu0 %v611
        %967 = vmatpush1.msra.mxu0 %v610
        %968 = vmatprep.subr.mxu0 %v613
        %969 = vmatpush1.msra.mxu0 %v612
        %970 = vmatprep.subr.mxu0 %v615
        %971 = vmatpush1.msra.mxu0 %v614
        %972 = vmatprep.subr.mxu0 %v617
        %973 = vmatpush1.msra.mxu0 %v616
        %974 = vmatprep.subr.mxu0 %v619
        %975 = vmatpush1.msra.mxu0 %v618
        %976 = vmatprep.subr.mxu0 %v621
        %977 = vmatpush1.msra.mxu0 %v620
        %978 = vmatprep.subr.mxu0 %v623
        %979 = vmatpush1.msra.mxu0 %v622
        %980 = vmatprep.subr.mxu0 %v625
        %981 = vmatpush1.msra.mxu0 %v624
        %982 = vmatprep.subr.mxu0 %v627
        %983 = vmatpush1.msra.mxu0 %v626
        %984 = vmatprep.subr.mxu0 %v629
        %985 = vmatpush1.msra.mxu0 %v628
        %986 = vmatprep.subr.mxu0 %v631
        %987 = vmatpush1.msra.mxu0 %v630
        %988 = vmatprep.subr.mxu0 %v633
        %989 = vmatpush1.msra.mxu0 %v632
        %990 = vmatprep.subr.mxu0 %v635
        %991 = vmatpush1.msra.mxu0 %v634
        %992 = vmatprep.subr.mxu0 %v637
        %993 = vmatpush1.msra.mxu0 %v636
        %994 = vmatprep.subr.mxu0 %v639
        %995 = vmatpush1.msra.mxu0 %v638
        %996 = vmatprep.subr.mxu0 %v641
        %997 = vmatpush1.msra.mxu0 %v640
        %998 = vmatprep.subr.mxu0 %v643
        %999 = vmatpush1.msra.mxu0 %v642
        %1000 = vmatprep.subr.mxu0 %v645
        %1001 = vmatpush1.msra.mxu0 %v644
        %1002 = vmatprep.subr.mxu0 %v647
        %1003 = vmatpush1.msra.mxu0 %v646
        %1004 = vmatprep.subr.mxu0 %v649
        %1005 = vmatpush1.msra.mxu0 %v648
        %1006 = vmatprep.mubr.f32.mxu0 %v869
        %1007 = vmatmul.mubr.f32.gmra.mrb[0].mxu0 %v867
        %v1008 = vpop.f32.mrb[0].mxu0
        %v1009 = vadd.f32 0.0, %v1008
        %v1010 = vpop.f32.mrb[0].mxu0
        %v1011 = vadd.f32 0.0, %v1010
        %1012 = vdwg.mxu0
        %v1013 = vsub.f32 %v867, %v1009
        %v1014 = vsub.f32 %v869, %v1011
        %v1015 = vmul.f32 %v1013, %v1013
        %v1016 = vmul.f32 %v1014, %v1014
        %1017 = vmatprep.subr.mxu0 %v587
        %1018 = vmatpush1.msra.mxu0 %v586
        %1019 = vmatprep.subr.mxu0 %v589
        %1020 = vmatpush1.msra.mxu0 %v588
        %1021 = vmatprep.subr.mxu0 %v591
        %1022 = vmatpush1.msra.mxu0 %v590
        %1023 = vmatprep.subr.mxu0 %v593
        %1024 = vmatpush1.msra.mxu0 %v592
        %1025 = vmatprep.subr.mxu0 %v595
        %1026 = vmatpush1.msra.mxu0 %v594
        %1027 = vmatprep.subr.mxu0 %v597
        %1028 = vmatpush1.msra.mxu0 %v596
        %1029 = vmatprep.subr.mxu0 %v599
        %1030 = vmatpush1.msra.mxu0 %v598
        %1031 = vmatprep.subr.mxu0 %v601
        %1032 = vmatpush1.msra.mxu0 %v600
        %1033 = vmatprep.subr.mxu0 %v603
        %1034 = vmatpush1.msra.mxu0 %v602
        %1035 = vmatprep.subr.mxu0 %v605
        %1036 = vmatpush1.msra.mxu0 %v604
        %1037 = vmatprep.subr.mxu0 %v607
        %1038 = vmatpush1.msra.mxu0 %v606
        %1039 = vmatprep.subr.mxu0 %v609
        %1040 = vmatpush1.msra.mxu0 %v608
        %1041 = vmatprep.subr.mxu0 %v611
        %1042 = vmatpush1.msra.mxu0 %v610
        %1043 = vmatprep.subr.mxu0 %v613
        %1044 = vmatpush1.msra.mxu0 %v612
        %1045 = vmatprep.subr.mxu0 %v615
        %1046 = vmatpush1.msra.mxu0 %v614
        %1047 = vmatprep.subr.mxu0 %v617
        %1048 = vmatpush1.msra.mxu0 %v616
        %1049 = vmatprep.subr.mxu0 %v619
        %1050 = vmatpush1.msra.mxu0 %v618
        %1051 = vmatprep.subr.mxu0 %v621
        %1052 = vmatpush1.msra.mxu0 %v620
        %1053 = vmatprep.subr.mxu0 %v623
        %1054 = vmatpush1.msra.mxu0 %v622
        %1055 = vmatprep.subr.mxu0 %v625
        %1056 = vmatpush1.msra.mxu0 %v624
        %1057 = vmatprep.subr.mxu0 %v627
        %1058 = vmatpush1.msra.mxu0 %v626
        %1059 = vmatprep.subr.mxu0 %v629
        %1060 = vmatpush1.msra.mxu0 %v628
        %1061 = vmatprep.subr.mxu0 %v631
        %1062 = vmatpush1.msra.mxu0 %v630
        %1063 = vmatprep.subr.mxu0 %v633
        %1064 = vmatpush1.msra.mxu0 %v632
        %1065 = vmatprep.subr.mxu0 %v635
        %1066 = vmatpush1.msra.mxu0 %v634
        %1067 = vmatprep.subr.mxu0 %v637
        %1068 = vmatpush1.msra.mxu0 %v636
        %1069 = vmatprep.subr.mxu0 %v639
        %1070 = vmatpush1.msra.mxu0 %v638
        %1071 = vmatprep.subr.mxu0 %v641
        %1072 = vmatpush1.msra.mxu0 %v640
        %1073 = vmatprep.subr.mxu0 %v643
        %1074 = vmatpush1.msra.mxu0 %v642
        %1075 = vmatprep.subr.mxu0 %v645
        %1076 = vmatpush1.msra.mxu0 %v644
        %1077 = vmatprep.subr.mxu0 %v647
        %1078 = vmatpush1.msra.mxu0 %v646
        %1079 = vmatprep.subr.mxu0 %v649
        %1080 = vmatpush1.msra.mxu0 %v648
        %1081 = vmatprep.mubr.f32.mxu0 %v1016
        %1082 = vmatmul.mubr.f32.gmra.mrb[0].mxu0 %v1015
        %v1083 = vpop.f32.mrb[0].mxu0
        %v1084 = vadd.f32 1e-05, %v1083
        %v1085 = vpop.f32.mrb[0].mxu0
        %v1086 = vadd.f32 1e-05, %v1085
        %1087 = vdwg.mxu0
        %v1088 = vrsqrt.pop %v1084
        %v1089 = vrsqrt.pop %v1086
        %v1090 = vmul.f32 %v1013, %v1088
        %v1091 = vmul.f32 %v1014, %v1089
        %vm1092 = vcmp.ge.f32.partialorder %v1090, 0.0
        %vm1093 = vcmp.ge.f32.partialorder %v1091, 0.0
        %v1094 = vstv %s584
        %v1095 = vmul.f32 %v1094, %v1090
        %v1096 = vmul.f32 %v1094, %v1091
        %v1097 = vsel %vm1092, %v1090, %v1095
        %v1098 = vsel %vm1093, %v1091, %v1096
        %v1099 = vld [vmem:[#allocation8] sm:$0xff]
        %v1100 = vld [vmem:[#allocation8 + $0x8] sm:$0xff]
        %v1101 = vld [vmem:[#allocation8 + $0x10] sm:$0xff]
        %v1102 = vld [vmem:[#allocation8 + $0x18] sm:$0xff]
        %v1103 = vld [vmem:[#allocation8 + $0x20] sm:$0xff]
        %v1104 = vld [vmem:[#allocation8 + $0x28] sm:$0xff]
        %v1105 = vld [vmem:[#allocation8 + $0x30] sm:$0xff]
        %v1106 = vld [vmem:[#allocation8 + $0x38] sm:$0xff]
        %v1107 = vld [vmem:[#allocation8 + $0x40] sm:$0xff]
        %v1108 = vld [vmem:[#allocation8 + $0x48] sm:$0xff]
        %v1109 = vld [vmem:[#allocation8 + $0x50] sm:$0xff]
        %v1110 = vld [vmem:[#allocation8 + $0x58] sm:$0xff]
        %v1111 = vld [vmem:[#allocation8 + $0x60] sm:$0xff]
        %v1112 = vld [vmem:[#allocation8 + $0x68] sm:$0xff]
        %v1113 = vld [vmem:[#allocation8 + $0x70] sm:$0xff]
        %v1114 = vld [vmem:[#allocation8 + $0x78] sm:$0xff]
        %v1115 = vld [vmem:[#allocation8 + $0x80] sm:$0xff]
        %v1116 = vld [vmem:[#allocation8 + $0x88] sm:$0xff]
        %v1117 = vld [vmem:[#allocation8 + $0x90] sm:$0xff]
        %v1118 = vld [vmem:[#allocation8 + $0x98] sm:$0xff]
        %v1119 = vld [vmem:[#allocation8 + $0xa0] sm:$0xff]
        %v1120 = vld [vmem:[#allocation8 + $0xa8] sm:$0xff]
        %v1121 = vld [vmem:[#allocation8 + $0xb0] sm:$0xff]
        %v1122 = vld [vmem:[#allocation8 + $0xb8] sm:$0xff]
        %v1123 = vld [vmem:[#allocation8 + $0xc0] sm:$0xff]
        %v1124 = vld [vmem:[#allocation8 + $0xc8] sm:$0xff]
        %v1125 = vld [vmem:[#allocation8 + $0xd0] sm:$0xff]
        %v1126 = vld [vmem:[#allocation8 + $0xd8] sm:$0xff]
        %v1127 = vld [vmem:[#allocation8 + $0xe0] sm:$0xff]
        %v1128 = vld [vmem:[#allocation8 + $0xe8] sm:$0xff]
        %v1129 = vld [vmem:[#allocation8 + $0xf0] sm:$0xff]
        %v1130 = vld [vmem:[#allocation8 + $0xf8] sm:$0xff]
        %v1131 = vld [vmem:[#allocation8 + $0x100] sm:$0xff]
        %v1132 = vld [vmem:[#allocation8 + $0x108] sm:$0xff]
        %v1133 = vld [vmem:[#allocation8 + $0x110] sm:$0xff]
        %v1134 = vld [vmem:[#allocation8 + $0x118] sm:$0xff]
        %v1135 = vld [vmem:[#allocation8 + $0x120] sm:$0xff]
        %v1136 = vld [vmem:[#allocation8 + $0x128] sm:$0xff]
        %v1137 = vld [vmem:[#allocation8 + $0x130] sm:$0xff]
        %v1138 = vld [vmem:[#allocation8 + $0x138] sm:$0xff]
        %v1139 = vld [vmem:[#allocation8 + $0x140] sm:$0xff]
        %v1140 = vld [vmem:[#allocation8 + $0x148] sm:$0xff]
        %v1141 = vld [vmem:[#allocation8 + $0x150] sm:$0xff]
        %v1142 = vld [vmem:[#allocation8 + $0x158] sm:$0xff]
        %v1143 = vld [vmem:[#allocation8 + $0x160] sm:$0xff]
        %v1144 = vld [vmem:[#allocation8 + $0x168] sm:$0xff]
        %v1145 = vld [vmem:[#allocation8 + $0x170] sm:$0xff]
        %v1146 = vld [vmem:[#allocation8 + $0x178] sm:$0xff]
        %v1147 = vld [vmem:[#allocation8 + $0x180] sm:$0xff]
        %v1148 = vld [vmem:[#allocation8 + $0x188] sm:$0xff]
        %v1149 = vld [vmem:[#allocation8 + $0x190] sm:$0xff]
        %v1150 = vld [vmem:[#allocation8 + $0x198] sm:$0xff]
        %v1151 = vld [vmem:[#allocation8 + $0x1a0] sm:$0xff]
        %v1152 = vld [vmem:[#allocation8 + $0x1a8] sm:$0xff]
        %v1153 = vld [vmem:[#allocation8 + $0x1b0] sm:$0xff]
        %v1154 = vld [vmem:[#allocation8 + $0x1b8] sm:$0xff]
        %v1155 = vld [vmem:[#allocation8 + $0x1c0] sm:$0xff]
        %v1156 = vld [vmem:[#allocation8 + $0x1c8] sm:$0xff]
        %v1157 = vld [vmem:[#allocation8 + $0x1d0] sm:$0xff]
        %v1158 = vld [vmem:[#allocation8 + $0x1d8] sm:$0xff]
        %v1159 = vld [vmem:[#allocation8 + $0x1e0] sm:$0xff]
        %v1160 = vld [vmem:[#allocation8 + $0x1e8] sm:$0xff]
        %v1161 = vld [vmem:[#allocation8 + $0x1f0] sm:$0xff]
        %v1162 = vld [vmem:[#allocation8 + $0x1f8] sm:$0xff]
        %v1163 = vld [vmem:[%s6] sm:$0x3]
        %v1165 = vlaneseq
        %v1166 = vshrl.u32 %v1165, 7
        %v1167 = vsub.s32 0, %v1166
        %v1168 = vrot.slane %v1163, %v1167
        %v1169 = vlaneseq
        %v1170 = vshrl.u32 %v1169, 7
        %v1171 = vsub.s32 1, %v1170
        %v1172 = vrot.slane %v1163, %v1171
        %1175 = vmatprep.subr.mxu0 %v1100
        %1176 = vmatpush1.msra.mxu0 %v1099
        %1177 = vmatprep.subr.mxu0 %v1102
        %1178 = vmatpush1.msra.mxu0 %v1101
        %1179 = vmatprep.subr.mxu0 %v1104
        %1180 = vmatpush1.msra.mxu0 %v1103
        %1181 = vmatprep.subr.mxu0 %v1106
        %1182 = vmatpush1.msra.mxu0 %v1105
        %1183 = vmatprep.subr.mxu0 %v1108
        %1184 = vmatpush1.msra.mxu0 %v1107
        %1185 = vmatprep.subr.mxu0 %v1110
        %1186 = vmatpush1.msra.mxu0 %v1109
        %1187 = vmatprep.subr.mxu0 %v1112
        %1188 = vmatpush1.msra.mxu0 %v1111
        %1189 = vmatprep.subr.mxu0 %v1114
        %1190 = vmatpush1.msra.mxu0 %v1113
        %1191 = vmatprep.subr.mxu0 %v1116
        %1192 = vmatpush1.msra.mxu0 %v1115
        %1193 = vmatprep.subr.mxu0 %v1118
        %1194 = vmatpush1.msra.mxu0 %v1117
        %1195 = vmatprep.subr.mxu0 %v1120
        %1196 = vmatpush1.msra.mxu0 %v1119
        %1197 = vmatprep.subr.mxu0 %v1122
        %1198 = vmatpush1.msra.mxu0 %v1121
        %1199 = vmatprep.subr.mxu0 %v1124
        %1200 = vmatpush1.msra.mxu0 %v1123
        %1201 = vmatprep.subr.mxu0 %v1126
        %1202 = vmatpush1.msra.mxu0 %v1125
        %1203 = vmatprep.subr.mxu0 %v1128
        %1204 = vmatpush1.msra.mxu0 %v1127
        %1205 = vmatprep.subr.mxu0 %v1130
        %1206 = vmatpush1.msra.mxu0 %v1129
        %1207 = vmatprep.subr.mxu0 %v1132
        %1208 = vmatpush1.msra.mxu0 %v1131
        %1209 = vmatprep.subr.mxu0 %v1134
        %1210 = vmatpush1.msra.mxu0 %v1133
        %1211 = vmatprep.subr.mxu0 %v1136
        %1212 = vmatpush1.msra.mxu0 %v1135
        %1213 = vmatprep.subr.mxu0 %v1138
        %1214 = vmatpush1.msra.mxu0 %v1137
        %1215 = vmatprep.subr.mxu0 %v1140
        %1216 = vmatpush1.msra.mxu0 %v1139
        %1217 = vmatprep.subr.mxu0 %v1142
        %1218 = vmatpush1.msra.mxu0 %v1141
        %1219 = vmatprep.subr.mxu0 %v1144
        %1220 = vmatpush1.msra.mxu0 %v1143
        %1221 = vmatprep.subr.mxu0 %v1146
        %1222 = vmatpush1.msra.mxu0 %v1145
        %1223 = vmatprep.subr.mxu0 %v1148
        %1224 = vmatpush1.msra.mxu0 %v1147
        %1225 = vmatprep.subr.mxu0 %v1150
        %1226 = vmatpush1.msra.mxu0 %v1149
        %1227 = vmatprep.subr.mxu0 %v1152
        %1228 = vmatpush1.msra.mxu0 %v1151
        %1229 = vmatprep.subr.mxu0 %v1154
        %1230 = vmatpush1.msra.mxu0 %v1153
        %1231 = vmatprep.subr.mxu0 %v1156
        %1232 = vmatpush1.msra.mxu0 %v1155
        %1233 = vmatprep.subr.mxu0 %v1158
        %1234 = vmatpush1.msra.mxu0 %v1157
        %1235 = vmatprep.subr.mxu0 %v1160
        %1236 = vmatpush1.msra.mxu0 %v1159
        %1237 = vmatprep.subr.mxu0 %v1162
        %1238 = vmatpush1.msra.mxu0 %v1161
        %1239 = vmatprep.mubr.f32.mxu0 %v1098
        %1240 = vmatmul.mubr.f32.gmra.mrb[0].mxu0 %v1097
        %v1241 = vpop.f32.mrb[0].mxu0
        %v1242 = vadd.f32 %v1168, %v1241
        %v1243 = vpop.f32.mrb[0].mxu0
        %v1244 = vadd.f32 %v1172, %v1243
        %1245 = vdwg.mxu0
        %1246 = vmatprep.subr.mxu0 %v587
        %1247 = vmatpush1.msra.mxu0 %v586
        %1248 = vmatprep.subr.mxu0 %v589
        %1249 = vmatpush1.msra.mxu0 %v588
        %1250 = vmatprep.subr.mxu0 %v591
        %1251 = vmatpush1.msra.mxu0 %v590
        %1252 = vmatprep.subr.mxu0 %v593
        %1253 = vmatpush1.msra.mxu0 %v592
        %1254 = vmatprep.subr.mxu0 %v595
        %1255 = vmatpush1.msra.mxu0 %v594
        %1256 = vmatprep.subr.mxu0 %v597
        %1257 = vmatpush1.msra.mxu0 %v596
        %1258 = vmatprep.subr.mxu0 %v599
        %1259 = vmatpush1.msra.mxu0 %v598
        %1260 = vmatprep.subr.mxu0 %v601
        %1261 = vmatpush1.msra.mxu0 %v600
        %1262 = vmatprep.subr.mxu0 %v603
        %1263 = vmatpush1.msra.mxu0 %v602
        %1264 = vmatprep.subr.mxu0 %v605
        %1265 = vmatpush1.msra.mxu0 %v604
        %1266 = vmatprep.subr.mxu0 %v607
        %1267 = vmatpush1.msra.mxu0 %v606
        %1268 = vmatprep.subr.mxu0 %v609
        %1269 = vmatpush1.msra.mxu0 %v608
        %1270 = vmatprep.subr.mxu0 %v611
        %1271 = vmatpush1.msra.mxu0 %v610
        %1272 = vmatprep.subr.mxu0 %v613
        %1273 = vmatpush1.msra.mxu0 %v612
        %1274 = vmatprep.subr.mxu0 %v615
        %1275 = vmatpush1.msra.mxu0 %v614
        %1276 = vmatprep.subr.mxu0 %v617
        %1277 = vmatpush1.msra.mxu0 %v616
        %1278 = vmatprep.subr.mxu0 %v619
        %1279 = vmatpush1.msra.mxu0 %v618
        %1280 = vmatprep.subr.mxu0 %v621
        %1281 = vmatpush1.msra.mxu0 %v620
        %1282 = vmatprep.subr.mxu0 %v623
        %1283 = vmatpush1.msra.mxu0 %v622
        %1284 = vmatprep.subr.mxu0 %v625
        %1285 = vmatpush1.msra.mxu0 %v624
        %1286 = vmatprep.subr.mxu0 %v627
        %1287 = vmatpush1.msra.mxu0 %v626
        %1288 = vmatprep.subr.mxu0 %v629
        %1289 = vmatpush1.msra.mxu0 %v628
        %1290 = vmatprep.subr.mxu0 %v631
        %1291 = vmatpush1.msra.mxu0 %v630
        %1292 = vmatprep.subr.mxu0 %v633
        %1293 = vmatpush1.msra.mxu0 %v632
        %1294 = vmatprep.subr.mxu0 %v635
        %1295 = vmatpush1.msra.mxu0 %v634
        %1296 = vmatprep.subr.mxu0 %v637
        %1297 = vmatpush1.msra.mxu0 %v636
        %1298 = vmatprep.subr.mxu0 %v639
        %1299 = vmatpush1.msra.mxu0 %v638
        %1300 = vmatprep.subr.mxu0 %v641
        %1301 = vmatpush1.msra.mxu0 %v640
        %1302 = vmatprep.subr.mxu0 %v643
        %1303 = vmatpush1.msra.mxu0 %v642
        %1304 = vmatprep.subr.mxu0 %v645
        %1305 = vmatpush1.msra.mxu0 %v644
        %1306 = vmatprep.subr.mxu0 %v647
        %1307 = vmatpush1.msra.mxu0 %v646
        %1308 = vmatprep.subr.mxu0 %v649
        %1309 = vmatpush1.msra.mxu0 %v648
        %1310 = vmatprep.mubr.f32.mxu0 %v1244
        %1311 = vmatmul.mubr.f32.gmra.mrb[0].mxu0 %v1242
        %v1312 = vpop.f32.mrb[0].mxu0
        %v1313 = vadd.f32 0.0, %v1312
        %v1314 = vpop.f32.mrb[0].mxu0
        %v1315 = vadd.f32 0.0, %v1314
        %1316 = vdwg.mxu0
        %v1317 = vsub.f32 %v1242, %v1313
        %v1318 = vsub.f32 %v1244, %v1315
        %v1319 = vmul.f32 %v1317, %v1317
        %v1320 = vmul.f32 %v1318, %v1318
        %1321 = vmatprep.subr.mxu0 %v587
        %1322 = vmatpush1.msra.mxu0 %v586
        %1323 = vmatprep.subr.mxu0 %v589
        %1324 = vmatpush1.msra.mxu0 %v588
        %1325 = vmatprep.subr.mxu0 %v591
        %1326 = vmatpush1.msra.mxu0 %v590
        %1327 = vmatprep.subr.mxu0 %v593
        %1328 = vmatpush1.msra.mxu0 %v592
        %1329 = vmatprep.subr.mxu0 %v595
        %1330 = vmatpush1.msra.mxu0 %v594
        %1331 = vmatprep.subr.mxu0 %v597
        %1332 = vmatpush1.msra.mxu0 %v596
        %1333 = vmatprep.subr.mxu0 %v599
        %1334 = vmatpush1.msra.mxu0 %v598
        %1335 = vmatprep.subr.mxu0 %v601
        %1336 = vmatpush1.msra.mxu0 %v600
        %1337 = vmatprep.subr.mxu0 %v603
        %1338 = vmatpush1.msra.mxu0 %v602
        %1339 = vmatprep.subr.mxu0 %v605
        %1340 = vmatpush1.msra.mxu0 %v604
        %1341 = vmatprep.subr.mxu0 %v607
        %1342 = vmatpush1.msra.mxu0 %v606
        %1343 = vmatprep.subr.mxu0 %v609
        %1344 = vmatpush1.msra.mxu0 %v608
        %1345 = vmatprep.subr.mxu0 %v611
        %1346 = vmatpush1.msra.mxu0 %v610
        %1347 = vmatprep.subr.mxu0 %v613
        %1348 = vmatpush1.msra.mxu0 %v612
        %1349 = vmatprep.subr.mxu0 %v615
        %1350 = vmatpush1.msra.mxu0 %v614
        %1351 = vmatprep.subr.mxu0 %v617
        %1352 = vmatpush1.msra.mxu0 %v616
        %1353 = vmatprep.subr.mxu0 %v619
        %1354 = vmatpush1.msra.mxu0 %v618
        %1355 = vmatprep.subr.mxu0 %v621
        %1356 = vmatpush1.msra.mxu0 %v620
        %1357 = vmatprep.subr.mxu0 %v623
        %1358 = vmatpush1.msra.mxu0 %v622
        %1359 = vmatprep.subr.mxu0 %v625
        %1360 = vmatpush1.msra.mxu0 %v624
        %1361 = vmatprep.subr.mxu0 %v627
        %1362 = vmatpush1.msra.mxu0 %v626
        %1363 = vmatprep.subr.mxu0 %v629
        %1364 = vmatpush1.msra.mxu0 %v628
        %1365 = vmatprep.subr.mxu0 %v631
        %1366 = vmatpush1.msra.mxu0 %v630
        %1367 = vmatprep.subr.mxu0 %v633
        %1368 = vmatpush1.msra.mxu0 %v632
        %1369 = vmatprep.subr.mxu0 %v635
        %1370 = vmatpush1.msra.mxu0 %v634
        %1371 = vmatprep.subr.mxu0 %v637
        %1372 = vmatpush1.msra.mxu0 %v636
        %1373 = vmatprep.subr.mxu0 %v639
        %1374 = vmatpush1.msra.mxu0 %v638
        %1375 = vmatprep.subr.mxu0 %v641
        %1376 = vmatpush1.msra.mxu0 %v640
        %1377 = vmatprep.subr.mxu0 %v643
        %1378 = vmatpush1.msra.mxu0 %v642
        %1379 = vmatprep.subr.mxu0 %v645
        %1380 = vmatpush1.msra.mxu0 %v644
        %1381 = vmatprep.subr.mxu0 %v647
        %1382 = vmatpush1.msra.mxu0 %v646
        %1383 = vmatprep.subr.mxu0 %v649
        %1384 = vmatpush1.msra.mxu0 %v648
        %1385 = vmatprep.mubr.f32.mxu0 %v1320
        %1386 = vmatmul.mubr.f32.gmra.mrb[0].mxu0 %v1319
        %v1387 = vpop.f32.mrb[0].mxu0
        %v1388 = vadd.f32 1e-05, %v1387
        %v1389 = vpop.f32.mrb[0].mxu0
        %v1390 = vadd.f32 1e-05, %v1389
        %1391 = vdwg.mxu0
        %v1392 = vrsqrt.pop %v1388
        %v1393 = vrsqrt.pop %v1390
        %v1394 = vmul.f32 %v1317, %v1392
        %v1395 = vmul.f32 %v1318, %v1393
        %vm1396 = vcmp.ge.f32.partialorder %v1394, 0.0
        %vm1397 = vcmp.ge.f32.partialorder %v1395, 0.0
        %v1398 = vstv %s585
        %v1399 = vmul.f32 %v1398, %v1394
        %v1400 = vmul.f32 %v1398, %v1395
        %v1401 = vsel %vm1396, %v1394, %v1399
        %v1402 = vsel %vm1397, %v1395, %v1400
        %v1403 = vadd.f32 %v1401, %v938
        %v1404 = vadd.f32 %v1402, %v940
        %s1405 = sld [smem:[#allocation2 + $0x2]]
        %v1406 = vld [vmem:[#allocation11] sm:$0xff]
        %v1407 = vld [vmem:[#allocation11 + $0x8] sm:$0xff]
        %v1408 = vld [vmem:[#allocation11 + $0x10] sm:$0xff]
        %v1409 = vld [vmem:[#allocation11 + $0x18] sm:$0xff]
        %v1410 = vld [vmem:[#allocation11 + $0x20] sm:$0xff]
        %v1411 = vld [vmem:[#allocation11 + $0x28] sm:$0xff]
        %v1412 = vld [vmem:[#allocation11 + $0x30] sm:$0xff]
        %v1413 = vld [vmem:[#allocation11 + $0x38] sm:$0xff]
        %v1414 = vld [vmem:[#allocation11 + $0x40] sm:$0xff]
        %v1415 = vld [vmem:[#allocation11 + $0x48] sm:$0xff]
        %v1416 = vld [vmem:[#allocation11 + $0x50] sm:$0xff]
        %v1417 = vld [vmem:[#allocation11 + $0x58] sm:$0xff]
        %v1418 = vld [vmem:[#allocation11 + $0x60] sm:$0xff]
        %v1419 = vld [vmem:[#allocation11 + $0x68] sm:$0xff]
        %v1420 = vld [vmem:[#allocation11 + $0x70] sm:$0xff]
        %v1421 = vld [vmem:[#allocation11 + $0x78] sm:$0xff]
        %v1422 = vld [vmem:[#allocation11 + $0x80] sm:$0xff]
        %v1423 = vld [vmem:[#allocation11 + $0x88] sm:$0xff]
        %v1424 = vld [vmem:[#allocation11 + $0x90] sm:$0xff]
        %v1425 = vld [vmem:[#allocation11 + $0x98] sm:$0xff]
        %v1426 = vld [vmem:[#allocation11 + $0xa0] sm:$0xff]
        %v1427 = vld [vmem:[#allocation11 + $0xa8] sm:$0xff]
        %v1428 = vld [vmem:[#allocation11 + $0xb0] sm:$0xff]
        %v1429 = vld [vmem:[#allocation11 + $0xb8] sm:$0xff]
        %v1430 = vld [vmem:[#allocation11 + $0xc0] sm:$0xff]
        %v1431 = vld [vmem:[#allocation11 + $0xc8] sm:$0xff]
        %v1432 = vld [vmem:[#allocation11 + $0xd0] sm:$0xff]
        %v1433 = vld [vmem:[#allocation11 + $0xd8] sm:$0xff]
        %v1434 = vld [vmem:[#allocation11 + $0xe0] sm:$0xff]
        %v1435 = vld [vmem:[#allocation11 + $0xe8] sm:$0xff]
        %v1436 = vld [vmem:[#allocation11 + $0xf0] sm:$0xff]
        %v1437 = vld [vmem:[#allocation11 + $0xf8] sm:$0xff]
        %v1438 = vld [vmem:[#allocation11 + $0x100] sm:$0xff]
        %v1439 = vld [vmem:[#allocation11 + $0x108] sm:$0xff]
        %v1440 = vld [vmem:[#allocation11 + $0x110] sm:$0xff]
        %v1441 = vld [vmem:[#allocation11 + $0x118] sm:$0xff]
        %v1442 = vld [vmem:[#allocation11 + $0x120] sm:$0xff]
        %v1443 = vld [vmem:[#allocation11 + $0x128] sm:$0xff]
        %v1444 = vld [vmem:[#allocation11 + $0x130] sm:$0xff]
        %v1445 = vld [vmem:[#allocation11 + $0x138] sm:$0xff]
        %v1446 = vld [vmem:[#allocation11 + $0x140] sm:$0xff]
        %v1447 = vld [vmem:[#allocation11 + $0x148] sm:$0xff]
        %v1448 = vld [vmem:[#allocation11 + $0x150] sm:$0xff]
        %v1449 = vld [vmem:[#allocation11 + $0x158] sm:$0xff]
        %v1450 = vld [vmem:[#allocation11 + $0x160] sm:$0xff]
        %v1451 = vld [vmem:[#allocation11 + $0x168] sm:$0xff]
        %v1452 = vld [vmem:[#allocation11 + $0x170] sm:$0xff]
        %v1453 = vld [vmem:[#allocation11 + $0x178] sm:$0xff]
        %v1454 = vld [vmem:[#allocation11 + $0x180] sm:$0xff]
        %v1455 = vld [vmem:[#allocation11 + $0x188] sm:$0xff]
        %v1456 = vld [vmem:[#allocation11 + $0x190] sm:$0xff]
        %v1457 = vld [vmem:[#allocation11 + $0x198] sm:$0xff]
        %v1458 = vld [vmem:[#allocation11 + $0x1a0] sm:$0xff]
        %v1459 = vld [vmem:[#allocation11 + $0x1a8] sm:$0xff]
        %v1460 = vld [vmem:[#allocation11 + $0x1b0] sm:$0xff]
        %v1461 = vld [vmem:[#allocation11 + $0x1b8] sm:$0xff]
        %v1462 = vld [vmem:[#allocation11 + $0x1c0] sm:$0xff]
        %v1463 = vld [vmem:[#allocation11 + $0x1c8] sm:$0xff]
        %v1464 = vld [vmem:[#allocation11 + $0x1d0] sm:$0xff]
        %v1465 = vld [vmem:[#allocation11 + $0x1d8] sm:$0xff]
        %v1466 = vld [vmem:[#allocation11 + $0x1e0] sm:$0xff]
        %v1467 = vld [vmem:[#allocation11 + $0x1e8] sm:$0xff]
        %v1468 = vld [vmem:[#allocation11 + $0x1f0] sm:$0xff]
        %v1469 = vld [vmem:[#allocation11 + $0x1f8] sm:$0xff]
        %v1470 = vld [vmem:[#allocation11 + $0x200] sm:$0xff]
        %v1471 = vld [vmem:[#allocation11 + $0x208] sm:$0xff]
        %v1472 = vld [vmem:[#allocation11 + $0x210] sm:$0xff]
        %v1473 = vld [vmem:[#allocation11 + $0x218] sm:$0xff]
        %v1474 = vld [vmem:[#allocation11 + $0x220] sm:$0xff]
        %v1475 = vld [vmem:[#allocation11 + $0x228] sm:$0xff]
        %v1476 = vld [vmem:[#allocation11 + $0x230] sm:$0xff]
        %v1477 = vld [vmem:[#allocation11 + $0x238] sm:$0xff]
        %v1478 = vld [vmem:[#allocation11 + $0x240] sm:$0xff]
        %v1479 = vld [vmem:[#allocation11 + $0x248] sm:$0xff]
        %v1480 = vld [vmem:[#allocation11 + $0x250] sm:$0xff]
        %v1481 = vld [vmem:[#allocation11 + $0x258] sm:$0xff]
        %v1482 = vld [vmem:[#allocation11 + $0x260] sm:$0xff]
        %v1483 = vld [vmem:[#allocation11 + $0x268] sm:$0xff]
        %v1484 = vld [vmem:[#allocation11 + $0x270] sm:$0xff]
        %v1485 = vld [vmem:[#allocation11 + $0x278] sm:$0xff]
        %v1486 = vld [vmem:[#allocation11 + $0x280] sm:$0xff]
        %v1487 = vld [vmem:[#allocation11 + $0x288] sm:$0xff]
        %v1488 = vld [vmem:[#allocation11 + $0x290] sm:$0xff]
        %v1489 = vld [vmem:[#allocation11 + $0x298] sm:$0xff]
        %v1490 = vld [vmem:[#allocation11 + $0x2a0] sm:$0xff]
        %v1491 = vld [vmem:[#allocation11 + $0x2a8] sm:$0xff]
        %v1492 = vld [vmem:[#allocation11 + $0x2b0] sm:$0xff]
        %v1493 = vld [vmem:[#allocation11 + $0x2b8] sm:$0xff]
        %v1494 = vld [vmem:[#allocation11 + $0x2c0] sm:$0xff]
        %v1495 = vld [vmem:[#allocation11 + $0x2c8] sm:$0xff]
        %v1496 = vld [vmem:[#allocation11 + $0x2d0] sm:$0xff]
        %v1497 = vld [vmem:[#allocation11 + $0x2d8] sm:$0xff]
        %v1498 = vld [vmem:[#allocation11 + $0x2e0] sm:$0xff]
        %v1499 = vld [vmem:[#allocation11 + $0x2e8] sm:$0xff]
        %v1500 = vld [vmem:[#allocation11 + $0x2f0] sm:$0xff]
        %v1501 = vld [vmem:[#allocation11 + $0x2f8] sm:$0xff]
        %v1502 = vld [vmem:[#allocation11 + $0x300] sm:$0xff]
        %v1503 = vld [vmem:[#allocation11 + $0x308] sm:$0xff]
        %v1504 = vld [vmem:[#allocation11 + $0x310] sm:$0xff]
        %v1505 = vld [vmem:[#allocation11 + $0x318] sm:$0xff]
        %v1506 = vld [vmem:[#allocation11 + $0x320] sm:$0xff]
        %v1507 = vld [vmem:[#allocation11 + $0x328] sm:$0xff]
        %v1508 = vld [vmem:[#allocation11 + $0x330] sm:$0xff]
        %v1509 = vld [vmem:[#allocation11 + $0x338] sm:$0xff]
        %v1510 = vld [vmem:[#allocation11 + $0x340] sm:$0xff]
        %v1511 = vld [vmem:[#allocation11 + $0x348] sm:$0xff]
        %v1512 = vld [vmem:[#allocation11 + $0x350] sm:$0xff]
        %v1513 = vld [vmem:[#allocation11 + $0x358] sm:$0xff]
        %v1514 = vld [vmem:[#allocation11 + $0x360] sm:$0xff]
        %v1515 = vld [vmem:[#allocation11 + $0x368] sm:$0xff]
        %v1516 = vld [vmem:[#allocation11 + $0x370] sm:$0xff]
        %v1517 = vld [vmem:[#allocation11 + $0x378] sm:$0xff]
        %v1518 = vld [vmem:[#allocation11 + $0x380] sm:$0xff]
        %v1519 = vld [vmem:[#allocation11 + $0x388] sm:$0xff]
        %v1520 = vld [vmem:[#allocation11 + $0x390] sm:$0xff]
        %v1521 = vld [vmem:[#allocation11 + $0x398] sm:$0xff]
        %v1522 = vld [vmem:[#allocation11 + $0x3a0] sm:$0xff]
        %v1523 = vld [vmem:[#allocation11 + $0x3a8] sm:$0xff]
        %v1524 = vld [vmem:[#allocation11 + $0x3b0] sm:$0xff]
        %v1525 = vld [vmem:[#allocation11 + $0x3b8] sm:$0xff]
        %v1526 = vld [vmem:[#allocation11 + $0x3c0] sm:$0xff]
        %v1527 = vld [vmem:[#allocation11 + $0x3c8] sm:$0xff]
        %v1528 = vld [vmem:[#allocation11 + $0x3d0] sm:$0xff]
        %v1529 = vld [vmem:[#allocation11 + $0x3d8] sm:$0xff]
        %v1530 = vld [vmem:[#allocation11 + $0x3e0] sm:$0xff]
        %v1531 = vld [vmem:[#allocation11 + $0x3e8] sm:$0xff]
        %v1532 = vld [vmem:[#allocation11 + $0x3f0] sm:$0xff]
        %v1533 = vld [vmem:[#allocation11 + $0x3f8] sm:$0xff]
        %v1534 = vld [vmem:[#allocation11 + $0x400] sm:$0xff]
        %v1535 = vld [vmem:[#allocation11 + $0x408] sm:$0xff]
        %v1536 = vld [vmem:[#allocation11 + $0x410] sm:$0xff]
        %v1537 = vld [vmem:[#allocation11 + $0x418] sm:$0xff]
        %v1538 = vld [vmem:[#allocation11 + $0x420] sm:$0xff]
        %v1539 = vld [vmem:[#allocation11 + $0x428] sm:$0xff]
        %v1540 = vld [vmem:[#allocation11 + $0x430] sm:$0xff]
        %v1541 = vld [vmem:[#allocation11 + $0x438] sm:$0xff]
        %v1542 = vld [vmem:[#allocation11 + $0x440] sm:$0xff]
        %v1543 = vld [vmem:[#allocation11 + $0x448] sm:$0xff]
        %v1544 = vld [vmem:[#allocation11 + $0x450] sm:$0xff]
        %v1545 = vld [vmem:[#allocation11 + $0x458] sm:$0xff]
        %v1546 = vld [vmem:[#allocation11 + $0x460] sm:$0xff]
        %v1547 = vld [vmem:[#allocation11 + $0x468] sm:$0xff]
        %v1548 = vld [vmem:[#allocation11 + $0x470] sm:$0xff]
        %v1549 = vld [vmem:[#allocation11 + $0x478] sm:$0xff]
        %v1550 = vld [vmem:[#allocation11 + $0x480] sm:$0xff]
        %v1551 = vld [vmem:[#allocation11 + $0x488] sm:$0xff]
        %v1552 = vld [vmem:[#allocation11 + $0x490] sm:$0xff]
        %v1553 = vld [vmem:[#allocation11 + $0x498] sm:$0xff]
        %v1554 = vld [vmem:[#allocation11 + $0x4a0] sm:$0xff]
        %v1555 = vld [vmem:[#allocation11 + $0x4a8] sm:$0xff]
        %v1556 = vld [vmem:[#allocation11 + $0x4b0] sm:$0xff]
        %v1557 = vld [vmem:[#allocation11 + $0x4b8] sm:$0xff]
        %v1558 = vld [vmem:[#allocation11 + $0x4c0] sm:$0xff]
        %v1559 = vld [vmem:[#allocation11 + $0x4c8] sm:$0xff]
        %v1560 = vld [vmem:[#allocation11 + $0x4d0] sm:$0xff]
        %v1561 = vld [vmem:[#allocation11 + $0x4d8] sm:$0xff]
        %v1562 = vld [vmem:[#allocation11 + $0x4e0] sm:$0xff]
        %v1563 = vld [vmem:[#allocation11 + $0x4e8] sm:$0xff]
        %v1564 = vld [vmem:[#allocation11 + $0x4f0] sm:$0xff]
        %v1565 = vld [vmem:[#allocation11 + $0x4f8] sm:$0xff]
        %v1566 = vld [vmem:[#allocation11 + $0x500] sm:$0xff]
        %v1567 = vld [vmem:[#allocation11 + $0x508] sm:$0xff]
        %v1568 = vld [vmem:[#allocation11 + $0x510] sm:$0xff]
        %v1569 = vld [vmem:[#allocation11 + $0x518] sm:$0xff]
        %v1570 = vld [vmem:[#allocation11 + $0x520] sm:$0xff]
        %v1571 = vld [vmem:[#allocation11 + $0x528] sm:$0xff]
        %v1572 = vld [vmem:[#allocation11 + $0x530] sm:$0xff]
        %v1573 = vld [vmem:[#allocation11 + $0x538] sm:$0xff]
        %v1574 = vld [vmem:[#allocation11 + $0x540] sm:$0xff]
        %v1575 = vld [vmem:[#allocation11 + $0x548] sm:$0xff]
        %v1576 = vld [vmem:[#allocation11 + $0x550] sm:$0xff]
        %v1577 = vld [vmem:[#allocation11 + $0x558] sm:$0xff]
        %v1578 = vld [vmem:[#allocation11 + $0x560] sm:$0xff]
        %v1579 = vld [vmem:[#allocation11 + $0x568] sm:$0xff]
        %v1580 = vld [vmem:[#allocation11 + $0x570] sm:$0xff]
        %v1581 = vld [vmem:[#allocation11 + $0x578] sm:$0xff]
        %v1582 = vld [vmem:[#allocation11 + $0x580] sm:$0xff]
        %v1583 = vld [vmem:[#allocation11 + $0x588] sm:$0xff]
        %v1584 = vld [vmem:[#allocation11 + $0x590] sm:$0xff]
        %v1585 = vld [vmem:[#allocation11 + $0x598] sm:$0xff]
        %v1586 = vld [vmem:[#allocation11 + $0x5a0] sm:$0xff]
        %v1587 = vld [vmem:[#allocation11 + $0x5a8] sm:$0xff]
        %v1588 = vld [vmem:[#allocation11 + $0x5b0] sm:$0xff]
        %v1589 = vld [vmem:[#allocation11 + $0x5b8] sm:$0xff]
        %v1590 = vld [vmem:[#allocation11 + $0x5c0] sm:$0xff]
        %v1591 = vld [vmem:[#allocation11 + $0x5c8] sm:$0xff]
        %v1592 = vld [vmem:[#allocation11 + $0x5d0] sm:$0xff]
        %v1593 = vld [vmem:[#allocation11 + $0x5d8] sm:$0xff]
        %v1594 = vld [vmem:[#allocation11 + $0x5e0] sm:$0xff]
        %v1595 = vld [vmem:[#allocation11 + $0x5e8] sm:$0xff]
        %v1596 = vld [vmem:[#allocation11 + $0x5f0] sm:$0xff]
        %v1597 = vld [vmem:[#allocation11 + $0x5f8] sm:$0xff]
        %v1598 = vld [vmem:[#allocation11 + $0x600] sm:$0xff]
        %v1599 = vld [vmem:[#allocation11 + $0x608] sm:$0xff]
        %v1600 = vld [vmem:[#allocation11 + $0x610] sm:$0xff]
        %v1601 = vld [vmem:[#allocation11 + $0x618] sm:$0xff]
        %v1602 = vld [vmem:[#allocation11 + $0x620] sm:$0xff]
        %v1603 = vld [vmem:[#allocation11 + $0x628] sm:$0xff]
        %v1604 = vld [vmem:[#allocation11 + $0x630] sm:$0xff]
        %v1605 = vld [vmem:[#allocation11 + $0x638] sm:$0xff]
        %v1606 = vld [vmem:[#allocation11 + $0x640] sm:$0xff]
        %v1607 = vld [vmem:[#allocation11 + $0x648] sm:$0xff]
        %v1608 = vld [vmem:[#allocation11 + $0x650] sm:$0xff]
        %v1609 = vld [vmem:[#allocation11 + $0x658] sm:$0xff]
        %v1610 = vld [vmem:[#allocation11 + $0x660] sm:$0xff]
        %v1611 = vld [vmem:[#allocation11 + $0x668] sm:$0xff]
        %v1612 = vld [vmem:[#allocation11 + $0x670] sm:$0xff]
        %v1613 = vld [vmem:[#allocation11 + $0x678] sm:$0xff]
        %v1614 = vld [vmem:[#allocation11 + $0x680] sm:$0xff]
        %v1615 = vld [vmem:[#allocation11 + $0x688] sm:$0xff]
        %v1616 = vld [vmem:[#allocation11 + $0x690] sm:$0xff]
        %v1617 = vld [vmem:[#allocation11 + $0x698] sm:$0xff]
        %v1618 = vld [vmem:[#allocation11 + $0x6a0] sm:$0xff]
        %v1619 = vld [vmem:[#allocation11 + $0x6a8] sm:$0xff]
        %v1620 = vld [vmem:[#allocation11 + $0x6b0] sm:$0xff]
        %v1621 = vld [vmem:[#allocation11 + $0x6b8] sm:$0xff]
        %v1622 = vld [vmem:[#allocation11 + $0x6c0] sm:$0xff]
        %v1623 = vld [vmem:[#allocation11 + $0x6c8] sm:$0xff]
        %v1624 = vld [vmem:[#allocation11 + $0x6d0] sm:$0xff]
        %v1625 = vld [vmem:[#allocation11 + $0x6d8] sm:$0xff]
        %v1626 = vld [vmem:[#allocation11 + $0x6e0] sm:$0xff]
        %v1627 = vld [vmem:[#allocation11 + $0x6e8] sm:$0xff]
        %v1628 = vld [vmem:[#allocation11 + $0x6f0] sm:$0xff]
        %v1629 = vld [vmem:[#allocation11 + $0x6f8] sm:$0xff]
        %v1630 = vld [vmem:[#allocation11 + $0x700] sm:$0xff]
        %v1631 = vld [vmem:[#allocation11 + $0x708] sm:$0xff]
        %v1632 = vld [vmem:[#allocation11 + $0x710] sm:$0xff]
        %v1633 = vld [vmem:[#allocation11 + $0x718] sm:$0xff]
        %v1634 = vld [vmem:[#allocation11 + $0x720] sm:$0xff]
        %v1635 = vld [vmem:[#allocation11 + $0x728] sm:$0xff]
        %v1636 = vld [vmem:[#allocation11 + $0x730] sm:$0xff]
        %v1637 = vld [vmem:[#allocation11 + $0x738] sm:$0xff]
        %v1638 = vld [vmem:[#allocation11 + $0x740] sm:$0xff]
        %v1639 = vld [vmem:[#allocation11 + $0x748] sm:$0xff]
        %v1640 = vld [vmem:[#allocation11 + $0x750] sm:$0xff]
        %v1641 = vld [vmem:[#allocation11 + $0x758] sm:$0xff]
        %v1642 = vld [vmem:[#allocation11 + $0x760] sm:$0xff]
        %v1643 = vld [vmem:[#allocation11 + $0x768] sm:$0xff]
        %v1644 = vld [vmem:[#allocation11 + $0x770] sm:$0xff]
        %v1645 = vld [vmem:[#allocation11 + $0x778] sm:$0xff]
        %v1646 = vld [vmem:[#allocation11 + $0x780] sm:$0xff]
        %v1647 = vld [vmem:[#allocation11 + $0x788] sm:$0xff]
        %v1648 = vld [vmem:[#allocation11 + $0x790] sm:$0xff]
        %v1649 = vld [vmem:[#allocation11 + $0x798] sm:$0xff]
        %v1650 = vld [vmem:[#allocation11 + $0x7a0] sm:$0xff]
        %v1651 = vld [vmem:[#allocation11 + $0x7a8] sm:$0xff]
        %v1652 = vld [vmem:[#allocation11 + $0x7b0] sm:$0xff]
        %v1653 = vld [vmem:[#allocation11 + $0x7b8] sm:$0xff]
        %v1654 = vld [vmem:[#allocation11 + $0x7c0] sm:$0xff]
        %v1655 = vld [vmem:[#allocation11 + $0x7c8] sm:$0xff]
        %v1656 = vld [vmem:[#allocation11 + $0x7d0] sm:$0xff]
        %v1657 = vld [vmem:[#allocation11 + $0x7d8] sm:$0xff]
        %v1658 = vld [vmem:[#allocation11 + $0x7e0] sm:$0xff]
        %v1659 = vld [vmem:[#allocation11 + $0x7e8] sm:$0xff]
        %v1660 = vld [vmem:[#allocation11 + $0x7f0] sm:$0xff]
        %v1661 = vld [vmem:[#allocation11 + $0x7f8] sm:$0xff]
        %v1662 = vld [vmem:[#allocation9] sm:$0xff]
        %v1663 = vld [vmem:[#allocation9 + $0x8] sm:$0xff]
        %v1664 = vld [vmem:[#allocation9 + $0x10] sm:$0xff]
        %v1665 = vld [vmem:[#allocation9 + $0x18] sm:$0xff]
        %v1666 = vld [vmem:[#allocation9 + $0x20] sm:$0xff]
        %v1667 = vld [vmem:[#allocation9 + $0x28] sm:$0xff]
        %v1668 = vld [vmem:[#allocation9 + $0x30] sm:$0xff]
        %v1669 = vld [vmem:[#allocation9 + $0x38] sm:$0xff]
        %v1670 = vld [vmem:[#allocation9 + $0x40] sm:$0xff]
        %v1671 = vld [vmem:[#allocation9 + $0x48] sm:$0xff]
        %v1672 = vld [vmem:[#allocation9 + $0x50] sm:$0xff]
        %v1673 = vld [vmem:[#allocation9 + $0x58] sm:$0xff]
        %v1674 = vld [vmem:[#allocation9 + $0x60] sm:$0xff]
        %v1675 = vld [vmem:[#allocation9 + $0x68] sm:$0xff]
        %v1676 = vld [vmem:[#allocation9 + $0x70] sm:$0xff]
        %v1677 = vld [vmem:[#allocation9 + $0x78] sm:$0xff]
        %v1678 = vld [vmem:[#allocation9 + $0x80] sm:$0xff]
        %v1679 = vld [vmem:[#allocation9 + $0x88] sm:$0xff]
        %v1680 = vld [vmem:[#allocation9 + $0x90] sm:$0xff]
        %v1681 = vld [vmem:[#allocation9 + $0x98] sm:$0xff]
        %v1682 = vld [vmem:[#allocation9 + $0xa0] sm:$0xff]
        %v1683 = vld [vmem:[#allocation9 + $0xa8] sm:$0xff]
        %v1684 = vld [vmem:[#allocation9 + $0xb0] sm:$0xff]
        %v1685 = vld [vmem:[#allocation9 + $0xb8] sm:$0xff]
        %v1686 = vld [vmem:[#allocation9 + $0xc0] sm:$0xff]
        %v1687 = vld [vmem:[#allocation9 + $0xc8] sm:$0xff]
        %v1688 = vld [vmem:[#allocation9 + $0xd0] sm:$0xff]
        %v1689 = vld [vmem:[#allocation9 + $0xd8] sm:$0xff]
        %v1690 = vld [vmem:[#allocation9 + $0xe0] sm:$0xff]
        %v1691 = vld [vmem:[#allocation9 + $0xe8] sm:$0xff]
        %v1692 = vld [vmem:[#allocation9 + $0xf0] sm:$0xff]
        %v1693 = vld [vmem:[#allocation9 + $0xf8] sm:$0xff]
        %v1694 = vld [vmem:[#allocation9 + $0x100] sm:$0xff]
        %v1695 = vld [vmem:[#allocation9 + $0x108] sm:$0xff]
        %v1696 = vld [vmem:[#allocation9 + $0x110] sm:$0xff]
        %v1697 = vld [vmem:[#allocation9 + $0x118] sm:$0xff]
        %v1698 = vld [vmem:[#allocation9 + $0x120] sm:$0xff]
        %v1699 = vld [vmem:[#allocation9 + $0x128] sm:$0xff]
        %v1700 = vld [vmem:[#allocation9 + $0x130] sm:$0xff]
        %v1701 = vld [vmem:[#allocation9 + $0x138] sm:$0xff]
        %v1702 = vld [vmem:[#allocation9 + $0x140] sm:$0xff]
        %v1703 = vld [vmem:[#allocation9 + $0x148] sm:$0xff]
        %v1704 = vld [vmem:[#allocation9 + $0x150] sm:$0xff]
        %v1705 = vld [vmem:[#allocation9 + $0x158] sm:$0xff]
        %v1706 = vld [vmem:[#allocation9 + $0x160] sm:$0xff]
        %v1707 = vld [vmem:[#allocation9 + $0x168] sm:$0xff]
        %v1708 = vld [vmem:[#allocation9 + $0x170] sm:$0xff]
        %v1709 = vld [vmem:[#allocation9 + $0x178] sm:$0xff]
        %v1710 = vld [vmem:[#allocation9 + $0x180] sm:$0xff]
        %v1711 = vld [vmem:[#allocation9 + $0x188] sm:$0xff]
        %v1712 = vld [vmem:[#allocation9 + $0x190] sm:$0xff]
        %v1713 = vld [vmem:[#allocation9 + $0x198] sm:$0xff]
        %v1714 = vld [vmem:[#allocation9 + $0x1a0] sm:$0xff]
        %v1715 = vld [vmem:[#allocation9 + $0x1a8] sm:$0xff]
        %v1716 = vld [vmem:[#allocation9 + $0x1b0] sm:$0xff]
        %v1717 = vld [vmem:[#allocation9 + $0x1b8] sm:$0xff]
        %v1718 = vld [vmem:[#allocation9 + $0x1c0] sm:$0xff]
        %v1719 = vld [vmem:[#allocation9 + $0x1c8] sm:$0xff]
        %v1720 = vld [vmem:[#allocation9 + $0x1d0] sm:$0xff]
        %v1721 = vld [vmem:[#allocation9 + $0x1d8] sm:$0xff]
        %v1722 = vld [vmem:[#allocation9 + $0x1e0] sm:$0xff]
        %v1723 = vld [vmem:[#allocation9 + $0x1e8] sm:$0xff]
        %v1724 = vld [vmem:[#allocation9 + $0x1f0] sm:$0xff]
        %v1725 = vld [vmem:[#allocation9 + $0x1f8] sm:$0xff]
        %v1726 = vld [vmem:[#allocation9 + $0x200] sm:$0xff]
        %v1727 = vld [vmem:[#allocation9 + $0x208] sm:$0xff]
        %v1728 = vld [vmem:[#allocation9 + $0x210] sm:$0xff]
        %v1729 = vld [vmem:[#allocation9 + $0x218] sm:$0xff]
        %v1730 = vld [vmem:[#allocation9 + $0x220] sm:$0xff]
        %v1731 = vld [vmem:[#allocation9 + $0x228] sm:$0xff]
        %v1732 = vld [vmem:[#allocation9 + $0x230] sm:$0xff]
        %v1733 = vld [vmem:[#allocation9 + $0x238] sm:$0xff]
        %v1734 = vld [vmem:[#allocation9 + $0x240] sm:$0xff]
        %v1735 = vld [vmem:[#allocation9 + $0x248] sm:$0xff]
        %v1736 = vld [vmem:[#allocation9 + $0x250] sm:$0xff]
        %v1737 = vld [vmem:[#allocation9 + $0x258] sm:$0xff]
        %v1738 = vld [vmem:[#allocation9 + $0x260] sm:$0xff]
        %v1739 = vld [vmem:[#allocation9 + $0x268] sm:$0xff]
        %v1740 = vld [vmem:[#allocation9 + $0x270] sm:$0xff]
        %v1741 = vld [vmem:[#allocation9 + $0x278] sm:$0xff]
        %v1742 = vld [vmem:[#allocation9 + $0x280] sm:$0xff]
        %v1743 = vld [vmem:[#allocation9 + $0x288] sm:$0xff]
        %v1744 = vld [vmem:[#allocation9 + $0x290] sm:$0xff]
        %v1745 = vld [vmem:[#allocation9 + $0x298] sm:$0xff]
        %v1746 = vld [vmem:[#allocation9 + $0x2a0] sm:$0xff]
        %v1747 = vld [vmem:[#allocation9 + $0x2a8] sm:$0xff]
        %v1748 = vld [vmem:[#allocation9 + $0x2b0] sm:$0xff]
        %v1749 = vld [vmem:[#allocation9 + $0x2b8] sm:$0xff]
        %v1750 = vld [vmem:[#allocation9 + $0x2c0] sm:$0xff]
        %v1751 = vld [vmem:[#allocation9 + $0x2c8] sm:$0xff]
        %v1752 = vld [vmem:[#allocation9 + $0x2d0] sm:$0xff]
        %v1753 = vld [vmem:[#allocation9 + $0x2d8] sm:$0xff]
        %v1754 = vld [vmem:[#allocation9 + $0x2e0] sm:$0xff]
        %v1755 = vld [vmem:[#allocation9 + $0x2e8] sm:$0xff]
        %v1756 = vld [vmem:[#allocation9 + $0x2f0] sm:$0xff]
        %v1757 = vld [vmem:[#allocation9 + $0x2f8] sm:$0xff]
        %v1758 = vld [vmem:[#allocation9 + $0x300] sm:$0xff]
        %v1759 = vld [vmem:[#allocation9 + $0x308] sm:$0xff]
        %v1760 = vld [vmem:[#allocation9 + $0x310] sm:$0xff]
        %v1761 = vld [vmem:[#allocation9 + $0x318] sm:$0xff]
        %v1762 = vld [vmem:[#allocation9 + $0x320] sm:$0xff]
        %v1763 = vld [vmem:[#allocation9 + $0x328] sm:$0xff]
        %v1764 = vld [vmem:[#allocation9 + $0x330] sm:$0xff]
        %v1765 = vld [vmem:[#allocation9 + $0x338] sm:$0xff]
        %v1766 = vld [vmem:[#allocation9 + $0x340] sm:$0xff]
        %v1767 = vld [vmem:[#allocation9 + $0x348] sm:$0xff]
        %v1768 = vld [vmem:[#allocation9 + $0x350] sm:$0xff]
        %v1769 = vld [vmem:[#allocation9 + $0x358] sm:$0xff]
        %v1770 = vld [vmem:[#allocation9 + $0x360] sm:$0xff]
        %v1771 = vld [vmem:[#allocation9 + $0x368] sm:$0xff]
        %v1772 = vld [vmem:[#allocation9 + $0x370] sm:$0xff]
        %v1773 = vld [vmem:[#allocation9 + $0x378] sm:$0xff]
        %v1774 = vld [vmem:[#allocation9 + $0x380] sm:$0xff]
        %v1775 = vld [vmem:[#allocation9 + $0x388] sm:$0xff]
        %v1776 = vld [vmem:[#allocation9 + $0x390] sm:$0xff]
        %v1777 = vld [vmem:[#allocation9 + $0x398] sm:$0xff]
        %v1778 = vld [vmem:[#allocation9 + $0x3a0] sm:$0xff]
        %v1779 = vld [vmem:[#allocation9 + $0x3a8] sm:$0xff]
        %v1780 = vld [vmem:[#allocation9 + $0x3b0] sm:$0xff]
        %v1781 = vld [vmem:[#allocation9 + $0x3b8] sm:$0xff]
        %v1782 = vld [vmem:[#allocation9 + $0x3c0] sm:$0xff]
        %v1783 = vld [vmem:[#allocation9 + $0x3c8] sm:$0xff]
        %v1784 = vld [vmem:[#allocation9 + $0x3d0] sm:$0xff]
        %v1785 = vld [vmem:[#allocation9 + $0x3d8] sm:$0xff]
        %v1786 = vld [vmem:[#allocation9 + $0x3e0] sm:$0xff]
        %v1787 = vld [vmem:[#allocation9 + $0x3e8] sm:$0xff]
        %v1788 = vld [vmem:[#allocation9 + $0x3f0] sm:$0xff]
        %v1789 = vld [vmem:[#allocation9 + $0x3f8] sm:$0xff]
        %v1790 = vld [vmem:[#allocation9 + $0x400] sm:$0xff]
        %v1791 = vld [vmem:[#allocation9 + $0x408] sm:$0xff]
        %v1792 = vld [vmem:[#allocation9 + $0x410] sm:$0xff]
        %v1793 = vld [vmem:[#allocation9 + $0x418] sm:$0xff]
        %v1794 = vld [vmem:[#allocation9 + $0x420] sm:$0xff]
        %v1795 = vld [vmem:[#allocation9 + $0x428] sm:$0xff]
        %v1796 = vld [vmem:[#allocation9 + $0x430] sm:$0xff]
        %v1797 = vld [vmem:[#allocation9 + $0x438] sm:$0xff]
        %v1798 = vld [vmem:[#allocation9 + $0x440] sm:$0xff]
        %v1799 = vld [vmem:[#allocation9 + $0x448] sm:$0xff]
        %v1800 = vld [vmem:[#allocation9 + $0x450] sm:$0xff]
        %v1801 = vld [vmem:[#allocation9 + $0x458] sm:$0xff]
        %v1802 = vld [vmem:[#allocation9 + $0x460] sm:$0xff]
        %v1803 = vld [vmem:[#allocation9 + $0x468] sm:$0xff]
        %v1804 = vld [vmem:[#allocation9 + $0x470] sm:$0xff]
        %v1805 = vld [vmem:[#allocation9 + $0x478] sm:$0xff]
        %v1806 = vld [vmem:[#allocation9 + $0x480] sm:$0xff]
        %v1807 = vld [vmem:[#allocation9 + $0x488] sm:$0xff]
        %v1808 = vld [vmem:[#allocation9 + $0x490] sm:$0xff]
        %v1809 = vld [vmem:[#allocation9 + $0x498] sm:$0xff]
        %v1810 = vld [vmem:[#allocation9 + $0x4a0] sm:$0xff]
        %v1811 = vld [vmem:[#allocation9 + $0x4a8] sm:$0xff]
        %v1812 = vld [vmem:[#allocation9 + $0x4b0] sm:$0xff]
        %v1813 = vld [vmem:[#allocation9 + $0x4b8] sm:$0xff]
        %v1814 = vld [vmem:[#allocation9 + $0x4c0] sm:$0xff]
        %v1815 = vld [vmem:[#allocation9 + $0x4c8] sm:$0xff]
        %v1816 = vld [vmem:[#allocation9 + $0x4d0] sm:$0xff]
        %v1817 = vld [vmem:[#allocation9 + $0x4d8] sm:$0xff]
        %v1818 = vld [vmem:[#allocation9 + $0x4e0] sm:$0xff]
        %v1819 = vld [vmem:[#allocation9 + $0x4e8] sm:$0xff]
        %v1820 = vld [vmem:[#allocation9 + $0x4f0] sm:$0xff]
        %v1821 = vld [vmem:[#allocation9 + $0x4f8] sm:$0xff]
        %v1822 = vld [vmem:[#allocation9 + $0x500] sm:$0xff]
        %v1823 = vld [vmem:[#allocation9 + $0x508] sm:$0xff]
        %v1824 = vld [vmem:[#allocation9 + $0x510] sm:$0xff]
        %v1825 = vld [vmem:[#allocation9 + $0x518] sm:$0xff]
        %v1826 = vld [vmem:[#allocation9 + $0x520] sm:$0xff]
        %v1827 = vld [vmem:[#allocation9 + $0x528] sm:$0xff]
        %v1828 = vld [vmem:[#allocation9 + $0x530] sm:$0xff]
        %v1829 = vld [vmem:[#allocation9 + $0x538] sm:$0xff]
        %v1830 = vld [vmem:[#allocation9 + $0x540] sm:$0xff]
        %v1831 = vld [vmem:[#allocation9 + $0x548] sm:$0xff]
        %v1832 = vld [vmem:[#allocation9 + $0x550] sm:$0xff]
        %v1833 = vld [vmem:[#allocation9 + $0x558] sm:$0xff]
        %v1834 = vld [vmem:[#allocation9 + $0x560] sm:$0xff]
        %v1835 = vld [vmem:[#allocation9 + $0x568] sm:$0xff]
        %v1836 = vld [vmem:[#allocation9 + $0x570] sm:$0xff]
        %v1837 = vld [vmem:[#allocation9 + $0x578] sm:$0xff]
        %v1838 = vld [vmem:[#allocation9 + $0x580] sm:$0xff]
        %v1839 = vld [vmem:[#allocation9 + $0x588] sm:$0xff]
        %v1840 = vld [vmem:[#allocation9 + $0x590] sm:$0xff]
        %v1841 = vld [vmem:[#allocation9 + $0x598] sm:$0xff]
        %v1842 = vld [vmem:[#allocation9 + $0x5a0] sm:$0xff]
        %v1843 = vld [vmem:[#allocation9 + $0x5a8] sm:$0xff]
        %v1844 = vld [vmem:[#allocation9 + $0x5b0] sm:$0xff]
        %v1845 = vld [vmem:[#allocation9 + $0x5b8] sm:$0xff]
        %v1846 = vld [vmem:[#allocation9 + $0x5c0] sm:$0xff]
        %v1847 = vld [vmem:[#allocation9 + $0x5c8] sm:$0xff]
        %v1848 = vld [vmem:[#allocation9 + $0x5d0] sm:$0xff]
        %v1849 = vld [vmem:[#allocation9 + $0x5d8] sm:$0xff]
        %v1850 = vld [vmem:[#allocation9 + $0x5e0] sm:$0xff]
        %v1851 = vld [vmem:[#allocation9 + $0x5e8] sm:$0xff]
        %v1852 = vld [vmem:[#allocation9 + $0x5f0] sm:$0xff]
        %v1853 = vld [vmem:[#allocation9 + $0x5f8] sm:$0xff]
        %v1854 = vld [vmem:[#allocation9 + $0x600] sm:$0xff]
        %v1855 = vld [vmem:[#allocation9 + $0x608] sm:$0xff]
        %v1856 = vld [vmem:[#allocation9 + $0x610] sm:$0xff]
        %v1857 = vld [vmem:[#allocation9 + $0x618] sm:$0xff]
        %v1858 = vld [vmem:[#allocation9 + $0x620] sm:$0xff]
        %v1859 = vld [vmem:[#allocation9 + $0x628] sm:$0xff]
        %v1860 = vld [vmem:[#allocation9 + $0x630] sm:$0xff]
        %v1861 = vld [vmem:[#allocation9 + $0x638] sm:$0xff]
        %v1862 = vld [vmem:[#allocation9 + $0x640] sm:$0xff]
        %v1863 = vld [vmem:[#allocation9 + $0x648] sm:$0xff]
        %v1864 = vld [vmem:[#allocation9 + $0x650] sm:$0xff]
        %v1865 = vld [vmem:[#allocation9 + $0x658] sm:$0xff]
        %v1866 = vld [vmem:[#allocation9 + $0x660] sm:$0xff]
        %v1867 = vld [vmem:[#allocation9 + $0x668] sm:$0xff]
        %v1868 = vld [vmem:[#allocation9 + $0x670] sm:$0xff]
        %v1869 = vld [vmem:[#allocation9 + $0x678] sm:$0xff]
        %v1870 = vld [vmem:[#allocation9 + $0x680] sm:$0xff]
        %v1871 = vld [vmem:[#allocation9 + $0x688] sm:$0xff]
        %v1872 = vld [vmem:[#allocation9 + $0x690] sm:$0xff]
        %v1873 = vld [vmem:[#allocation9 + $0x698] sm:$0xff]
        %v1874 = vld [vmem:[#allocation9 + $0x6a0] sm:$0xff]
        %v1875 = vld [vmem:[#allocation9 + $0x6a8] sm:$0xff]
        %v1876 = vld [vmem:[#allocation9 + $0x6b0] sm:$0xff]
        %v1877 = vld [vmem:[#allocation9 + $0x6b8] sm:$0xff]
        %v1878 = vld [vmem:[#allocation9 + $0x6c0] sm:$0xff]
        %v1879 = vld [vmem:[#allocation9 + $0x6c8] sm:$0xff]
        %v1880 = vld [vmem:[#allocation9 + $0x6d0] sm:$0xff]
        %v1881 = vld [vmem:[#allocation9 + $0x6d8] sm:$0xff]
        %v1882 = vld [vmem:[#allocation9 + $0x6e0] sm:$0xff]
        %v1883 = vld [vmem:[#allocation9 + $0x6e8] sm:$0xff]
        %v1884 = vld [vmem:[#allocation9 + $0x6f0] sm:$0xff]
        %v1885 = vld [vmem:[#allocation9 + $0x6f8] sm:$0xff]
        %v1886 = vld [vmem:[#allocation9 + $0x700] sm:$0xff]
        %v1887 = vld [vmem:[#allocation9 + $0x708] sm:$0xff]
        %v1888 = vld [vmem:[#allocation9 + $0x710] sm:$0xff]
        %v1889 = vld [vmem:[#allocation9 + $0x718] sm:$0xff]
        %v1890 = vld [vmem:[#allocation9 + $0x720] sm:$0xff]
        %v1891 = vld [vmem:[#allocation9 + $0x728] sm:$0xff]
        %v1892 = vld [vmem:[#allocation9 + $0x730] sm:$0xff]
        %v1893 = vld [vmem:[#allocation9 + $0x738] sm:$0xff]
        %v1894 = vld [vmem:[#allocation9 + $0x740] sm:$0xff]
        %v1895 = vld [vmem:[#allocation9 + $0x748] sm:$0xff]
        %v1896 = vld [vmem:[#allocation9 + $0x750] sm:$0xff]
        %v1897 = vld [vmem:[#allocation9 + $0x758] sm:$0xff]
        %v1898 = vld [vmem:[#allocation9 + $0x760] sm:$0xff]
        %v1899 = vld [vmem:[#allocation9 + $0x768] sm:$0xff]
        %v1900 = vld [vmem:[#allocation9 + $0x770] sm:$0xff]
        %v1901 = vld [vmem:[#allocation9 + $0x778] sm:$0xff]
        %v1902 = vld [vmem:[#allocation9 + $0x780] sm:$0xff]
        %v1903 = vld [vmem:[#allocation9 + $0x788] sm:$0xff]
        %v1904 = vld [vmem:[#allocation9 + $0x790] sm:$0xff]
        %v1905 = vld [vmem:[#allocation9 + $0x798] sm:$0xff]
        %v1906 = vld [vmem:[#allocation9 + $0x7a0] sm:$0xff]
        %v1907 = vld [vmem:[#allocation9 + $0x7a8] sm:$0xff]
        %v1908 = vld [vmem:[#allocation9 + $0x7b0] sm:$0xff]
        %v1909 = vld [vmem:[#allocation9 + $0x7b8] sm:$0xff]
        %v1910 = vld [vmem:[#allocation9 + $0x7c0] sm:$0xff]
        %v1911 = vld [vmem:[#allocation9 + $0x7c8] sm:$0xff]
        %v1912 = vld [vmem:[#allocation9 + $0x7d0] sm:$0xff]
        %v1913 = vld [vmem:[#allocation9 + $0x7d8] sm:$0xff]
        %v1914 = vld [vmem:[#allocation9 + $0x7e0] sm:$0xff]
        %v1915 = vld [vmem:[#allocation9 + $0x7e8] sm:$0xff]
        %v1916 = vld [vmem:[#allocation9 + $0x7f0] sm:$0xff]
        %v1917 = vld [vmem:[#allocation9 + $0x7f8] sm:$0xff]
        %v1918 = vld [vmem:[%s8] sm:$0xff]
        %v1920 = vlaneseq
        %v1921 = vshrl.u32 %v1920, 7
        %v1922 = vsub.s32 0, %v1921
        %v1923 = vrot.slane %v1918, %v1922
        %v1924 = vlaneseq
        %v1925 = vshrl.u32 %v1924, 7
        %v1926 = vsub.s32 1, %v1925
        %v1927 = vrot.slane %v1918, %v1926
        %v1928 = vlaneseq
        %v1929 = vshrl.u32 %v1928, 7
        %v1930 = vsub.s32 2, %v1929
        %v1931 = vrot.slane %v1918, %v1930
        %v1932 = vlaneseq
        %v1933 = vshrl.u32 %v1932, 7
        %v1934 = vsub.s32 3, %v1933
        %v1935 = vrot.slane %v1918, %v1934
        %v1936 = vlaneseq
        %v1937 = vshrl.u32 %v1936, 7
        %v1938 = vsub.s32 4, %v1937
        %v1939 = vrot.slane %v1918, %v1938
        %v1940 = vlaneseq
        %v1941 = vshrl.u32 %v1940, 7
        %v1942 = vsub.s32 5, %v1941
        %v1943 = vrot.slane %v1918, %v1942
        %v1944 = vlaneseq
        %v1945 = vshrl.u32 %v1944, 7
        %v1946 = vsub.s32 6, %v1945
        %v1947 = vrot.slane %v1918, %v1946
        %v1948 = vlaneseq
        %v1949 = vshrl.u32 %v1948, 7
        %v1950 = vsub.s32 7, %v1949
        %v1951 = vrot.slane %v1918, %v1950
        %1960 = vmatprep.subr.mxu0 %v1663
        %1961 = vmatpush1.msra.mxu0 %v1662
        %1962 = vmatprep.subr.mxu0 %v1671
        %1963 = vmatpush1.msra.mxu0 %v1670
        %1964 = vmatprep.subr.mxu0 %v1679
        %1965 = vmatpush1.msra.mxu0 %v1678
        %1966 = vmatprep.subr.mxu0 %v1687
        %1967 = vmatpush1.msra.mxu0 %v1686
        %1968 = vmatprep.subr.mxu0 %v1695
        %1969 = vmatpush1.msra.mxu0 %v1694
        %1970 = vmatprep.subr.mxu0 %v1703
        %1971 = vmatpush1.msra.mxu0 %v1702
        %1972 = vmatprep.subr.mxu0 %v1711
        %1973 = vmatpush1.msra.mxu0 %v1710
        %1974 = vmatprep.subr.mxu0 %v1719
        %1975 = vmatpush1.msra.mxu0 %v1718
        %1976 = vmatprep.subr.mxu0 %v1727
        %1977 = vmatpush1.msra.mxu0 %v1726
        %1978 = vmatprep.subr.mxu0 %v1735
        %1979 = vmatpush1.msra.mxu0 %v1734
        %1980 = vmatprep.subr.mxu0 %v1743
        %1981 = vmatpush1.msra.mxu0 %v1742
        %1982 = vmatprep.subr.mxu0 %v1751
        %1983 = vmatpush1.msra.mxu0 %v1750
        %1984 = vmatprep.subr.mxu0 %v1759
        %1985 = vmatpush1.msra.mxu0 %v1758
        %1986 = vmatprep.subr.mxu0 %v1767
        %1987 = vmatpush1.msra.mxu0 %v1766
        %1988 = vmatprep.subr.mxu0 %v1775
        %1989 = vmatpush1.msra.mxu0 %v1774
        %1990 = vmatprep.subr.mxu0 %v1783
        %1991 = vmatpush1.msra.mxu0 %v1782
        %1992 = vmatprep.subr.mxu0 %v1791
        %1993 = vmatpush1.msra.mxu0 %v1790
        %1994 = vmatprep.subr.mxu0 %v1799
        %1995 = vmatpush1.msra.mxu0 %v1798
        %1996 = vmatprep.subr.mxu0 %v1807
        %1997 = vmatpush1.msra.mxu0 %v1806
        %1998 = vmatprep.subr.mxu0 %v1815
        %1999 = vmatpush1.msra.mxu0 %v1814
        %2000 = vmatprep.subr.mxu0 %v1823
        %2001 = vmatpush1.msra.mxu0 %v1822
        %2002 = vmatprep.subr.mxu0 %v1831
        %2003 = vmatpush1.msra.mxu0 %v1830
        %2004 = vmatprep.subr.mxu0 %v1839
        %2005 = vmatpush1.msra.mxu0 %v1838
        %2006 = vmatprep.subr.mxu0 %v1847
        %2007 = vmatpush1.msra.mxu0 %v1846
        %2008 = vmatprep.subr.mxu0 %v1855
        %2009 = vmatpush1.msra.mxu0 %v1854
        %2010 = vmatprep.subr.mxu0 %v1863
        %2011 = vmatpush1.msra.mxu0 %v1862
        %2012 = vmatprep.subr.mxu0 %v1871
        %2013 = vmatpush1.msra.mxu0 %v1870
        %2014 = vmatprep.subr.mxu0 %v1879
        %2015 = vmatpush1.msra.mxu0 %v1878
        %2016 = vmatprep.subr.mxu0 %v1887
        %2017 = vmatpush1.msra.mxu0 %v1886
        %2018 = vmatprep.subr.mxu0 %v1895
        %2019 = vmatpush1.msra.mxu0 %v1894
        %2020 = vmatprep.subr.mxu0 %v1903
        %2021 = vmatpush1.msra.mxu0 %v1902
        %2022 = vmatprep.subr.mxu0 %v1911
        %2023 = vmatpush1.msra.mxu0 %v1910
        %2024 = vmatprep.mubr.f32.mxu0 %v1404
        %2025 = vmatmul.mubr.f32.gmra.mrb[0].mxu0 %v1403
        %v2026 = vpop.f32.mrb[0].mxu0
        %v2027 = vadd.f32 %v1923, %v2026
        %v2028 = vpop.f32.mrb[0].mxu0
        %v2029 = vadd.f32 %v1927, %v2028
        %2030 = vdwg.mxu0
        %2031 = vmatprep.subr.mxu0 %v1665
        %2032 = vmatpush1.msra.mxu0 %v1664
        %2033 = vmatprep.subr.mxu0 %v1673
        %2034 = vmatpush1.msra.mxu0 %v1672
        %2035 = vmatprep.subr.mxu0 %v1681
        %2036 = vmatpush1.msra.mxu0 %v1680
        %2037 = vmatprep.subr.mxu0 %v1689
        %2038 = vmatpush1.msra.mxu0 %v1688
        %2039 = vmatprep.subr.mxu0 %v1697
        %2040 = vmatpush1.msra.mxu0 %v1696
        %2041 = vmatprep.subr.mxu0 %v1705
        %2042 = vmatpush1.msra.mxu0 %v1704
        %2043 = vmatprep.subr.mxu0 %v1713
        %2044 = vmatpush1.msra.mxu0 %v1712
        %2045 = vmatprep.subr.mxu0 %v1721
        %2046 = vmatpush1.msra.mxu0 %v1720
        %2047 = vmatprep.subr.mxu0 %v1729
        %2048 = vmatpush1.msra.mxu0 %v1728
        %2049 = vmatprep.subr.mxu0 %v1737
        %2050 = vmatpush1.msra.mxu0 %v1736
        %2051 = vmatprep.subr.mxu0 %v1745
        %2052 = vmatpush1.msra.mxu0 %v1744
        %2053 = vmatprep.subr.mxu0 %v1753
        %2054 = vmatpush1.msra.mxu0 %v1752
        %2055 = vmatprep.subr.mxu0 %v1761
        %2056 = vmatpush1.msra.mxu0 %v1760
        %2057 = vmatprep.subr.mxu0 %v1769
        %2058 = vmatpush1.msra.mxu0 %v1768
        %2059 = vmatprep.subr.mxu0 %v1777
        %2060 = vmatpush1.msra.mxu0 %v1776
        %2061 = vmatprep.subr.mxu0 %v1785
        %2062 = vmatpush1.msra.mxu0 %v1784
        %2063 = vmatprep.subr.mxu0 %v1793
        %2064 = vmatpush1.msra.mxu0 %v1792
        %2065 = vmatprep.subr.mxu0 %v1801
        %2066 = vmatpush1.msra.mxu0 %v1800
        %2067 = vmatprep.subr.mxu0 %v1809
        %2068 = vmatpush1.msra.mxu0 %v1808
        %2069 = vmatprep.subr.mxu0 %v1817
        %2070 = vmatpush1.msra.mxu0 %v1816
        %2071 = vmatprep.subr.mxu0 %v1825
        %2072 = vmatpush1.msra.mxu0 %v1824
        %2073 = vmatprep.subr.mxu0 %v1833
        %2074 = vmatpush1.msra.mxu0 %v1832
        %2075 = vmatprep.subr.mxu0 %v1841
        %2076 = vmatpush1.msra.mxu0 %v1840
        %2077 = vmatprep.subr.mxu0 %v1849
        %2078 = vmatpush1.msra.mxu0 %v1848
        %2079 = vmatprep.subr.mxu0 %v1857
        %2080 = vmatpush1.msra.mxu0 %v1856
        %2081 = vmatprep.subr.mxu0 %v1865
        %2082 = vmatpush1.msra.mxu0 %v1864
        %2083 = vmatprep.subr.mxu0 %v1873
        %2084 = vmatpush1.msra.mxu0 %v1872
        %2085 = vmatprep.subr.mxu0 %v1881
        %2086 = vmatpush1.msra.mxu0 %v1880
        %2087 = vmatprep.subr.mxu0 %v1889
        %2088 = vmatpush1.msra.mxu0 %v1888
        %2089 = vmatprep.subr.mxu0 %v1897
        %2090 = vmatpush1.msra.mxu0 %v1896
        %2091 = vmatprep.subr.mxu0 %v1905
        %2092 = vmatpush1.msra.mxu0 %v1904
        %2093 = vmatprep.subr.mxu0 %v1913
        %2094 = vmatpush1.msra.mxu0 %v1912
        %2095 = vmatprep.mubr.f32.mxu0 %v1404
        %2096 = vmatmul.mubr.f32.gmra.mrb[0].mxu0 %v1403
        %v2097 = vpop.f32.mrb[0].mxu0
        %v2098 = vadd.f32 %v1931, %v2097
        %v2099 = vpop.f32.mrb[0].mxu0
        %v2100 = vadd.f32 %v1935, %v2099
        %2101 = vdwg.mxu0
        %2102 = vmatprep.subr.mxu0 %v1667
        %2103 = vmatpush1.msra.mxu0 %v1666
        %2104 = vmatprep.subr.mxu0 %v1675
        %2105 = vmatpush1.msra.mxu0 %v1674
        %2106 = vmatprep.subr.mxu0 %v1683
        %2107 = vmatpush1.msra.mxu0 %v1682
        %2108 = vmatprep.subr.mxu0 %v1691
        %2109 = vmatpush1.msra.mxu0 %v1690
        %2110 = vmatprep.subr.mxu0 %v1699
        %2111 = vmatpush1.msra.mxu0 %v1698
        %2112 = vmatprep.subr.mxu0 %v1707
        %2113 = vmatpush1.msra.mxu0 %v1706
        %2114 = vmatprep.subr.mxu0 %v1715
        %2115 = vmatpush1.msra.mxu0 %v1714
        %2116 = vmatprep.subr.mxu0 %v1723
        %2117 = vmatpush1.msra.mxu0 %v1722
        %2118 = vmatprep.subr.mxu0 %v1731
        %2119 = vmatpush1.msra.mxu0 %v1730
        %2120 = vmatprep.subr.mxu0 %v1739
        %2121 = vmatpush1.msra.mxu0 %v1738
        %2122 = vmatprep.subr.mxu0 %v1747
        %2123 = vmatpush1.msra.mxu0 %v1746
        %2124 = vmatprep.subr.mxu0 %v1755
        %2125 = vmatpush1.msra.mxu0 %v1754
        %2126 = vmatprep.subr.mxu0 %v1763
        %2127 = vmatpush1.msra.mxu0 %v1762
        %2128 = vmatprep.subr.mxu0 %v1771
        %2129 = vmatpush1.msra.mxu0 %v1770
        %2130 = vmatprep.subr.mxu0 %v1779
        %2131 = vmatpush1.msra.mxu0 %v1778
        %2132 = vmatprep.subr.mxu0 %v1787
        %2133 = vmatpush1.msra.mxu0 %v1786
        %2134 = vmatprep.subr.mxu0 %v1795
        %2135 = vmatpush1.msra.mxu0 %v1794
        %2136 = vmatprep.subr.mxu0 %v1803
        %2137 = vmatpush1.msra.mxu0 %v1802
        %2138 = vmatprep.subr.mxu0 %v1811
        %2139 = vmatpush1.msra.mxu0 %v1810
        %2140 = vmatprep.subr.mxu0 %v1819
        %2141 = vmatpush1.msra.mxu0 %v1818
        %2142 = vmatprep.subr.mxu0 %v1827
        %2143 = vmatpush1.msra.mxu0 %v1826
        %2144 = vmatprep.subr.mxu0 %v1835
        %2145 = vmatpush1.msra.mxu0 %v1834
        %2146 = vmatprep.subr.mxu0 %v1843
        %2147 = vmatpush1.msra.mxu0 %v1842
        %2148 = vmatprep.subr.mxu0 %v1851
        %2149 = vmatpush1.msra.mxu0 %v1850
        %2150 = vmatprep.subr.mxu0 %v1859
        %2151 = vmatpush1.msra.mxu0 %v1858
        %2152 = vmatprep.subr.mxu0 %v1867
        %2153 = vmatpush1.msra.mxu0 %v1866
        %2154 = vmatprep.subr.mxu0 %v1875
        %2155 = vmatpush1.msra.mxu0 %v1874
        %2156 = vmatprep.subr.mxu0 %v1883
        %2157 = vmatpush1.msra.mxu0 %v1882
        %2158 = vmatprep.subr.mxu0 %v1891
        %2159 = vmatpush1.msra.mxu0 %v1890
        %2160 = vmatprep.subr.mxu0 %v1899
        %2161 = vmatpush1.msra.mxu0 %v1898
        %2162 = vmatprep.subr.mxu0 %v1907
        %2163 = vmatpush1.msra.mxu0 %v1906
        %2164 = vmatprep.subr.mxu0 %v1915
        %2165 = vmatpush1.msra.mxu0 %v1914
        %2166 = vmatprep.mubr.f32.mxu0 %v1404
        %2167 = vmatmul.mubr.f32.gmra.mrb[0].mxu0 %v1403
        %v2168 = vpop.f32.mrb[0].mxu0
        %v2169 = vadd.f32 %v1939, %v2168
        %v2170 = vpop.f32.mrb[0].mxu0
        %v2171 = vadd.f32 %v1943, %v2170
        %2172 = vdwg.mxu0
        %2173 = vmatprep.subr.mxu0 %v1669
        %2174 = vmatpush1.msra.mxu0 %v1668
        %2175 = vmatprep.subr.mxu0 %v1677
        %2176 = vmatpush1.msra.mxu0 %v1676
        %2177 = vmatprep.subr.mxu0 %v1685
        %2178 = vmatpush1.msra.mxu0 %v1684
        %2179 = vmatprep.subr.mxu0 %v1693
        %2180 = vmatpush1.msra.mxu0 %v1692
        %2181 = vmatprep.subr.mxu0 %v1701
        %2182 = vmatpush1.msra.mxu0 %v1700
        %2183 = vmatprep.subr.mxu0 %v1709
        %2184 = vmatpush1.msra.mxu0 %v1708
        %2185 = vmatprep.subr.mxu0 %v1717
        %2186 = vmatpush1.msra.mxu0 %v1716
        %2187 = vmatprep.subr.mxu0 %v1725
        %2188 = vmatpush1.msra.mxu0 %v1724
        %2189 = vmatprep.subr.mxu0 %v1733
        %2190 = vmatpush1.msra.mxu0 %v1732
        %2191 = vmatprep.subr.mxu0 %v1741
        %2192 = vmatpush1.msra.mxu0 %v1740
        %2193 = vmatprep.subr.mxu0 %v1749
        %2194 = vmatpush1.msra.mxu0 %v1748
        %2195 = vmatprep.subr.mxu0 %v1757
        %2196 = vmatpush1.msra.mxu0 %v1756
        %2197 = vmatprep.subr.mxu0 %v1765
        %2198 = vmatpush1.msra.mxu0 %v1764
        %2199 = vmatprep.subr.mxu0 %v1773
        %2200 = vmatpush1.msra.mxu0 %v1772
        %2201 = vmatprep.subr.mxu0 %v1781
        %2202 = vmatpush1.msra.mxu0 %v1780
        %2203 = vmatprep.subr.mxu0 %v1789
        %2204 = vmatpush1.msra.mxu0 %v1788
        %2205 = vmatprep.subr.mxu0 %v1797
        %2206 = vmatpush1.msra.mxu0 %v1796
        %2207 = vmatprep.subr.mxu0 %v1805
        %2208 = vmatpush1.msra.mxu0 %v1804
        %2209 = vmatprep.subr.mxu0 %v1813
        %2210 = vmatpush1.msra.mxu0 %v1812
        %2211 = vmatprep.subr.mxu0 %v1821
        %2212 = vmatpush1.msra.mxu0 %v1820
        %2213 = vmatprep.subr.mxu0 %v1829
        %2214 = vmatpush1.msra.mxu0 %v1828
        %2215 = vmatprep.subr.mxu0 %v1837
        %2216 = vmatpush1.msra.mxu0 %v1836
        %2217 = vmatprep.subr.mxu0 %v1845
        %2218 = vmatpush1.msra.mxu0 %v1844
        %2219 = vmatprep.subr.mxu0 %v1853
        %2220 = vmatpush1.msra.mxu0 %v1852
        %2221 = vmatprep.subr.mxu0 %v1861
        %2222 = vmatpush1.msra.mxu0 %v1860
        %2223 = vmatprep.subr.mxu0 %v1869
        %2224 = vmatpush1.msra.mxu0 %v1868
        %2225 = vmatprep.subr.mxu0 %v1877
        %2226 = vmatpush1.msra.mxu0 %v1876
        %2227 = vmatprep.subr.mxu0 %v1885
        %2228 = vmatpush1.msra.mxu0 %v1884
        %2229 = vmatprep.subr.mxu0 %v1893
        %2230 = vmatpush1.msra.mxu0 %v1892
        %2231 = vmatprep.subr.mxu0 %v1901
        %2232 = vmatpush1.msra.mxu0 %v1900
        %2233 = vmatprep.subr.mxu0 %v1909
        %2234 = vmatpush1.msra.mxu0 %v1908
        %2235 = vmatprep.subr.mxu0 %v1917
        %2236 = vmatpush1.msra.mxu0 %v1916
        %2237 = vmatprep.mubr.f32.mxu0 %v1404
        %2238 = vmatmul.mubr.f32.gmra.mrb[0].mxu0 %v1403
        %v2239 = vpop.f32.mrb[0].mxu0
        %v2240 = vadd.f32 %v1947, %v2239
        %v2241 = vpop.f32.mrb[0].mxu0
        %v2242 = vadd.f32 %v1951, %v2241
        %2243 = vdwg.mxu0
        %2244 = vmatprep.subr.mxu0 %v1407
        %2245 = vmatpush1.msra.mxu0 %v1406
        %2246 = vmatprep.subr.mxu0 %v1411
        %2247 = vmatpush1.msra.mxu0 %v1410
        %2248 = vmatprep.subr.mxu0 %v1415
        %2249 = vmatpush1.msra.mxu0 %v1414
        %2250 = vmatprep.subr.mxu0 %v1419
        %2251 = vmatpush1.msra.mxu0 %v1418
        %2252 = vmatprep.subr.mxu0 %v1423
        %2253 = vmatpush1.msra.mxu0 %v1422
        %2254 = vmatprep.subr.mxu0 %v1427
        %2255 = vmatpush1.msra.mxu0 %v1426
        %2256 = vmatprep.subr.mxu0 %v1431
        %2257 = vmatpush1.msra.mxu0 %v1430
        %2258 = vmatprep.subr.mxu0 %v1435
        %2259 = vmatpush1.msra.mxu0 %v1434
        %2260 = vmatprep.subr.mxu0 %v1439
        %2261 = vmatpush1.msra.mxu0 %v1438
        %2262 = vmatprep.subr.mxu0 %v1443
        %2263 = vmatpush1.msra.mxu0 %v1442
        %2264 = vmatprep.subr.mxu0 %v1447
        %2265 = vmatpush1.msra.mxu0 %v1446
        %2266 = vmatprep.subr.mxu0 %v1451
        %2267 = vmatpush1.msra.mxu0 %v1450
        %2268 = vmatprep.subr.mxu0 %v1455
        %2269 = vmatpush1.msra.mxu0 %v1454
        %2270 = vmatprep.subr.mxu0 %v1459
        %2271 = vmatpush1.msra.mxu0 %v1458
        %2272 = vmatprep.subr.mxu0 %v1463
        %2273 = vmatpush1.msra.mxu0 %v1462
        %2274 = vmatprep.subr.mxu0 %v1467
        %2275 = vmatpush1.msra.mxu0 %v1466
        %2276 = vmatprep.subr.mxu0 %v1471
        %2277 = vmatpush1.msra.mxu0 %v1470
        %2278 = vmatprep.subr.mxu0 %v1475
        %2279 = vmatpush1.msra.mxu0 %v1474
        %2280 = vmatprep.subr.mxu0 %v1479
        %2281 = vmatpush1.msra.mxu0 %v1478
        %2282 = vmatprep.subr.mxu0 %v1483
        %2283 = vmatpush1.msra.mxu0 %v1482
        %2284 = vmatprep.subr.mxu0 %v1487
        %2285 = vmatpush1.msra.mxu0 %v1486
        %2286 = vmatprep.subr.mxu0 %v1491
        %2287 = vmatpush1.msra.mxu0 %v1490
        %2288 = vmatprep.subr.mxu0 %v1495
        %2289 = vmatpush1.msra.mxu0 %v1494
        %2290 = vmatprep.subr.mxu0 %v1499
        %2291 = vmatpush1.msra.mxu0 %v1498
        %2292 = vmatprep.subr.mxu0 %v1503
        %2293 = vmatpush1.msra.mxu0 %v1502
        %2294 = vmatprep.subr.mxu0 %v1507
        %2295 = vmatpush1.msra.mxu0 %v1506
        %2296 = vmatprep.subr.mxu0 %v1511
        %2297 = vmatpush1.msra.mxu0 %v1510
        %2298 = vmatprep.subr.mxu0 %v1515
        %2299 = vmatpush1.msra.mxu0 %v1514
        %2300 = vmatprep.subr.mxu0 %v1519
        %2301 = vmatpush1.msra.mxu0 %v1518
        %2302 = vmatprep.subr.mxu0 %v1523
        %2303 = vmatpush1.msra.mxu0 %v1522
        %2304 = vmatprep.subr.mxu0 %v1527
        %2305 = vmatpush1.msra.mxu0 %v1526
        %2306 = vmatprep.subr.mxu0 %v1531
        %2307 = vmatpush1.msra.mxu0 %v1530
        %2308 = vmatprep.mubr.f32.mxu0 %v2029
        %2309 = vmatmul.mubr.f32.gmra.mrb[0].mxu0 %v2027
        %v2310 = vpop.f32.mrb[0].mxu0
        %v2311 = vadd.f32 0.0, %v2310
        %v2312 = vpop.f32.mrb[0].mxu0
        %v2313 = vadd.f32 0.0, %v2312
        %2314 = vdwg.mxu0
        %2315 = vmatprep.subr.mxu0 %v1535
        %2316 = vmatpush1.msra.mxu0 %v1534
        %2317 = vmatprep.subr.mxu0 %v1539
        %2318 = vmatpush1.msra.mxu0 %v1538
        %2319 = vmatprep.subr.mxu0 %v1543
        %2320 = vmatpush1.msra.mxu0 %v1542
        %2321 = vmatprep.subr.mxu0 %v1547
        %2322 = vmatpush1.msra.mxu0 %v1546
        %2323 = vmatprep.subr.mxu0 %v1551
        %2324 = vmatpush1.msra.mxu0 %v1550
        %2325 = vmatprep.subr.mxu0 %v1555
        %2326 = vmatpush1.msra.mxu0 %v1554
        %2327 = vmatprep.subr.mxu0 %v1559
        %2328 = vmatpush1.msra.mxu0 %v1558
        %2329 = vmatprep.subr.mxu0 %v1563
        %2330 = vmatpush1.msra.mxu0 %v1562
        %2331 = vmatprep.subr.mxu0 %v1567
        %2332 = vmatpush1.msra.mxu0 %v1566
        %2333 = vmatprep.subr.mxu0 %v1571
        %2334 = vmatpush1.msra.mxu0 %v1570
        %2335 = vmatprep.subr.mxu0 %v1575
        %2336 = vmatpush1.msra.mxu0 %v1574
        %2337 = vmatprep.subr.mxu0 %v1579
        %2338 = vmatpush1.msra.mxu0 %v1578
        %2339 = vmatprep.subr.mxu0 %v1583
        %2340 = vmatpush1.msra.mxu0 %v1582
        %2341 = vmatprep.subr.mxu0 %v1587
        %2342 = vmatpush1.msra.mxu0 %v1586
        %2343 = vmatprep.subr.mxu0 %v1591
        %2344 = vmatpush1.msra.mxu0 %v1590
        %2345 = vmatprep.subr.mxu0 %v1595
        %2346 = vmatpush1.msra.mxu0 %v1594
        %2347 = vmatprep.subr.mxu0 %v1599
        %2348 = vmatpush1.msra.mxu0 %v1598
        %2349 = vmatprep.subr.mxu0 %v1603
        %2350 = vmatpush1.msra.mxu0 %v1602
        %2351 = vmatprep.subr.mxu0 %v1607
        %2352 = vmatpush1.msra.mxu0 %v1606
        %2353 = vmatprep.subr.mxu0 %v1611
        %2354 = vmatpush1.msra.mxu0 %v1610
        %2355 = vmatprep.subr.mxu0 %v1615
        %2356 = vmatpush1.msra.mxu0 %v1614
        %2357 = vmatprep.subr.mxu0 %v1619
        %2358 = vmatpush1.msra.mxu0 %v1618
        %2359 = vmatprep.subr.mxu0 %v1623
        %2360 = vmatpush1.msra.mxu0 %v1622
        %2361 = vmatprep.subr.mxu0 %v1627
        %2362 = vmatpush1.msra.mxu0 %v1626
        %2363 = vmatprep.subr.mxu0 %v1631
        %2364 = vmatpush1.msra.mxu0 %v1630
        %2365 = vmatprep.subr.mxu0 %v1635
        %2366 = vmatpush1.msra.mxu0 %v1634
        %2367 = vmatprep.subr.mxu0 %v1639
        %2368 = vmatpush1.msra.mxu0 %v1638
        %2369 = vmatprep.subr.mxu0 %v1643
        %2370 = vmatpush1.msra.mxu0 %v1642
        %2371 = vmatprep.subr.mxu0 %v1647
        %2372 = vmatpush1.msra.mxu0 %v1646
        %2373 = vmatprep.subr.mxu0 %v1651
        %2374 = vmatpush1.msra.mxu0 %v1650
        %2375 = vmatprep.subr.mxu0 %v1655
        %2376 = vmatpush1.msra.mxu0 %v1654
        %2377 = vmatprep.subr.mxu0 %v1659
        %2378 = vmatpush1.msra.mxu0 %v1658
        %2379 = vmatprep.mubr.f32.mxu0 %v2100
        %2380 = vmatmul.mubr.f32.gmra.mrb[0].mxu0 %v2098
        %v2381 = vpop.f32.mrb[0].mxu0
        %v2382 = vadd.f32 %v2311, %v2381
        %v2383 = vpop.f32.mrb[0].mxu0
        %v2384 = vadd.f32 %v2313, %v2383
        %2385 = vdwg.mxu0
        %2386 = vmatprep.subr.mxu0 %v1409
        %2387 = vmatpush1.msra.mxu0 %v1408
        %2388 = vmatprep.subr.mxu0 %v1413
        %2389 = vmatpush1.msra.mxu0 %v1412
        %2390 = vmatprep.subr.mxu0 %v1417
        %2391 = vmatpush1.msra.mxu0 %v1416
        %2392 = vmatprep.subr.mxu0 %v1421
        %2393 = vmatpush1.msra.mxu0 %v1420
        %2394 = vmatprep.subr.mxu0 %v1425
        %2395 = vmatpush1.msra.mxu0 %v1424
        %2396 = vmatprep.subr.mxu0 %v1429
        %2397 = vmatpush1.msra.mxu0 %v1428
        %2398 = vmatprep.subr.mxu0 %v1433
        %2399 = vmatpush1.msra.mxu0 %v1432
        %2400 = vmatprep.subr.mxu0 %v1437
        %2401 = vmatpush1.msra.mxu0 %v1436
        %2402 = vmatprep.subr.mxu0 %v1441
        %2403 = vmatpush1.msra.mxu0 %v1440
        %2404 = vmatprep.subr.mxu0 %v1445
        %2405 = vmatpush1.msra.mxu0 %v1444
        %2406 = vmatprep.subr.mxu0 %v1449
        %2407 = vmatpush1.msra.mxu0 %v1448
        %2408 = vmatprep.subr.mxu0 %v1453
        %2409 = vmatpush1.msra.mxu0 %v1452
        %2410 = vmatprep.subr.mxu0 %v1457
        %2411 = vmatpush1.msra.mxu0 %v1456
        %2412 = vmatprep.subr.mxu0 %v1461
        %2413 = vmatpush1.msra.mxu0 %v1460
        %2414 = vmatprep.subr.mxu0 %v1465
        %2415 = vmatpush1.msra.mxu0 %v1464
        %2416 = vmatprep.subr.mxu0 %v1469
        %2417 = vmatpush1.msra.mxu0 %v1468
        %2418 = vmatprep.subr.mxu0 %v1473
        %2419 = vmatpush1.msra.mxu0 %v1472
        %2420 = vmatprep.subr.mxu0 %v1477
        %2421 = vmatpush1.msra.mxu0 %v1476
        %2422 = vmatprep.subr.mxu0 %v1481
        %2423 = vmatpush1.msra.mxu0 %v1480
        %2424 = vmatprep.subr.mxu0 %v1485
        %2425 = vmatpush1.msra.mxu0 %v1484
        %2426 = vmatprep.subr.mxu0 %v1489
        %2427 = vmatpush1.msra.mxu0 %v1488
        %2428 = vmatprep.subr.mxu0 %v1493
        %2429 = vmatpush1.msra.mxu0 %v1492
        %2430 = vmatprep.subr.mxu0 %v1497
        %2431 = vmatpush1.msra.mxu0 %v1496
        %2432 = vmatprep.subr.mxu0 %v1501
        %2433 = vmatpush1.msra.mxu0 %v1500
        %2434 = vmatprep.subr.mxu0 %v1505
        %2435 = vmatpush1.msra.mxu0 %v1504
        %2436 = vmatprep.subr.mxu0 %v1509
        %2437 = vmatpush1.msra.mxu0 %v1508
        %2438 = vmatprep.subr.mxu0 %v1513
        %2439 = vmatpush1.msra.mxu0 %v1512
        %2440 = vmatprep.subr.mxu0 %v1517
        %2441 = vmatpush1.msra.mxu0 %v1516
        %2442 = vmatprep.subr.mxu0 %v1521
        %2443 = vmatpush1.msra.mxu0 %v1520
        %2444 = vmatprep.subr.mxu0 %v1525
        %2445 = vmatpush1.msra.mxu0 %v1524
        %2446 = vmatprep.subr.mxu0 %v1529
        %2447 = vmatpush1.msra.mxu0 %v1528
        %2448 = vmatprep.subr.mxu0 %v1533
        %2449 = vmatpush1.msra.mxu0 %v1532
        %2450 = vmatprep.mubr.f32.mxu0 %v2029
        %2451 = vmatmul.mubr.f32.gmra.mrb[0].mxu0 %v2027
        %v2452 = vpop.f32.mrb[0].mxu0
        %v2453 = vadd.f32 0.0, %v2452
        %v2454 = vpop.f32.mrb[0].mxu0
        %v2455 = vadd.f32 0.0, %v2454
        %2456 = vdwg.mxu0
        %2457 = vmatprep.subr.mxu0 %v1537
        %2458 = vmatpush1.msra.mxu0 %v1536
        %2459 = vmatprep.subr.mxu0 %v1541
        %2460 = vmatpush1.msra.mxu0 %v1540
        %2461 = vmatprep.subr.mxu0 %v1545
        %2462 = vmatpush1.msra.mxu0 %v1544
        %2463 = vmatprep.subr.mxu0 %v1549
        %2464 = vmatpush1.msra.mxu0 %v1548
        %2465 = vmatprep.subr.mxu0 %v1553
        %2466 = vmatpush1.msra.mxu0 %v1552
        %2467 = vmatprep.subr.mxu0 %v1557
        %2468 = vmatpush1.msra.mxu0 %v1556
        %2469 = vmatprep.subr.mxu0 %v1561
        %2470 = vmatpush1.msra.mxu0 %v1560
        %2471 = vmatprep.subr.mxu0 %v1565
        %2472 = vmatpush1.msra.mxu0 %v1564
        %2473 = vmatprep.subr.mxu0 %v1569
        %2474 = vmatpush1.msra.mxu0 %v1568
        %2475 = vmatprep.subr.mxu0 %v1573
        %2476 = vmatpush1.msra.mxu0 %v1572
        %2477 = vmatprep.subr.mxu0 %v1577
        %2478 = vmatpush1.msra.mxu0 %v1576
        %2479 = vmatprep.subr.mxu0 %v1581
        %2480 = vmatpush1.msra.mxu0 %v1580
        %2481 = vmatprep.subr.mxu0 %v1585
        %2482 = vmatpush1.msra.mxu0 %v1584
        %2483 = vmatprep.subr.mxu0 %v1589
        %2484 = vmatpush1.msra.mxu0 %v1588
        %2485 = vmatprep.subr.mxu0 %v1593
        %2486 = vmatpush1.msra.mxu0 %v1592
        %2487 = vmatprep.subr.mxu0 %v1597
        %2488 = vmatpush1.msra.mxu0 %v1596
        %2489 = vmatprep.subr.mxu0 %v1601
        %2490 = vmatpush1.msra.mxu0 %v1600
        %2491 = vmatprep.subr.mxu0 %v1605
        %2492 = vmatpush1.msra.mxu0 %v1604
        %2493 = vmatprep.subr.mxu0 %v1609
        %2494 = vmatpush1.msra.mxu0 %v1608
        %2495 = vmatprep.subr.mxu0 %v1613
        %2496 = vmatpush1.msra.mxu0 %v1612
        %2497 = vmatprep.subr.mxu0 %v1617
        %2498 = vmatpush1.msra.mxu0 %v1616
        %2499 = vmatprep.subr.mxu0 %v1621
        %2500 = vmatpush1.msra.mxu0 %v1620
        %2501 = vmatprep.subr.mxu0 %v1625
        %2502 = vmatpush1.msra.mxu0 %v1624
        %2503 = vmatprep.subr.mxu0 %v1629
        %2504 = vmatpush1.msra.mxu0 %v1628
        %2505 = vmatprep.subr.mxu0 %v1633
        %2506 = vmatpush1.msra.mxu0 %v1632
        %2507 = vmatprep.subr.mxu0 %v1637
        %2508 = vmatpush1.msra.mxu0 %v1636
        %2509 = vmatprep.subr.mxu0 %v1641
        %2510 = vmatpush1.msra.mxu0 %v1640
        %2511 = vmatprep.subr.mxu0 %v1645
        %2512 = vmatpush1.msra.mxu0 %v1644
        %2513 = vmatprep.subr.mxu0 %v1649
        %2514 = vmatpush1.msra.mxu0 %v1648
        %2515 = vmatprep.subr.mxu0 %v1653
        %2516 = vmatpush1.msra.mxu0 %v1652
        %2517 = vmatprep.subr.mxu0 %v1657
        %2518 = vmatpush1.msra.mxu0 %v1656
        %2519 = vmatprep.subr.mxu0 %v1661
        %2520 = vmatpush1.msra.mxu0 %v1660
        %2521 = vmatprep.mubr.f32.mxu0 %v2100
        %2522 = vmatmul.mubr.f32.gmra.mrb[0].mxu0 %v2098
        %v2523 = vpop.f32.mrb[0].mxu0
        %v2524 = vadd.f32 %v2453, %v2523
        %v2525 = vpop.f32.mrb[0].mxu0
        %v2526 = vadd.f32 %v2455, %v2525
        %2527 = vdwg.mxu0
        %v2528 = vsub.f32 %v2027, %v2382
        %v2529 = vsub.f32 %v2029, %v2384
        %v2530 = vsub.f32 %v2098, %v2524
        %v2531 = vsub.f32 %v2100, %v2526
        %v2532 = vmul.f32 %v2528, %v2528
        %v2533 = vmul.f32 %v2529, %v2529
        %v2534 = vmul.f32 %v2530, %v2530
        %v2535 = vmul.f32 %v2531, %v2531
        %2536 = vmatprep.subr.mxu0 %v1407
        %2537 = vmatpush1.msra.mxu0 %v1406
        %2538 = vmatprep.subr.mxu0 %v1411
        %2539 = vmatpush1.msra.mxu0 %v1410
        %2540 = vmatprep.subr.mxu0 %v1415
        %2541 = vmatpush1.msra.mxu0 %v1414
        %2542 = vmatprep.subr.mxu0 %v1419
        %2543 = vmatpush1.msra.mxu0 %v1418
        %2544 = vmatprep.subr.mxu0 %v1423
        %2545 = vmatpush1.msra.mxu0 %v1422
        %2546 = vmatprep.subr.mxu0 %v1427
        %2547 = vmatpush1.msra.mxu0 %v1426
        %2548 = vmatprep.subr.mxu0 %v1431
        %2549 = vmatpush1.msra.mxu0 %v1430
        %2550 = vmatprep.subr.mxu0 %v1435
        %2551 = vmatpush1.msra.mxu0 %v1434
        %2552 = vmatprep.subr.mxu0 %v1439
        %2553 = vmatpush1.msra.mxu0 %v1438
        %2554 = vmatprep.subr.mxu0 %v1443
        %2555 = vmatpush1.msra.mxu0 %v1442
        %2556 = vmatprep.subr.mxu0 %v1447
        %2557 = vmatpush1.msra.mxu0 %v1446
        %2558 = vmatprep.subr.mxu0 %v1451
        %2559 = vmatpush1.msra.mxu0 %v1450
        %2560 = vmatprep.subr.mxu0 %v1455
        %2561 = vmatpush1.msra.mxu0 %v1454
        %2562 = vmatprep.subr.mxu0 %v1459
        %2563 = vmatpush1.msra.mxu0 %v1458
        %2564 = vmatprep.subr.mxu0 %v1463
        %2565 = vmatpush1.msra.mxu0 %v1462
        %2566 = vmatprep.subr.mxu0 %v1467
        %2567 = vmatpush1.msra.mxu0 %v1466
        %2568 = vmatprep.subr.mxu0 %v1471
        %2569 = vmatpush1.msra.mxu0 %v1470
        %2570 = vmatprep.subr.mxu0 %v1475
        %2571 = vmatpush1.msra.mxu0 %v1474
        %2572 = vmatprep.subr.mxu0 %v1479
        %2573 = vmatpush1.msra.mxu0 %v1478
        %2574 = vmatprep.subr.mxu0 %v1483
        %2575 = vmatpush1.msra.mxu0 %v1482
        %2576 = vmatprep.subr.mxu0 %v1487
        %2577 = vmatpush1.msra.mxu0 %v1486
        %2578 = vmatprep.subr.mxu0 %v1491
        %2579 = vmatpush1.msra.mxu0 %v1490
        %2580 = vmatprep.subr.mxu0 %v1495
        %2581 = vmatpush1.msra.mxu0 %v1494
        %2582 = vmatprep.subr.mxu0 %v1499
        %2583 = vmatpush1.msra.mxu0 %v1498
        %2584 = vmatprep.subr.mxu0 %v1503
        %2585 = vmatpush1.msra.mxu0 %v1502
        %2586 = vmatprep.subr.mxu0 %v1507
        %2587 = vmatpush1.msra.mxu0 %v1506
        %2588 = vmatprep.subr.mxu0 %v1511
        %2589 = vmatpush1.msra.mxu0 %v1510
        %2590 = vmatprep.subr.mxu0 %v1515
        %2591 = vmatpush1.msra.mxu0 %v1514
        %2592 = vmatprep.subr.mxu0 %v1519
        %2593 = vmatpush1.msra.mxu0 %v1518
        %2594 = vmatprep.subr.mxu0 %v1523
        %2595 = vmatpush1.msra.mxu0 %v1522
        %2596 = vmatprep.subr.mxu0 %v1527
        %2597 = vmatpush1.msra.mxu0 %v1526
        %2598 = vmatprep.subr.mxu0 %v1531
        %2599 = vmatpush1.msra.mxu0 %v1530
        %2600 = vmatprep.mubr.f32.mxu0 %v2533
        %2601 = vmatmul.mubr.f32.gmra.mrb[0].mxu0 %v2532
        %v2602 = vpop.f32.mrb[0].mxu0
        %v2603 = vadd.f32 1e-05, %v2602
        %v2604 = vpop.f32.mrb[0].mxu0
        %v2605 = vadd.f32 1e-05, %v2604
        %2606 = vdwg.mxu0
        %2607 = vmatprep.subr.mxu0 %v1535
        %2608 = vmatpush1.msra.mxu0 %v1534
        %2609 = vmatprep.subr.mxu0 %v1539
        %2610 = vmatpush1.msra.mxu0 %v1538
        %2611 = vmatprep.subr.mxu0 %v1543
        %2612 = vmatpush1.msra.mxu0 %v1542
        %2613 = vmatprep.subr.mxu0 %v1547
        %2614 = vmatpush1.msra.mxu0 %v1546
        %2615 = vmatprep.subr.mxu0 %v1551
        %2616 = vmatpush1.msra.mxu0 %v1550
        %2617 = vmatprep.subr.mxu0 %v1555
        %2618 = vmatpush1.msra.mxu0 %v1554
        %2619 = vmatprep.subr.mxu0 %v1559
        %2620 = vmatpush1.msra.mxu0 %v1558
        %2621 = vmatprep.subr.mxu0 %v1563
        %2622 = vmatpush1.msra.mxu0 %v1562
        %2623 = vmatprep.subr.mxu0 %v1567
        %2624 = vmatpush1.msra.mxu0 %v1566
        %2625 = vmatprep.subr.mxu0 %v1571
        %2626 = vmatpush1.msra.mxu0 %v1570
        %2627 = vmatprep.subr.mxu0 %v1575
        %2628 = vmatpush1.msra.mxu0 %v1574
        %2629 = vmatprep.subr.mxu0 %v1579
        %2630 = vmatpush1.msra.mxu0 %v1578
        %2631 = vmatprep.subr.mxu0 %v1583
        %2632 = vmatpush1.msra.mxu0 %v1582
        %2633 = vmatprep.subr.mxu0 %v1587
        %2634 = vmatpush1.msra.mxu0 %v1586
        %2635 = vmatprep.subr.mxu0 %v1591
        %2636 = vmatpush1.msra.mxu0 %v1590
        %2637 = vmatprep.subr.mxu0 %v1595
        %2638 = vmatpush1.msra.mxu0 %v1594
        %2639 = vmatprep.subr.mxu0 %v1599
        %2640 = vmatpush1.msra.mxu0 %v1598
        %2641 = vmatprep.subr.mxu0 %v1603
        %2642 = vmatpush1.msra.mxu0 %v1602
        %2643 = vmatprep.subr.mxu0 %v1607
        %2644 = vmatpush1.msra.mxu0 %v1606
        %2645 = vmatprep.subr.mxu0 %v1611
        %2646 = vmatpush1.msra.mxu0 %v1610
        %2647 = vmatprep.subr.mxu0 %v1615
        %2648 = vmatpush1.msra.mxu0 %v1614
        %2649 = vmatprep.subr.mxu0 %v1619
        %2650 = vmatpush1.msra.mxu0 %v1618
        %2651 = vmatprep.subr.mxu0 %v1623
        %2652 = vmatpush1.msra.mxu0 %v1622
        %2653 = vmatprep.subr.mxu0 %v1627
        %2654 = vmatpush1.msra.mxu0 %v1626
        %2655 = vmatprep.subr.mxu0 %v1631
        %2656 = vmatpush1.msra.mxu0 %v1630
        %2657 = vmatprep.subr.mxu0 %v1635
        %2658 = vmatpush1.msra.mxu0 %v1634
        %2659 = vmatprep.subr.mxu0 %v1639
        %2660 = vmatpush1.msra.mxu0 %v1638
        %2661 = vmatprep.subr.mxu0 %v1643
        %2662 = vmatpush1.msra.mxu0 %v1642
        %2663 = vmatprep.subr.mxu0 %v1647
        %2664 = vmatpush1.msra.mxu0 %v1646
        %2665 = vmatprep.subr.mxu0 %v1651
        %2666 = vmatpush1.msra.mxu0 %v1650
        %2667 = vmatprep.subr.mxu0 %v1655
        %2668 = vmatpush1.msra.mxu0 %v1654
        %2669 = vmatprep.subr.mxu0 %v1659
        %2670 = vmatpush1.msra.mxu0 %v1658
        %2671 = vmatprep.mubr.f32.mxu0 %v2535
        %2672 = vmatmul.mubr.f32.gmra.mrb[0].mxu0 %v2534
        %v2673 = vpop.f32.mrb[0].mxu0
        %v2674 = vadd.f32 %v2603, %v2673
        %v2675 = vpop.f32.mrb[0].mxu0
        %v2676 = vadd.f32 %v2605, %v2675
        %2677 = vdwg.mxu0
        %2678 = vmatprep.subr.mxu0 %v1409
        %2679 = vmatpush1.msra.mxu0 %v1408
        %2680 = vmatprep.subr.mxu0 %v1413
        %2681 = vmatpush1.msra.mxu0 %v1412
        %2682 = vmatprep.subr.mxu0 %v1417
        %2683 = vmatpush1.msra.mxu0 %v1416
        %2684 = vmatprep.subr.mxu0 %v1421
        %2685 = vmatpush1.msra.mxu0 %v1420
        %2686 = vmatprep.subr.mxu0 %v1425
        %2687 = vmatpush1.msra.mxu0 %v1424
        %2688 = vmatprep.subr.mxu0 %v1429
        %2689 = vmatpush1.msra.mxu0 %v1428
        %2690 = vmatprep.subr.mxu0 %v1433
        %2691 = vmatpush1.msra.mxu0 %v1432
        %2692 = vmatprep.subr.mxu0 %v1437
        %2693 = vmatpush1.msra.mxu0 %v1436
        %2694 = vmatprep.subr.mxu0 %v1441
        %2695 = vmatpush1.msra.mxu0 %v1440
        %2696 = vmatprep.subr.mxu0 %v1445
        %2697 = vmatpush1.msra.mxu0 %v1444
        %2698 = vmatprep.subr.mxu0 %v1449
        %2699 = vmatpush1.msra.mxu0 %v1448
        %2700 = vmatprep.subr.mxu0 %v1453
        %2701 = vmatpush1.msra.mxu0 %v1452
        %2702 = vmatprep.subr.mxu0 %v1457
        %2703 = vmatpush1.msra.mxu0 %v1456
        %2704 = vmatprep.subr.mxu0 %v1461
        %2705 = vmatpush1.msra.mxu0 %v1460
        %2706 = vmatprep.subr.mxu0 %v1465
        %2707 = vmatpush1.msra.mxu0 %v1464
        %2708 = vmatprep.subr.mxu0 %v1469
        %2709 = vmatpush1.msra.mxu0 %v1468
        %2710 = vmatprep.subr.mxu0 %v1473
        %2711 = vmatpush1.msra.mxu0 %v1472
        %2712 = vmatprep.subr.mxu0 %v1477
        %2713 = vmatpush1.msra.mxu0 %v1476
        %2714 = vmatprep.subr.mxu0 %v1481
        %2715 = vmatpush1.msra.mxu0 %v1480
        %2716 = vmatprep.subr.mxu0 %v1485
        %2717 = vmatpush1.msra.mxu0 %v1484
        %2718 = vmatprep.subr.mxu0 %v1489
        %2719 = vmatpush1.msra.mxu0 %v1488
        %2720 = vmatprep.subr.mxu0 %v1493
        %2721 = vmatpush1.msra.mxu0 %v1492
        %2722 = vmatprep.subr.mxu0 %v1497
        %2723 = vmatpush1.msra.mxu0 %v1496
        %2724 = vmatprep.subr.mxu0 %v1501
        %2725 = vmatpush1.msra.mxu0 %v1500
        %2726 = vmatprep.subr.mxu0 %v1505
        %2727 = vmatpush1.msra.mxu0 %v1504
        %2728 = vmatprep.subr.mxu0 %v1509
        %2729 = vmatpush1.msra.mxu0 %v1508
        %2730 = vmatprep.subr.mxu0 %v1513
        %2731 = vmatpush1.msra.mxu0 %v1512
        %2732 = vmatprep.subr.mxu0 %v1517
        %2733 = vmatpush1.msra.mxu0 %v1516
        %2734 = vmatprep.subr.mxu0 %v1521
        %2735 = vmatpush1.msra.mxu0 %v1520
        %2736 = vmatprep.subr.mxu0 %v1525
        %2737 = vmatpush1.msra.mxu0 %v1524
        %2738 = vmatprep.subr.mxu0 %v1529
        %2739 = vmatpush1.msra.mxu0 %v1528
        %2740 = vmatprep.subr.mxu0 %v1533
        %2741 = vmatpush1.msra.mxu0 %v1532
        %2742 = vmatprep.mubr.f32.mxu0 %v2533
        %2743 = vmatmul.mubr.f32.gmra.mrb[0].mxu0 %v2532
        %v2744 = vpop.f32.mrb[0].mxu0
        %v2745 = vadd.f32 1e-05, %v2744
        %v2746 = vpop.f32.mrb[0].mxu0
        %v2747 = vadd.f32 1e-05, %v2746
        %2748 = vdwg.mxu0
        %2749 = vmatprep.subr.mxu0 %v1537
        %2750 = vmatpush1.msra.mxu0 %v1536
        %2751 = vmatprep.subr.mxu0 %v1541
        %2752 = vmatpush1.msra.mxu0 %v1540
        %2753 = vmatprep.subr.mxu0 %v1545
        %2754 = vmatpush1.msra.mxu0 %v1544
        %2755 = vmatprep.subr.mxu0 %v1549
        %2756 = vmatpush1.msra.mxu0 %v1548
        %2757 = vmatprep.subr.mxu0 %v1553
        %2758 = vmatpush1.msra.mxu0 %v1552
        %2759 = vmatprep.subr.mxu0 %v1557
        %2760 = vmatpush1.msra.mxu0 %v1556
        %2761 = vmatprep.subr.mxu0 %v1561
        %2762 = vmatpush1.msra.mxu0 %v1560
        %2763 = vmatprep.subr.mxu0 %v1565
        %2764 = vmatpush1.msra.mxu0 %v1564
        %2765 = vmatprep.subr.mxu0 %v1569
        %2766 = vmatpush1.msra.mxu0 %v1568
        %2767 = vmatprep.subr.mxu0 %v1573
        %2768 = vmatpush1.msra.mxu0 %v1572
        %2769 = vmatprep.subr.mxu0 %v1577
        %2770 = vmatpush1.msra.mxu0 %v1576
        %2771 = vmatprep.subr.mxu0 %v1581
        %2772 = vmatpush1.msra.mxu0 %v1580
        %2773 = vmatprep.subr.mxu0 %v1585
        %2774 = vmatpush1.msra.mxu0 %v1584
        %2775 = vmatprep.subr.mxu0 %v1589
        %2776 = vmatpush1.msra.mxu0 %v1588
        %2777 = vmatprep.subr.mxu0 %v1593
        %2778 = vmatpush1.msra.mxu0 %v1592
        %2779 = vmatprep.subr.mxu0 %v1597
        %2780 = vmatpush1.msra.mxu0 %v1596
        %2781 = vmatprep.subr.mxu0 %v1601
        %2782 = vmatpush1.msra.mxu0 %v1600
        %2783 = vmatprep.subr.mxu0 %v1605
        %2784 = vmatpush1.msra.mxu0 %v1604
        %2785 = vmatprep.subr.mxu0 %v1609
        %2786 = vmatpush1.msra.mxu0 %v1608
        %2787 = vmatprep.subr.mxu0 %v1613
        %2788 = vmatpush1.msra.mxu0 %v1612
        %2789 = vmatprep.subr.mxu0 %v1617
        %2790 = vmatpush1.msra.mxu0 %v1616
        %2791 = vmatprep.subr.mxu0 %v1621
        %2792 = vmatpush1.msra.mxu0 %v1620
        %2793 = vmatprep.subr.mxu0 %v1625
        %2794 = vmatpush1.msra.mxu0 %v1624
        %2795 = vmatprep.subr.mxu0 %v1629
        %2796 = vmatpush1.msra.mxu0 %v1628
        %2797 = vmatprep.subr.mxu0 %v1633
        %2798 = vmatpush1.msra.mxu0 %v1632
        %2799 = vmatprep.subr.mxu0 %v1637
        %2800 = vmatpush1.msra.mxu0 %v1636
        %2801 = vmatprep.subr.mxu0 %v1641
        %2802 = vmatpush1.msra.mxu0 %v1640
        %2803 = vmatprep.subr.mxu0 %v1645
        %2804 = vmatpush1.msra.mxu0 %v1644
        %2805 = vmatprep.subr.mxu0 %v1649
        %2806 = vmatpush1.msra.mxu0 %v1648
        %2807 = vmatprep.subr.mxu0 %v1653
        %2808 = vmatpush1.msra.mxu0 %v1652
        %2809 = vmatprep.subr.mxu0 %v1657
        %2810 = vmatpush1.msra.mxu0 %v1656
        %2811 = vmatprep.subr.mxu0 %v1661
        %2812 = vmatpush1.msra.mxu0 %v1660
        %2813 = vmatprep.mubr.f32.mxu0 %v2535
        %2814 = vmatmul.mubr.f32.gmra.mrb[0].mxu0 %v2534
        %v2815 = vpop.f32.mrb[0].mxu0
        %v2816 = vadd.f32 %v2745, %v2815
        %v2817 = vpop.f32.mrb[0].mxu0
        %v2818 = vadd.f32 %v2747, %v2817
        %2819 = vdwg.mxu0
        %v2820 = vrsqrt.pop %v2674
        %v2821 = vrsqrt.pop %v2676
        %v2822 = vrsqrt.pop %v2816
        %v2823 = vrsqrt.pop %v2818
        %v2824 = vmul.f32 %v2528, %v2820
        %v2825 = vmul.f32 %v2529, %v2821
        %v2826 = vmul.f32 %v2530, %v2822
        %v2827 = vmul.f32 %v2531, %v2823
        %vm2828 = vcmp.ge.f32.partialorder %v2824, 0.0
        %vm2829 = vcmp.ge.f32.partialorder %v2825, 0.0
        %vm2830 = vcmp.ge.f32.partialorder %v2826, 0.0
        %vm2831 = vcmp.ge.f32.partialorder %v2827, 0.0
        %v2832 = vstv %s1405
        %v2833 = vmul.f32 %v2832, %v2824
        %v2834 = vmul.f32 %v2832, %v2825
        %v2835 = vmul.f32 %v2832, %v2826
        %v2836 = vmul.f32 %v2832, %v2827
        %v2837 = vsel %vm2828, %v2824, %v2833
        %v2838 = vsel %vm2829, %v2825, %v2834
        %v2839 = vsel %vm2830, %v2826, %v2835
        %v2840 = vsel %vm2831, %v2827, %v2836
        %v2841 = vld [vmem:[#allocation12] sm:$0xff]
        %v2842 = vld [vmem:[#allocation12 + $0x8] sm:$0xff]
        %v2843 = vld [vmem:[#allocation12 + $0x10] sm:$0xff]
        %v2844 = vld [vmem:[#allocation12 + $0x18] sm:$0xff]
        %v2845 = vld [vmem:[#allocation12 + $0x20] sm:$0xff]
        %v2846 = vld [vmem:[#allocation12 + $0x28] sm:$0xff]
        %v2847 = vld [vmem:[#allocation12 + $0x30] sm:$0xff]
        %v2848 = vld [vmem:[#allocation12 + $0x38] sm:$0xff]
        %v2849 = vld [vmem:[#allocation12 + $0x40] sm:$0xff]
        %v2850 = vld [vmem:[#allocation12 + $0x48] sm:$0xff]
        %v2851 = vld [vmem:[#allocation12 + $0x50] sm:$0xff]
        %v2852 = vld [vmem:[#allocation12 + $0x58] sm:$0xff]
        %v2853 = vld [vmem:[#allocation12 + $0x60] sm:$0xff]
        %v2854 = vld [vmem:[#allocation12 + $0x68] sm:$0xff]
        %v2855 = vld [vmem:[#allocation12 + $0x70] sm:$0xff]
        %v2856 = vld [vmem:[#allocation12 + $0x78] sm:$0xff]
        %v2857 = vld [vmem:[#allocation12 + $0x80] sm:$0xff]
        %v2858 = vld [vmem:[#allocation12 + $0x88] sm:$0xff]
        %v2859 = vld [vmem:[#allocation12 + $0x90] sm:$0xff]
        %v2860 = vld [vmem:[#allocation12 + $0x98] sm:$0xff]
        %v2861 = vld [vmem:[#allocation12 + $0xa0] sm:$0xff]
        %v2862 = vld [vmem:[#allocation12 + $0xa8] sm:$0xff]
        %v2863 = vld [vmem:[#allocation12 + $0xb0] sm:$0xff]
        %v2864 = vld [vmem:[#allocation12 + $0xb8] sm:$0xff]
        %v2865 = vld [vmem:[#allocation12 + $0xc0] sm:$0xff]
        %v2866 = vld [vmem:[#allocation12 + $0xc8] sm:$0xff]
        %v2867 = vld [vmem:[#allocation12 + $0xd0] sm:$0xff]
        %v2868 = vld [vmem:[#allocation12 + $0xd8] sm:$0xff]
        %v2869 = vld [vmem:[#allocation12 + $0xe0] sm:$0xff]
        %v2870 = vld [vmem:[#allocation12 + $0xe8] sm:$0xff]
        %v2871 = vld [vmem:[#allocation12 + $0xf0] sm:$0xff]
        %v2872 = vld [vmem:[#allocation12 + $0xf8] sm:$0xff]
        %v2873 = vld [vmem:[#allocation12 + $0x100] sm:$0xff]
        %v2874 = vld [vmem:[#allocation12 + $0x108] sm:$0xff]
        %v2875 = vld [vmem:[#allocation12 + $0x110] sm:$0xff]
        %v2876 = vld [vmem:[#allocation12 + $0x118] sm:$0xff]
        %v2877 = vld [vmem:[#allocation12 + $0x120] sm:$0xff]
        %v2878 = vld [vmem:[#allocation12 + $0x128] sm:$0xff]
        %v2879 = vld [vmem:[#allocation12 + $0x130] sm:$0xff]
        %v2880 = vld [vmem:[#allocation12 + $0x138] sm:$0xff]
        %v2881 = vld [vmem:[#allocation12 + $0x140] sm:$0xff]
        %v2882 = vld [vmem:[#allocation12 + $0x148] sm:$0xff]
        %v2883 = vld [vmem:[#allocation12 + $0x150] sm:$0xff]
        %v2884 = vld [vmem:[#allocation12 + $0x158] sm:$0xff]
        %v2885 = vld [vmem:[#allocation12 + $0x160] sm:$0xff]
        %v2886 = vld [vmem:[#allocation12 + $0x168] sm:$0xff]
        %v2887 = vld [vmem:[#allocation12 + $0x170] sm:$0xff]
        %v2888 = vld [vmem:[#allocation12 + $0x178] sm:$0xff]
        %v2889 = vld [vmem:[#allocation12 + $0x180] sm:$0xff]
        %v2890 = vld [vmem:[#allocation12 + $0x188] sm:$0xff]
        %v2891 = vld [vmem:[#allocation12 + $0x190] sm:$0xff]
        %v2892 = vld [vmem:[#allocation12 + $0x198] sm:$0xff]
        %v2893 = vld [vmem:[#allocation12 + $0x1a0] sm:$0xff]
        %v2894 = vld [vmem:[#allocation12 + $0x1a8] sm:$0xff]
        %v2895 = vld [vmem:[#allocation12 + $0x1b0] sm:$0xff]
        %v2896 = vld [vmem:[#allocation12 + $0x1b8] sm:$0xff]
        %v2897 = vld [vmem:[#allocation12 + $0x1c0] sm:$0xff]
        %v2898 = vld [vmem:[#allocation12 + $0x1c8] sm:$0xff]
        %v2899 = vld [vmem:[#allocation12 + $0x1d0] sm:$0xff]
        %v2900 = vld [vmem:[#allocation12 + $0x1d8] sm:$0xff]
        %v2901 = vld [vmem:[#allocation12 + $0x1e0] sm:$0xff]
        %v2902 = vld [vmem:[#allocation12 + $0x1e8] sm:$0xff]
        %v2903 = vld [vmem:[#allocation12 + $0x1f0] sm:$0xff]
        %v2904 = vld [vmem:[#allocation12 + $0x1f8] sm:$0xff]
        %v2905 = vld [vmem:[#allocation12 + $0x200] sm:$0xff]
        %v2906 = vld [vmem:[#allocation12 + $0x208] sm:$0xff]
        %v2907 = vld [vmem:[#allocation12 + $0x210] sm:$0xff]
        %v2908 = vld [vmem:[#allocation12 + $0x218] sm:$0xff]
        %v2909 = vld [vmem:[#allocation12 + $0x220] sm:$0xff]
        %v2910 = vld [vmem:[#allocation12 + $0x228] sm:$0xff]
        %v2911 = vld [vmem:[#allocation12 + $0x230] sm:$0xff]
        %v2912 = vld [vmem:[#allocation12 + $0x238] sm:$0xff]
        %v2913 = vld [vmem:[#allocation12 + $0x240] sm:$0xff]
        %v2914 = vld [vmem:[#allocation12 + $0x248] sm:$0xff]
        %v2915 = vld [vmem:[#allocation12 + $0x250] sm:$0xff]
        %v2916 = vld [vmem:[#allocation12 + $0x258] sm:$0xff]
        %v2917 = vld [vmem:[#allocation12 + $0x260] sm:$0xff]
        %v2918 = vld [vmem:[#allocation12 + $0x268] sm:$0xff]
        %v2919 = vld [vmem:[#allocation12 + $0x270] sm:$0xff]
        %v2920 = vld [vmem:[#allocation12 + $0x278] sm:$0xff]
        %v2921 = vld [vmem:[#allocation12 + $0x280] sm:$0xff]
        %v2922 = vld [vmem:[#allocation12 + $0x288] sm:$0xff]
        %v2923 = vld [vmem:[#allocation12 + $0x290] sm:$0xff]
        %v2924 = vld [vmem:[#allocation12 + $0x298] sm:$0xff]
        %v2925 = vld [vmem:[#allocation12 + $0x2a0] sm:$0xff]
        %v2926 = vld [vmem:[#allocation12 + $0x2a8] sm:$0xff]
        %v2927 = vld [vmem:[#allocation12 + $0x2b0] sm:$0xff]
        %v2928 = vld [vmem:[#allocation12 + $0x2b8] sm:$0xff]
        %v2929 = vld [vmem:[#allocation12 + $0x2c0] sm:$0xff]
        %v2930 = vld [vmem:[#allocation12 + $0x2c8] sm:$0xff]
        %v2931 = vld [vmem:[#allocation12 + $0x2d0] sm:$0xff]
        %v2932 = vld [vmem:[#allocation12 + $0x2d8] sm:$0xff]
        %v2933 = vld [vmem:[#allocation12 + $0x2e0] sm:$0xff]
        %v2934 = vld [vmem:[#allocation12 + $0x2e8] sm:$0xff]
        %v2935 = vld [vmem:[#allocation12 + $0x2f0] sm:$0xff]
        %v2936 = vld [vmem:[#allocation12 + $0x2f8] sm:$0xff]
        %v2937 = vld [vmem:[#allocation12 + $0x300] sm:$0xff]
        %v2938 = vld [vmem:[#allocation12 + $0x308] sm:$0xff]
        %v2939 = vld [vmem:[#allocation12 + $0x310] sm:$0xff]
        %v2940 = vld [vmem:[#allocation12 + $0x318] sm:$0xff]
        %v2941 = vld [vmem:[#allocation12 + $0x320] sm:$0xff]
        %v2942 = vld [vmem:[#allocation12 + $0x328] sm:$0xff]
        %v2943 = vld [vmem:[#allocation12 + $0x330] sm:$0xff]
        %v2944 = vld [vmem:[#allocation12 + $0x338] sm:$0xff]
        %v2945 = vld [vmem:[#allocation12 + $0x340] sm:$0xff]
        %v2946 = vld [vmem:[#allocation12 + $0x348] sm:$0xff]
        %v2947 = vld [vmem:[#allocation12 + $0x350] sm:$0xff]
        %v2948 = vld [vmem:[#allocation12 + $0x358] sm:$0xff]
        %v2949 = vld [vmem:[#allocation12 + $0x360] sm:$0xff]
        %v2950 = vld [vmem:[#allocation12 + $0x368] sm:$0xff]
        %v2951 = vld [vmem:[#allocation12 + $0x370] sm:$0xff]
        %v2952 = vld [vmem:[#allocation12 + $0x378] sm:$0xff]
        %v2953 = vld [vmem:[#allocation12 + $0x380] sm:$0xff]
        %v2954 = vld [vmem:[#allocation12 + $0x388] sm:$0xff]
        %v2955 = vld [vmem:[#allocation12 + $0x390] sm:$0xff]
        %v2956 = vld [vmem:[#allocation12 + $0x398] sm:$0xff]
        %v2957 = vld [vmem:[#allocation12 + $0x3a0] sm:$0xff]
        %v2958 = vld [vmem:[#allocation12 + $0x3a8] sm:$0xff]
        %v2959 = vld [vmem:[#allocation12 + $0x3b0] sm:$0xff]
        %v2960 = vld [vmem:[#allocation12 + $0x3b8] sm:$0xff]
        %v2961 = vld [vmem:[#allocation12 + $0x3c0] sm:$0xff]
        %v2962 = vld [vmem:[#allocation12 + $0x3c8] sm:$0xff]
        %v2963 = vld [vmem:[#allocation12 + $0x3d0] sm:$0xff]
        %v2964 = vld [vmem:[#allocation12 + $0x3d8] sm:$0xff]
        %v2965 = vld [vmem:[#allocation12 + $0x3e0] sm:$0xff]
        %v2966 = vld [vmem:[#allocation12 + $0x3e8] sm:$0xff]
        %v2967 = vld [vmem:[#allocation12 + $0x3f0] sm:$0xff]
        %v2968 = vld [vmem:[#allocation12 + $0x3f8] sm:$0xff]
        %v2969 = vld [vmem:[#allocation12 + $0x400] sm:$0xff]
        %v2970 = vld [vmem:[#allocation12 + $0x408] sm:$0xff]
        %v2971 = vld [vmem:[#allocation12 + $0x410] sm:$0xff]
        %v2972 = vld [vmem:[#allocation12 + $0x418] sm:$0xff]
        %v2973 = vld [vmem:[#allocation12 + $0x420] sm:$0xff]
        %v2974 = vld [vmem:[#allocation12 + $0x428] sm:$0xff]
        %v2975 = vld [vmem:[#allocation12 + $0x430] sm:$0xff]
        %v2976 = vld [vmem:[#allocation12 + $0x438] sm:$0xff]
        %v2977 = vld [vmem:[#allocation12 + $0x440] sm:$0xff]
        %v2978 = vld [vmem:[#allocation12 + $0x448] sm:$0xff]
        %v2979 = vld [vmem:[#allocation12 + $0x450] sm:$0xff]
        %v2980 = vld [vmem:[#allocation12 + $0x458] sm:$0xff]
        %v2981 = vld [vmem:[#allocation12 + $0x460] sm:$0xff]
        %v2982 = vld [vmem:[#allocation12 + $0x468] sm:$0xff]
        %v2983 = vld [vmem:[#allocation12 + $0x470] sm:$0xff]
        %v2984 = vld [vmem:[#allocation12 + $0x478] sm:$0xff]
        %v2985 = vld [vmem:[#allocation12 + $0x480] sm:$0xff]
        %v2986 = vld [vmem:[#allocation12 + $0x488] sm:$0xff]
        %v2987 = vld [vmem:[#allocation12 + $0x490] sm:$0xff]
        %v2988 = vld [vmem:[#allocation12 + $0x498] sm:$0xff]
        %v2989 = vld [vmem:[#allocation12 + $0x4a0] sm:$0xff]
        %v2990 = vld [vmem:[#allocation12 + $0x4a8] sm:$0xff]
        %v2991 = vld [vmem:[#allocation12 + $0x4b0] sm:$0xff]
        %v2992 = vld [vmem:[#allocation12 + $0x4b8] sm:$0xff]
        %v2993 = vld [vmem:[#allocation12 + $0x4c0] sm:$0xff]
        %v2994 = vld [vmem:[#allocation12 + $0x4c8] sm:$0xff]
        %v2995 = vld [vmem:[#allocation12 + $0x4d0] sm:$0xff]
        %v2996 = vld [vmem:[#allocation12 + $0x4d8] sm:$0xff]
        %v2997 = vld [vmem:[#allocation12 + $0x4e0] sm:$0xff]
        %v2998 = vld [vmem:[#allocation12 + $0x4e8] sm:$0xff]
        %v2999 = vld [vmem:[#allocation12 + $0x4f0] sm:$0xff]
        %v3000 = vld [vmem:[#allocation12 + $0x4f8] sm:$0xff]
        %v3001 = vld [vmem:[#allocation12 + $0x500] sm:$0xff]
        %v3002 = vld [vmem:[#allocation12 + $0x508] sm:$0xff]
        %v3003 = vld [vmem:[#allocation12 + $0x510] sm:$0xff]
        %v3004 = vld [vmem:[#allocation12 + $0x518] sm:$0xff]
        %v3005 = vld [vmem:[#allocation12 + $0x520] sm:$0xff]
        %v3006 = vld [vmem:[#allocation12 + $0x528] sm:$0xff]
        %v3007 = vld [vmem:[#allocation12 + $0x530] sm:$0xff]
        %v3008 = vld [vmem:[#allocation12 + $0x538] sm:$0xff]
        %v3009 = vld [vmem:[#allocation12 + $0x540] sm:$0xff]
        %v3010 = vld [vmem:[#allocation12 + $0x548] sm:$0xff]
        %v3011 = vld [vmem:[#allocation12 + $0x550] sm:$0xff]
        %v3012 = vld [vmem:[#allocation12 + $0x558] sm:$0xff]
        %v3013 = vld [vmem:[#allocation12 + $0x560] sm:$0xff]
        %v3014 = vld [vmem:[#allocation12 + $0x568] sm:$0xff]
        %v3015 = vld [vmem:[#allocation12 + $0x570] sm:$0xff]
        %v3016 = vld [vmem:[#allocation12 + $0x578] sm:$0xff]
        %v3017 = vld [vmem:[#allocation12 + $0x580] sm:$0xff]
        %v3018 = vld [vmem:[#allocation12 + $0x588] sm:$0xff]
        %v3019 = vld [vmem:[#allocation12 + $0x590] sm:$0xff]
        %v3020 = vld [vmem:[#allocation12 + $0x598] sm:$0xff]
        %v3021 = vld [vmem:[#allocation12 + $0x5a0] sm:$0xff]
        %v3022 = vld [vmem:[#allocation12 + $0x5a8] sm:$0xff]
        %v3023 = vld [vmem:[#allocation12 + $0x5b0] sm:$0xff]
        %v3024 = vld [vmem:[#allocation12 + $0x5b8] sm:$0xff]
        %v3025 = vld [vmem:[#allocation12 + $0x5c0] sm:$0xff]
        %v3026 = vld [vmem:[#allocation12 + $0x5c8] sm:$0xff]
        %v3027 = vld [vmem:[#allocation12 + $0x5d0] sm:$0xff]
        %v3028 = vld [vmem:[#allocation12 + $0x5d8] sm:$0xff]
        %v3029 = vld [vmem:[#allocation12 + $0x5e0] sm:$0xff]
        %v3030 = vld [vmem:[#allocation12 + $0x5e8] sm:$0xff]
        %v3031 = vld [vmem:[#allocation12 + $0x5f0] sm:$0xff]
        %v3032 = vld [vmem:[#allocation12 + $0x5f8] sm:$0xff]
        %v3033 = vld [vmem:[#allocation12 + $0x600] sm:$0xff]
        %v3034 = vld [vmem:[#allocation12 + $0x608] sm:$0xff]
        %v3035 = vld [vmem:[#allocation12 + $0x610] sm:$0xff]
        %v3036 = vld [vmem:[#allocation12 + $0x618] sm:$0xff]
        %v3037 = vld [vmem:[#allocation12 + $0x620] sm:$0xff]
        %v3038 = vld [vmem:[#allocation12 + $0x628] sm:$0xff]
        %v3039 = vld [vmem:[#allocation12 + $0x630] sm:$0xff]
        %v3040 = vld [vmem:[#allocation12 + $0x638] sm:$0xff]
        %v3041 = vld [vmem:[#allocation12 + $0x640] sm:$0xff]
        %v3042 = vld [vmem:[#allocation12 + $0x648] sm:$0xff]
        %v3043 = vld [vmem:[#allocation12 + $0x650] sm:$0xff]
        %v3044 = vld [vmem:[#allocation12 + $0x658] sm:$0xff]
        %v3045 = vld [vmem:[#allocation12 + $0x660] sm:$0xff]
        %v3046 = vld [vmem:[#allocation12 + $0x668] sm:$0xff]
        %v3047 = vld [vmem:[#allocation12 + $0x670] sm:$0xff]
        %v3048 = vld [vmem:[#allocation12 + $0x678] sm:$0xff]
        %v3049 = vld [vmem:[#allocation12 + $0x680] sm:$0xff]
        %v3050 = vld [vmem:[#allocation12 + $0x688] sm:$0xff]
        %v3051 = vld [vmem:[#allocation12 + $0x690] sm:$0xff]
        %v3052 = vld [vmem:[#allocation12 + $0x698] sm:$0xff]
        %v3053 = vld [vmem:[#allocation12 + $0x6a0] sm:$0xff]
        %v3054 = vld [vmem:[#allocation12 + $0x6a8] sm:$0xff]
        %v3055 = vld [vmem:[#allocation12 + $0x6b0] sm:$0xff]
        %v3056 = vld [vmem:[#allocation12 + $0x6b8] sm:$0xff]
        %v3057 = vld [vmem:[#allocation12 + $0x6c0] sm:$0xff]
        %v3058 = vld [vmem:[#allocation12 + $0x6c8] sm:$0xff]
        %v3059 = vld [vmem:[#allocation12 + $0x6d0] sm:$0xff]
        %v3060 = vld [vmem:[#allocation12 + $0x6d8] sm:$0xff]
        %v3061 = vld [vmem:[#allocation12 + $0x6e0] sm:$0xff]
        %v3062 = vld [vmem:[#allocation12 + $0x6e8] sm:$0xff]
        %v3063 = vld [vmem:[#allocation12 + $0x6f0] sm:$0xff]
        %v3064 = vld [vmem:[#allocation12 + $0x6f8] sm:$0xff]
        %v3065 = vld [vmem:[#allocation12 + $0x700] sm:$0xff]
        %v3066 = vld [vmem:[#allocation12 + $0x708] sm:$0xff]
        %v3067 = vld [vmem:[#allocation12 + $0x710] sm:$0xff]
        %v3068 = vld [vmem:[#allocation12 + $0x718] sm:$0xff]
        %v3069 = vld [vmem:[#allocation12 + $0x720] sm:$0xff]
        %v3070 = vld [vmem:[#allocation12 + $0x728] sm:$0xff]
        %v3071 = vld [vmem:[#allocation12 + $0x730] sm:$0xff]
        %v3072 = vld [vmem:[#allocation12 + $0x738] sm:$0xff]
        %v3073 = vld [vmem:[#allocation12 + $0x740] sm:$0xff]
        %v3074 = vld [vmem:[#allocation12 + $0x748] sm:$0xff]
        %v3075 = vld [vmem:[#allocation12 + $0x750] sm:$0xff]
        %v3076 = vld [vmem:[#allocation12 + $0x758] sm:$0xff]
        %v3077 = vld [vmem:[#allocation12 + $0x760] sm:$0xff]
        %v3078 = vld [vmem:[#allocation12 + $0x768] sm:$0xff]
        %v3079 = vld [vmem:[#allocation12 + $0x770] sm:$0xff]
        %v3080 = vld [vmem:[#allocation12 + $0x778] sm:$0xff]
        %v3081 = vld [vmem:[#allocation12 + $0x780] sm:$0xff]
        %v3082 = vld [vmem:[#allocation12 + $0x788] sm:$0xff]
        %v3083 = vld [vmem:[#allocation12 + $0x790] sm:$0xff]
        %v3084 = vld [vmem:[#allocation12 + $0x798] sm:$0xff]
        %v3085 = vld [vmem:[#allocation12 + $0x7a0] sm:$0xff]
        %v3086 = vld [vmem:[#allocation12 + $0x7a8] sm:$0xff]
        %v3087 = vld [vmem:[#allocation12 + $0x7b0] sm:$0xff]
        %v3088 = vld [vmem:[#allocation12 + $0x7b8] sm:$0xff]
        %v3089 = vld [vmem:[#allocation12 + $0x7c0] sm:$0xff]
        %v3090 = vld [vmem:[#allocation12 + $0x7c8] sm:$0xff]
        %v3091 = vld [vmem:[#allocation12 + $0x7d0] sm:$0xff]
        %v3092 = vld [vmem:[#allocation12 + $0x7d8] sm:$0xff]
        %v3093 = vld [vmem:[#allocation12 + $0x7e0] sm:$0xff]
        %v3094 = vld [vmem:[#allocation12 + $0x7e8] sm:$0xff]
        %v3095 = vld [vmem:[#allocation12 + $0x7f0] sm:$0xff]
        %v3096 = vld [vmem:[#allocation12 + $0x7f8] sm:$0xff]
        %v3097 = vld [vmem:[%s11] sm:$0xf]
        %v3099 = vlaneseq
        %v3100 = vshrl.u32 %v3099, 7
        %v3101 = vsub.s32 0, %v3100
        %v3102 = vrot.slane %v3097, %v3101
        %v3103 = vlaneseq
        %v3104 = vshrl.u32 %v3103, 7
        %v3105 = vsub.s32 1, %v3104
        %v3106 = vrot.slane %v3097, %v3105
        %v3107 = vlaneseq
        %v3108 = vshrl.u32 %v3107, 7
        %v3109 = vsub.s32 2, %v3108
        %v3110 = vrot.slane %v3097, %v3109
        %v3111 = vlaneseq
        %v3112 = vshrl.u32 %v3111, 7
        %v3113 = vsub.s32 3, %v3112
        %v3114 = vrot.slane %v3097, %v3113
        %3119 = vmatprep.subr.mxu0 %v2842
        %3120 = vmatpush1.msra.mxu0 %v2841
        %3121 = vmatprep.subr.mxu0 %v2846
        %3122 = vmatpush1.msra.mxu0 %v2845
        %3123 = vmatprep.subr.mxu0 %v2850
        %3124 = vmatpush1.msra.mxu0 %v2849
        %3125 = vmatprep.subr.mxu0 %v2854
        %3126 = vmatpush1.msra.mxu0 %v2853
        %3127 = vmatprep.subr.mxu0 %v2858
        %3128 = vmatpush1.msra.mxu0 %v2857
        %3129 = vmatprep.subr.mxu0 %v2862
        %3130 = vmatpush1.msra.mxu0 %v2861
        %3131 = vmatprep.subr.mxu0 %v2866
        %3132 = vmatpush1.msra.mxu0 %v2865
        %3133 = vmatprep.subr.mxu0 %v2870
        %3134 = vmatpush1.msra.mxu0 %v2869
        %3135 = vmatprep.subr.mxu0 %v2874
        %3136 = vmatpush1.msra.mxu0 %v2873
        %3137 = vmatprep.subr.mxu0 %v2878
        %3138 = vmatpush1.msra.mxu0 %v2877
        %3139 = vmatprep.subr.mxu0 %v2882
        %3140 = vmatpush1.msra.mxu0 %v2881
        %3141 = vmatprep.subr.mxu0 %v2886
        %3142 = vmatpush1.msra.mxu0 %v2885
        %3143 = vmatprep.subr.mxu0 %v2890
        %3144 = vmatpush1.msra.mxu0 %v2889
        %3145 = vmatprep.subr.mxu0 %v2894
        %3146 = vmatpush1.msra.mxu0 %v2893
        %3147 = vmatprep.subr.mxu0 %v2898
        %3148 = vmatpush1.msra.mxu0 %v2897
        %3149 = vmatprep.subr.mxu0 %v2902
        %3150 = vmatpush1.msra.mxu0 %v2901
        %3151 = vmatprep.subr.mxu0 %v2906
        %3152 = vmatpush1.msra.mxu0 %v2905
        %3153 = vmatprep.subr.mxu0 %v2910
        %3154 = vmatpush1.msra.mxu0 %v2909
        %3155 = vmatprep.subr.mxu0 %v2914
        %3156 = vmatpush1.msra.mxu0 %v2913
        %3157 = vmatprep.subr.mxu0 %v2918
        %3158 = vmatpush1.msra.mxu0 %v2917
        %3159 = vmatprep.subr.mxu0 %v2922
        %3160 = vmatpush1.msra.mxu0 %v2921
        %3161 = vmatprep.subr.mxu0 %v2926
        %3162 = vmatpush1.msra.mxu0 %v2925
        %3163 = vmatprep.subr.mxu0 %v2930
        %3164 = vmatpush1.msra.mxu0 %v2929
        %3165 = vmatprep.subr.mxu0 %v2934
        %3166 = vmatpush1.msra.mxu0 %v2933
        %3167 = vmatprep.subr.mxu0 %v2938
        %3168 = vmatpush1.msra.mxu0 %v2937
        %3169 = vmatprep.subr.mxu0 %v2942
        %3170 = vmatpush1.msra.mxu0 %v2941
        %3171 = vmatprep.subr.mxu0 %v2946
        %3172 = vmatpush1.msra.mxu0 %v2945
        %3173 = vmatprep.subr.mxu0 %v2950
        %3174 = vmatpush1.msra.mxu0 %v2949
        %3175 = vmatprep.subr.mxu0 %v2954
        %3176 = vmatpush1.msra.mxu0 %v2953
        %3177 = vmatprep.subr.mxu0 %v2958
        %3178 = vmatpush1.msra.mxu0 %v2957
        %3179 = vmatprep.subr.mxu0 %v2962
        %3180 = vmatpush1.msra.mxu0 %v2961
        %3181 = vmatprep.subr.mxu0 %v2966
        %3182 = vmatpush1.msra.mxu0 %v2965
        %3183 = vmatprep.mubr.f32.mxu0 %v2838
        %3184 = vmatmul.mubr.f32.gmra.mrb[0].mxu0 %v2837
        %v3185 = vpop.f32.mrb[0].mxu0
        %v3186 = vadd.f32 %v3102, %v3185
        %v3187 = vpop.f32.mrb[0].mxu0
        %v3188 = vadd.f32 %v3106, %v3187
        %3189 = vdwg.mxu0
        %3190 = vmatprep.subr.mxu0 %v2970
        %3191 = vmatpush1.msra.mxu0 %v2969
        %3192 = vmatprep.subr.mxu0 %v2974
        %3193 = vmatpush1.msra.mxu0 %v2973
        %3194 = vmatprep.subr.mxu0 %v2978
        %3195 = vmatpush1.msra.mxu0 %v2977
        %3196 = vmatprep.subr.mxu0 %v2982
        %3197 = vmatpush1.msra.mxu0 %v2981
        %3198 = vmatprep.subr.mxu0 %v2986
        %3199 = vmatpush1.msra.mxu0 %v2985
        %3200 = vmatprep.subr.mxu0 %v2990
        %3201 = vmatpush1.msra.mxu0 %v2989
        %3202 = vmatprep.subr.mxu0 %v2994
        %3203 = vmatpush1.msra.mxu0 %v2993
        %3204 = vmatprep.subr.mxu0 %v2998
        %3205 = vmatpush1.msra.mxu0 %v2997
        %3206 = vmatprep.subr.mxu0 %v3002
        %3207 = vmatpush1.msra.mxu0 %v3001
        %3208 = vmatprep.subr.mxu0 %v3006
        %3209 = vmatpush1.msra.mxu0 %v3005
        %3210 = vmatprep.subr.mxu0 %v3010
        %3211 = vmatpush1.msra.mxu0 %v3009
        %3212 = vmatprep.subr.mxu0 %v3014
        %3213 = vmatpush1.msra.mxu0 %v3013
        %3214 = vmatprep.subr.mxu0 %v3018
        %3215 = vmatpush1.msra.mxu0 %v3017
        %3216 = vmatprep.subr.mxu0 %v3022
        %3217 = vmatpush1.msra.mxu0 %v3021
        %3218 = vmatprep.subr.mxu0 %v3026
        %3219 = vmatpush1.msra.mxu0 %v3025
        %3220 = vmatprep.subr.mxu0 %v3030
        %3221 = vmatpush1.msra.mxu0 %v3029
        %3222 = vmatprep.subr.mxu0 %v3034
        %3223 = vmatpush1.msra.mxu0 %v3033
        %3224 = vmatprep.subr.mxu0 %v3038
        %3225 = vmatpush1.msra.mxu0 %v3037
        %3226 = vmatprep.subr.mxu0 %v3042
        %3227 = vmatpush1.msra.mxu0 %v3041
        %3228 = vmatprep.subr.mxu0 %v3046
        %3229 = vmatpush1.msra.mxu0 %v3045
        %3230 = vmatprep.subr.mxu0 %v3050
        %3231 = vmatpush1.msra.mxu0 %v3049
        %3232 = vmatprep.subr.mxu0 %v3054
        %3233 = vmatpush1.msra.mxu0 %v3053
        %3234 = vmatprep.subr.mxu0 %v3058
        %3235 = vmatpush1.msra.mxu0 %v3057
        %3236 = vmatprep.subr.mxu0 %v3062
        %3237 = vmatpush1.msra.mxu0 %v3061
        %3238 = vmatprep.subr.mxu0 %v3066
        %3239 = vmatpush1.msra.mxu0 %v3065
        %3240 = vmatprep.subr.mxu0 %v3070
        %3241 = vmatpush1.msra.mxu0 %v3069
        %3242 = vmatprep.subr.mxu0 %v3074
        %3243 = vmatpush1.msra.mxu0 %v3073
        %3244 = vmatprep.subr.mxu0 %v3078
        %3245 = vmatpush1.msra.mxu0 %v3077
        %3246 = vmatprep.subr.mxu0 %v3082
        %3247 = vmatpush1.msra.mxu0 %v3081
        %3248 = vmatprep.subr.mxu0 %v3086
        %3249 = vmatpush1.msra.mxu0 %v3085
        %3250 = vmatprep.subr.mxu0 %v3090
        %3251 = vmatpush1.msra.mxu0 %v3089
        %3252 = vmatprep.subr.mxu0 %v3094
        %3253 = vmatpush1.msra.mxu0 %v3093
        %3254 = vmatprep.mubr.f32.mxu0 %v2840
        %3255 = vmatmul.mubr.f32.gmra.mrb[0].mxu0 %v2839
        %v3256 = vpop.f32.mrb[0].mxu0
        %v3257 = vadd.f32 %v3186, %v3256
        %v3258 = vpop.f32.mrb[0].mxu0
        %v3259 = vadd.f32 %v3188, %v3258
        %3260 = vdwg.mxu0
        %3261 = vmatprep.subr.mxu0 %v2844
        %3262 = vmatpush1.msra.mxu0 %v2843
        %3263 = vmatprep.subr.mxu0 %v2848
        %3264 = vmatpush1.msra.mxu0 %v2847
        %3265 = vmatprep.subr.mxu0 %v2852
        %3266 = vmatpush1.msra.mxu0 %v2851
        %3267 = vmatprep.subr.mxu0 %v2856
        %3268 = vmatpush1.msra.mxu0 %v2855
        %3269 = vmatprep.subr.mxu0 %v2860
        %3270 = vmatpush1.msra.mxu0 %v2859
        %3271 = vmatprep.subr.mxu0 %v2864
        %3272 = vmatpush1.msra.mxu0 %v2863
        %3273 = vmatprep.subr.mxu0 %v2868
        %3274 = vmatpush1.msra.mxu0 %v2867
        %3275 = vmatprep.subr.mxu0 %v2872
        %3276 = vmatpush1.msra.mxu0 %v2871
        %3277 = vmatprep.subr.mxu0 %v2876
        %3278 = vmatpush1.msra.mxu0 %v2875
        %3279 = vmatprep.subr.mxu0 %v2880
        %3280 = vmatpush1.msra.mxu0 %v2879
        %3281 = vmatprep.subr.mxu0 %v2884
        %3282 = vmatpush1.msra.mxu0 %v2883
        %3283 = vmatprep.subr.mxu0 %v2888
        %3284 = vmatpush1.msra.mxu0 %v2887
        %3285 = vmatprep.subr.mxu0 %v2892
        %3286 = vmatpush1.msra.mxu0 %v2891
        %3287 = vmatprep.subr.mxu0 %v2896
        %3288 = vmatpush1.msra.mxu0 %v2895
        %3289 = vmatprep.subr.mxu0 %v2900
        %3290 = vmatpush1.msra.mxu0 %v2899
        %3291 = vmatprep.subr.mxu0 %v2904
        %3292 = vmatpush1.msra.mxu0 %v2903
        %3293 = vmatprep.subr.mxu0 %v2908
        %3294 = vmatpush1.msra.mxu0 %v2907
        %3295 = vmatprep.subr.mxu0 %v2912
        %3296 = vmatpush1.msra.mxu0 %v2911
        %3297 = vmatprep.subr.mxu0 %v2916
        %3298 = vmatpush1.msra.mxu0 %v2915
        %3299 = vmatprep.subr.mxu0 %v2920
        %3300 = vmatpush1.msra.mxu0 %v2919
        %3301 = vmatprep.subr.mxu0 %v2924
        %3302 = vmatpush1.msra.mxu0 %v2923
        %3303 = vmatprep.subr.mxu0 %v2928
        %3304 = vmatpush1.msra.mxu0 %v2927
        %3305 = vmatprep.subr.mxu0 %v2932
        %3306 = vmatpush1.msra.mxu0 %v2931
        %3307 = vmatprep.subr.mxu0 %v2936
        %3308 = vmatpush1.msra.mxu0 %v2935
        %3309 = vmatprep.subr.mxu0 %v2940
        %3310 = vmatpush1.msra.mxu0 %v2939
        %3311 = vmatprep.subr.mxu0 %v2944
        %3312 = vmatpush1.msra.mxu0 %v2943
        %3313 = vmatprep.subr.mxu0 %v2948
        %3314 = vmatpush1.msra.mxu0 %v2947
        %3315 = vmatprep.subr.mxu0 %v2952
        %3316 = vmatpush1.msra.mxu0 %v2951
        %3317 = vmatprep.subr.mxu0 %v2956
        %3318 = vmatpush1.msra.mxu0 %v2955
        %3319 = vmatprep.subr.mxu0 %v2960
        %3320 = vmatpush1.msra.mxu0 %v2959
        %3321 = vmatprep.subr.mxu0 %v2964
        %3322 = vmatpush1.msra.mxu0 %v2963
        %3323 = vmatprep.subr.mxu0 %v2968
        %3324 = vmatpush1.msra.mxu0 %v2967
        %3325 = vmatprep.mubr.f32.mxu0 %v2838
        %3326 = vmatmul.mubr.f32.gmra.mrb[0].mxu0 %v2837
        %v3327 = vpop.f32.mrb[0].mxu0
        %v3328 = vadd.f32 %v3110, %v3327
        %v3329 = vpop.f32.mrb[0].mxu0
        %v3330 = vadd.f32 %v3114, %v3329
        %3331 = vdwg.mxu0
        %3332 = vmatprep.subr.mxu0 %v2972
        %3333 = vmatpush1.msra.mxu0 %v2971
        %3334 = vmatprep.subr.mxu0 %v2976
        %3335 = vmatpush1.msra.mxu0 %v2975
        %3336 = vmatprep.subr.mxu0 %v2980
        %3337 = vmatpush1.msra.mxu0 %v2979
        %3338 = vmatprep.subr.mxu0 %v2984
        %3339 = vmatpush1.msra.mxu0 %v2983
        %3340 = vmatprep.subr.mxu0 %v2988
        %3341 = vmatpush1.msra.mxu0 %v2987
        %3342 = vmatprep.subr.mxu0 %v2992
        %3343 = vmatpush1.msra.mxu0 %v2991
        %3344 = vmatprep.subr.mxu0 %v2996
        %3345 = vmatpush1.msra.mxu0 %v2995
        %3346 = vmatprep.subr.mxu0 %v3000
        %3347 = vmatpush1.msra.mxu0 %v2999
        %3348 = vmatprep.subr.mxu0 %v3004
        %3349 = vmatpush1.msra.mxu0 %v3003
        %3350 = vmatprep.subr.mxu0 %v3008
        %3351 = vmatpush1.msra.mxu0 %v3007
        %3352 = vmatprep.subr.mxu0 %v3012
        %3353 = vmatpush1.msra.mxu0 %v3011
        %3354 = vmatprep.subr.mxu0 %v3016
        %3355 = vmatpush1.msra.mxu0 %v3015
        %3356 = vmatprep.subr.mxu0 %v3020
        %3357 = vmatpush1.msra.mxu0 %v3019
        %3358 = vmatprep.subr.mxu0 %v3024
        %3359 = vmatpush1.msra.mxu0 %v3023
        %3360 = vmatprep.subr.mxu0 %v3028
        %3361 = vmatpush1.msra.mxu0 %v3027
        %3362 = vmatprep.subr.mxu0 %v3032
        %3363 = vmatpush1.msra.mxu0 %v3031
        %3364 = vmatprep.subr.mxu0 %v3036
        %3365 = vmatpush1.msra.mxu0 %v3035
        %3366 = vmatprep.subr.mxu0 %v3040
        %3367 = vmatpush1.msra.mxu0 %v3039
        %3368 = vmatprep.subr.mxu0 %v3044
        %3369 = vmatpush1.msra.mxu0 %v3043
        %3370 = vmatprep.subr.mxu0 %v3048
        %3371 = vmatpush1.msra.mxu0 %v3047
        %3372 = vmatprep.subr.mxu0 %v3052
        %3373 = vmatpush1.msra.mxu0 %v3051
        %3374 = vmatprep.subr.mxu0 %v3056
        %3375 = vmatpush1.msra.mxu0 %v3055
        %3376 = vmatprep.subr.mxu0 %v3060
        %3377 = vmatpush1.msra.mxu0 %v3059
        %3378 = vmatprep.subr.mxu0 %v3064
        %3379 = vmatpush1.msra.mxu0 %v3063
        %3380 = vmatprep.subr.mxu0 %v3068
        %3381 = vmatpush1.msra.mxu0 %v3067
        %3382 = vmatprep.subr.mxu0 %v3072
        %3383 = vmatpush1.msra.mxu0 %v3071
        %3384 = vmatprep.subr.mxu0 %v3076
        %3385 = vmatpush1.msra.mxu0 %v3075
        %3386 = vmatprep.subr.mxu0 %v3080
        %3387 = vmatpush1.msra.mxu0 %v3079
        %3388 = vmatprep.subr.mxu0 %v3084
        %3389 = vmatpush1.msra.mxu0 %v3083
        %3390 = vmatprep.subr.mxu0 %v3088
        %3391 = vmatpush1.msra.mxu0 %v3087
        %3392 = vmatprep.subr.mxu0 %v3092
        %3393 = vmatpush1.msra.mxu0 %v3091
        %3394 = vmatprep.subr.mxu0 %v3096
        %3395 = vmatpush1.msra.mxu0 %v3095
        %3396 = vmatprep.mubr.f32.mxu0 %v2840
        %3397 = vmatmul.mubr.f32.gmra.mrb[0].mxu0 %v2839
        %v3398 = vpop.f32.mrb[0].mxu0
        %v3399 = vadd.f32 %v3328, %v3398
        %v3400 = vpop.f32.mrb[0].mxu0
        %v3401 = vadd.f32 %v3330, %v3400
        %3402 = vdwg.mxu0
        %v3403 = vadd.f32 %v3257, %v2169
        %v3404 = vadd.f32 %v3259, %v2171
        %v3405 = vadd.f32 %v3399, %v2240
        %v3406 = vadd.f32 %v3401, %v2242
        %v3407 = vld [vmem:[#allocation14] sm:$0xff]
        %v3408 = vld [vmem:[#allocation14 + $0x8] sm:$0xff]
        %v3409 = vld [vmem:[#allocation14 + $0x10] sm:$0xff]
        %v3410 = vld [vmem:[#allocation14 + $0x18] sm:$0xff]
        %v3411 = vld [vmem:[#allocation14 + $0x20] sm:$0xff]
        %v3412 = vld [vmem:[#allocation14 + $0x28] sm:$0xff]
        %v3413 = vld [vmem:[#allocation14 + $0x30] sm:$0xff]
        %v3414 = vld [vmem:[#allocation14 + $0x38] sm:$0xff]
        %v3415 = vld [vmem:[#allocation14 + $0x40] sm:$0xff]
        %v3416 = vld [vmem:[#allocation14 + $0x48] sm:$0xff]
        %v3417 = vld [vmem:[#allocation14 + $0x50] sm:$0xff]
        %v3418 = vld [vmem:[#allocation14 + $0x58] sm:$0xff]
        %v3419 = vld [vmem:[#allocation14 + $0x60] sm:$0xff]
        %v3420 = vld [vmem:[#allocation14 + $0x68] sm:$0xff]
        %v3421 = vld [vmem:[#allocation14 + $0x70] sm:$0xff]
        %v3422 = vld [vmem:[#allocation14 + $0x78] sm:$0xff]
        %v3423 = vld [vmem:[#allocation14 + $0x80] sm:$0xff]
        %v3424 = vld [vmem:[#allocation14 + $0x88] sm:$0xff]
        %v3425 = vld [vmem:[#allocation14 + $0x90] sm:$0xff]
        %v3426 = vld [vmem:[#allocation14 + $0x98] sm:$0xff]
        %v3427 = vld [vmem:[#allocation14 + $0xa0] sm:$0xff]
        %v3428 = vld [vmem:[#allocation14 + $0xa8] sm:$0xff]
        %v3429 = vld [vmem:[#allocation14 + $0xb0] sm:$0xff]
        %v3430 = vld [vmem:[#allocation14 + $0xb8] sm:$0xff]
        %v3431 = vld [vmem:[#allocation14 + $0xc0] sm:$0xff]
        %v3432 = vld [vmem:[#allocation14 + $0xc8] sm:$0xff]
        %v3433 = vld [vmem:[#allocation14 + $0xd0] sm:$0xff]
        %v3434 = vld [vmem:[#allocation14 + $0xd8] sm:$0xff]
        %v3435 = vld [vmem:[#allocation14 + $0xe0] sm:$0xff]
        %v3436 = vld [vmem:[#allocation14 + $0xe8] sm:$0xff]
        %v3437 = vld [vmem:[#allocation14 + $0xf0] sm:$0xff]
        %v3438 = vld [vmem:[#allocation14 + $0xf8] sm:$0xff]
        %v3439 = vld [vmem:[#allocation14 + $0x100] sm:$0xff]
        %v3440 = vld [vmem:[#allocation14 + $0x108] sm:$0xff]
        %v3441 = vld [vmem:[#allocation14 + $0x110] sm:$0xff]
        %v3442 = vld [vmem:[#allocation14 + $0x118] sm:$0xff]
        %v3443 = vld [vmem:[#allocation14 + $0x120] sm:$0xff]
        %v3444 = vld [vmem:[#allocation14 + $0x128] sm:$0xff]
        %v3445 = vld [vmem:[#allocation14 + $0x130] sm:$0xff]
        %v3446 = vld [vmem:[#allocation14 + $0x138] sm:$0xff]
        %v3447 = vld [vmem:[#allocation14 + $0x140] sm:$0xff]
        %v3448 = vld [vmem:[#allocation14 + $0x148] sm:$0xff]
        %v3449 = vld [vmem:[#allocation14 + $0x150] sm:$0xff]
        %v3450 = vld [vmem:[#allocation14 + $0x158] sm:$0xff]
        %v3451 = vld [vmem:[#allocation14 + $0x160] sm:$0xff]
        %v3452 = vld [vmem:[#allocation14 + $0x168] sm:$0xff]
        %v3453 = vld [vmem:[#allocation14 + $0x170] sm:$0xff]
        %v3454 = vld [vmem:[#allocation14 + $0x178] sm:$0xff]
        %v3455 = vld [vmem:[#allocation14 + $0x180] sm:$0xff]
        %v3456 = vld [vmem:[#allocation14 + $0x188] sm:$0xff]
        %v3457 = vld [vmem:[#allocation14 + $0x190] sm:$0xff]
        %v3458 = vld [vmem:[#allocation14 + $0x198] sm:$0xff]
        %v3459 = vld [vmem:[#allocation14 + $0x1a0] sm:$0xff]
        %v3460 = vld [vmem:[#allocation14 + $0x1a8] sm:$0xff]
        %v3461 = vld [vmem:[#allocation14 + $0x1b0] sm:$0xff]
        %v3462 = vld [vmem:[#allocation14 + $0x1b8] sm:$0xff]
        %v3463 = vld [vmem:[#allocation14 + $0x1c0] sm:$0xff]
        %v3464 = vld [vmem:[#allocation14 + $0x1c8] sm:$0xff]
        %v3465 = vld [vmem:[#allocation14 + $0x1d0] sm:$0xff]
        %v3466 = vld [vmem:[#allocation14 + $0x1d8] sm:$0xff]
        %v3467 = vld [vmem:[#allocation14 + $0x1e0] sm:$0xff]
        %v3468 = vld [vmem:[#allocation14 + $0x1e8] sm:$0xff]
        %v3469 = vld [vmem:[#allocation14 + $0x1f0] sm:$0xff]
        %v3470 = vld [vmem:[#allocation14 + $0x1f8] sm:$0xff]
        %v3471 = vld [vmem:[%s13] sm:$0x1]
        %v3473 = vlaneseq
        %v3474 = vshrl.u32 %v3473, 7
        %v3475 = vsub.s32 0, %v3474
        %v3476 = vrot.slane %v3471, %v3475
        %3478 = vmatprep.subr.mxu0 0.0
        %3479 = vmatpush1.msra.mxu0 %v3407
        %3480 = vmatprep.subr.mxu0 0.0
        %3481 = vmatpush1.msra.mxu0 %v3408
        %3482 = vmatprep.subr.mxu0 0.0
        %3483 = vmatpush1.msra.mxu0 %v3409
        %3484 = vmatprep.subr.mxu0 0.0
        %3485 = vmatpush1.msra.mxu0 %v3410
        %3486 = vmatprep.subr.mxu0 0.0
        %3487 = vmatpush1.msra.mxu0 %v3411
        %3488 = vmatprep.subr.mxu0 0.0
        %3489 = vmatpush1.msra.mxu0 %v3412
        %3490 = vmatprep.subr.mxu0 0.0
        %3491 = vmatpush1.msra.mxu0 %v3413
        %3492 = vmatprep.subr.mxu0 0.0
        %3493 = vmatpush1.msra.mxu0 %v3414
        %3494 = vmatprep.subr.mxu0 0.0
        %3495 = vmatpush1.msra.mxu0 %v3415
        %3496 = vmatprep.subr.mxu0 0.0
        %3497 = vmatpush1.msra.mxu0 %v3416
        %3498 = vmatprep.subr.mxu0 0.0
        %3499 = vmatpush1.msra.mxu0 %v3417
        %3500 = vmatprep.subr.mxu0 0.0
        %3501 = vmatpush1.msra.mxu0 %v3418
        %3502 = vmatprep.subr.mxu0 0.0
        %3503 = vmatpush1.msra.mxu0 %v3419
        %3504 = vmatprep.subr.mxu0 0.0
        %3505 = vmatpush1.msra.mxu0 %v3420
        %3506 = vmatprep.subr.mxu0 0.0
        %3507 = vmatpush1.msra.mxu0 %v3421
        %3508 = vmatprep.subr.mxu0 0.0
        %3509 = vmatpush1.msra.mxu0 %v3422
        %3510 = vmatprep.subr.mxu0 0.0
        %3511 = vmatpush1.msra.mxu0 %v3423
        %3512 = vmatprep.subr.mxu0 0.0
        %3513 = vmatpush1.msra.mxu0 %v3424
        %3514 = vmatprep.subr.mxu0 0.0
        %3515 = vmatpush1.msra.mxu0 %v3425
        %3516 = vmatprep.subr.mxu0 0.0
        %3517 = vmatpush1.msra.mxu0 %v3426
        %3518 = vmatprep.subr.mxu0 0.0
        %3519 = vmatpush1.msra.mxu0 %v3427
        %3520 = vmatprep.subr.mxu0 0.0
        %3521 = vmatpush1.msra.mxu0 %v3428
        %3522 = vmatprep.subr.mxu0 0.0
        %3523 = vmatpush1.msra.mxu0 %v3429
        %3524 = vmatprep.subr.mxu0 0.0
        %3525 = vmatpush1.msra.mxu0 %v3430
        %3526 = vmatprep.subr.mxu0 0.0
        %3527 = vmatpush1.msra.mxu0 %v3431
        %3528 = vmatprep.subr.mxu0 0.0
        %3529 = vmatpush1.msra.mxu0 %v3432
        %3530 = vmatprep.subr.mxu0 0.0
        %3531 = vmatpush1.msra.mxu0 %v3433
        %3532 = vmatprep.subr.mxu0 0.0
        %3533 = vmatpush1.msra.mxu0 %v3434
        %3534 = vmatprep.subr.mxu0 0.0
        %3535 = vmatpush1.msra.mxu0 %v3435
        %3536 = vmatprep.subr.mxu0 0.0
        %3537 = vmatpush1.msra.mxu0 %v3436
        %3538 = vmatprep.subr.mxu0 0.0
        %3539 = vmatpush1.msra.mxu0 %v3437
        %3540 = vmatprep.subr.mxu0 0.0
        %3541 = vmatpush1.msra.mxu0 %v3438
        %3542 = vmatprep.mubr.f32.mxu0 %v3404
        %3543 = vmatmul.mubr.f32.gmra.mrb[0].mxu0 %v3403
        %v3544 = vpop.f32.mrb[0].mxu0
        %v3545 = vadd.f32 %v3476, %v3544
        %v3546 = vpop.f32.mrb[0].mxu0
        %3547 = vdwg.mxu0
        %3548 = vmatprep.subr.mxu0 0.0
        %3549 = vmatpush1.msra.mxu0 %v3439
        %3550 = vmatprep.subr.mxu0 0.0
        %3551 = vmatpush1.msra.mxu0 %v3440
        %3552 = vmatprep.subr.mxu0 0.0
        %3553 = vmatpush1.msra.mxu0 %v3441
        %3554 = vmatprep.subr.mxu0 0.0
        %3555 = vmatpush1.msra.mxu0 %v3442
        %3556 = vmatprep.subr.mxu0 0.0
        %3557 = vmatpush1.msra.mxu0 %v3443
        %3558 = vmatprep.subr.mxu0 0.0
        %3559 = vmatpush1.msra.mxu0 %v3444
        %3560 = vmatprep.subr.mxu0 0.0
        %3561 = vmatpush1.msra.mxu0 %v3445
        %3562 = vmatprep.subr.mxu0 0.0
        %3563 = vmatpush1.msra.mxu0 %v3446
        %3564 = vmatprep.subr.mxu0 0.0
        %3565 = vmatpush1.msra.mxu0 %v3447
        %3566 = vmatprep.subr.mxu0 0.0
        %3567 = vmatpush1.msra.mxu0 %v3448
        %3568 = vmatprep.subr.mxu0 0.0
        %3569 = vmatpush1.msra.mxu0 %v3449
        %3570 = vmatprep.subr.mxu0 0.0
        %3571 = vmatpush1.msra.mxu0 %v3450
        %3572 = vmatprep.subr.mxu0 0.0
        %3573 = vmatpush1.msra.mxu0 %v3451
        %3574 = vmatprep.subr.mxu0 0.0
        %3575 = vmatpush1.msra.mxu0 %v3452
        %3576 = vmatprep.subr.mxu0 0.0
        %3577 = vmatpush1.msra.mxu0 %v3453
        %3578 = vmatprep.subr.mxu0 0.0
        %3579 = vmatpush1.msra.mxu0 %v3454
        %3580 = vmatprep.subr.mxu0 0.0
        %3581 = vmatpush1.msra.mxu0 %v3455
        %3582 = vmatprep.subr.mxu0 0.0
        %3583 = vmatpush1.msra.mxu0 %v3456
        %3584 = vmatprep.subr.mxu0 0.0
        %3585 = vmatpush1.msra.mxu0 %v3457
        %3586 = vmatprep.subr.mxu0 0.0
        %3587 = vmatpush1.msra.mxu0 %v3458
        %3588 = vmatprep.subr.mxu0 0.0
        %3589 = vmatpush1.msra.mxu0 %v3459
        %3590 = vmatprep.subr.mxu0 0.0
        %3591 = vmatpush1.msra.mxu0 %v3460
        %3592 = vmatprep.subr.mxu0 0.0
        %3593 = vmatpush1.msra.mxu0 %v3461
        %3594 = vmatprep.subr.mxu0 0.0
        %3595 = vmatpush1.msra.mxu0 %v3462
        %3596 = vmatprep.subr.mxu0 0.0
        %3597 = vmatpush1.msra.mxu0 %v3463
        %3598 = vmatprep.subr.mxu0 0.0
        %3599 = vmatpush1.msra.mxu0 %v3464
        %3600 = vmatprep.subr.mxu0 0.0
        %3601 = vmatpush1.msra.mxu0 %v3465
        %3602 = vmatprep.subr.mxu0 0.0
        %3603 = vmatpush1.msra.mxu0 %v3466
        %3604 = vmatprep.subr.mxu0 0.0
        %3605 = vmatpush1.msra.mxu0 %v3467
        %3606 = vmatprep.subr.mxu0 0.0
        %3607 = vmatpush1.msra.mxu0 %v3468
        %3608 = vmatprep.subr.mxu0 0.0
        %3609 = vmatpush1.msra.mxu0 %v3469
        %3610 = vmatprep.subr.mxu0 0.0
        %3611 = vmatpush1.msra.mxu0 %v3470
        %3612 = vmatprep.mubr.f32.mxu0 %v3406
        %3613 = vmatmul.mubr.f32.gmra.mrb[0].mxu0 %v3405
        %v3614 = vpop.f32.mrb[0].mxu0
        %v3615 = vadd.f32 %v3545, %v3614
        %v3616 = vpop.f32.mrb[0].mxu0
        %3617 = vdwg.mxu0
        %3618 = vst [vmem:[%s581] sm:$0xff] %v3615
        %p3619 = scmp.lt.s32.totalorder %s30, 1
        %s3620 = scalar_select %p3619, %s30, 1
        %s3621 = smul.addr %s3620, 8
        %s3622 = scalar_lea.vmem %s14, %s3621
        // Predicated region
        $region109: #{forward.1} parent=75 // pred_check
          %p3623 = pneg %p347
        $region110: #{forward.1} parent=75 // pred_check_branch
          %3625 = sbr.rel (%p3623) target = $region112
        $region111: #{forward.1} parent=75 // pred_region
          _
        $region112: #{forward.1} parent=75 // pred_fallthru
          _
      $region76: #{forward.1} parent=5 // pred_fallthru
        _
      %p3626 = scmp.le.s32.totalorder 2, %s25
      // Predicated region
      $region113: #{forward.1} parent=5 // pred_check
        %p3627 = pneg %p3626
      $region114: #{forward.1} parent=5 // pred_check_branch
        %3629 = sbr.rel (%p3627) target = $region116
      $region115: #{forward.1} parent=5 // pred_region
        %s3630 = ssub.s32 %s25, 2
        // Predicated region
        $region117: #{forward.1} parent=115 // pred_check
          %p3631 = pneg %p353
        $region118: #{forward.1} parent=115 // pred_check_branch
          %3633 = sbr.rel (%p3631) target = $region120
        $region119: #{forward.1} parent=115 // pred_region
          %p3634 = scmp.lt.s32.totalorder %s31, 1
          %s3635 = scalar_select %p3634, %s31, 1
          %s3636 = smul.addr %s3635, 8
          %s3637 = scalar_lea.vmem %s14, %s3636
        $region120: #{forward.1} parent=115 // pred_fallthru
          _
      $region116: #{forward.1} parent=5 // pred_fallthru
        _
    $region6: #{forward.1} parent=1 // loop_footer
      %s29 = sadd.s32 1, %s25
    $region7: #{forward.1} parent=1 // loop_footer_branch
      %24 = sbr.rel target = $region3
    $region8: #{forward.1} parent=1 // loop_exit
      _
    %3638 = vsyncpa [#allocation3], 1
    %s3639 = scalar_lea.sflag [#allocation3], 1
    %3640 = vsyncpa %s3639, 1
    %3641 = vsyncpa [#allocation7], 1
    %3642 = vsyncpa [#allocation10], 1
    %3643 = vsyncpa [#allocation13], 1
    %3644 = vsyncpa [#allocation4], 1
    %s3645 = scalar_lea.sflag [#allocation4], 1
    %3646 = vsyncpa %s3645, 1

</llo_original>
